<compile_context>
chip_gen: v5e
topology: v5e:2x2
jax: 0.10.0
libtpu: 0.0.40
codegen_flags: <defaults>
</compile_context>

<pallas_src>
import functools
import math

import jax
import jax.numpy as jnp
from jax.experimental import pallas as pl
from jax.experimental.pallas import tpu as pltpu


# ----------------------------------------------------------------------------
# helpers
# ----------------------------------------------------------------------------
def _pick_tile(dim, candidates):
    """Largest candidate that evenly divides `dim`, else the full dim."""
    for c in candidates:
        if dim % c == 0:
            return c
    return dim


def _round_up(x, m):
    return ((x + m - 1) // m) * m


# ----------------------------------------------------------------------------
# Tiled linear: y = x @ w + b (+ relu).  bf16 operands, f32 accumulator,
# K-axis reduction with pl.when init/finalize, megacore-parallel M/N axes.
# Outputs bf16 by default so activations stay bf16 between kernels.
# ----------------------------------------------------------------------------
def _matmul_kernel(x_ref, w_ref, b_ref, o_ref, acc_ref, *, activation):
    @pl.when(pl.program_id(2) == 0)
    def _():
        acc_ref[...] = jnp.zeros_like(acc_ref)

    acc_ref[...] += jnp.dot(x_ref[...], w_ref[...],
                            preferred_element_type=jnp.float32)

    @pl.when(pl.program_id(2) == pl.num_programs(2) - 1)
    def _():
        y = acc_ref[...] + b_ref[...]
        if activation == "relu":
            y = jnp.maximum(y, 0.0)
        o_ref[...] = y.astype(o_ref.dtype)


def linear(x, w, b, activation=None, out_dtype=jnp.bfloat16):
    """y = x @ w + b, x: (..., K), w: (K, N) bf16 (pre-cast), b: (N,) f32."""
    K, N = w.shape
    orig_shape = x.shape
    x2 = x.reshape(-1, K)
    if x2.dtype != jnp.bfloat16:
        x2 = x2.astype(jnp.bfloat16)
    wb = w if w.dtype == jnp.bfloat16 else w.astype(jnp.bfloat16)
    bb = b.astype(jnp.float32).reshape(1, N)
    M = x2.shape[0]

    # Tile tables chosen to be safe on v7x (64 MiB VMEM) while still large
    # enough to amortize per-grid-step overhead on v5e/v6e.
    tm = _pick_tile(M, (256, 128, 64, 32, 16, 8))
    tn = _pick_tile(N, (512, 256, 128))
    tk = _pick_tile(K, (512, 256, 128))

    out = pl.pallas_call(
        functools.partial(_matmul_kernel, activation=activation),
        grid=(M // tm, N // tn, K // tk),
        out_shape=jax.ShapeDtypeStruct((M, N), out_dtype),
        in_specs=[
            pl.BlockSpec((tm, tk), lambda i, j, k: (i, k)),
            pl.BlockSpec((tk, tn), lambda i, j, k: (k, j)),
            pl.BlockSpec((1, tn), lambda i, j, k: (0, j)),
        ],
        out_specs=pl.BlockSpec((tm, tn), lambda i, j, k: (i, j)),
        scratch_shapes=[pltpu.VMEM((tm, tn), jnp.float32)],
        compiler_params=pltpu.CompilerParams(
            dimension_semantics=("parallel", "parallel", "arbitrary")),
    )(x2, wb, bb)
    return out.reshape(orig_shape[:-1] + (N,))


# ----------------------------------------------------------------------------
# LayerNorm (optionally fused with the residual add), tiled over rows.
# bf16 in/out, f32 statistics inside the kernel.
# ----------------------------------------------------------------------------
def _ln_kernel(*refs, eps, has_residual):
    if has_residual:
        x_ref, r_ref, g_ref, b_ref, o_ref = refs
        x = x_ref[...].astype(jnp.float32) + r_ref[...].astype(jnp.float32)
    else:
        x_ref, g_ref, b_ref, o_ref = refs
        x = x_ref[...].astype(jnp.float32)
    mu = jnp.mean(x, axis=-1, keepdims=True)
    var = jnp.mean(jnp.square(x - mu), axis=-1, keepdims=True)
    y = (x - mu) * jax.lax.rsqrt(var + eps) * g_ref[...] + b_ref[...]
    o_ref[...] = y.astype(o_ref.dtype)


def layer_norm(x, gamma, beta, residual=None, eps=1e-5):
    shp = x.shape
    D = shp[-1]
    x2 = x.reshape(-1, D)
    M = x2.shape[0]
    tm = _pick_tile(M, (512, 256, 128, 64, 32, 16, 8))

    row_spec = pl.BlockSpec((tm, D), lambda i: (i, 0))
    vec_spec = pl.BlockSpec((1, D), lambda i: (0, 0))

    has_res = residual is not None
    inputs = [x2]
    in_specs = [row_spec]
    if has_res:
        inputs.append(residual.reshape(-1, D))
        in_specs.append(row_spec)
    inputs += [gamma.astype(jnp.float32).reshape(1, D),
               beta.astype(jnp.float32).reshape(1, D)]
    in_specs += [vec_spec, vec_spec]

    out = pl.pallas_call(
        functools.partial(_ln_kernel, eps=eps, has_residual=has_res),
        grid=(M // tm,),
        out_shape=jax.ShapeDtypeStruct((M, D), jnp.bfloat16),
        in_specs=in_specs,
        out_specs=row_spec,
        compiler_params=pltpu.CompilerParams(dimension_semantics=("parallel",)),
    )(*inputs)
    return out.reshape(shp)


# ----------------------------------------------------------------------------
# Multi-head attention: one grid step = one batch element, all heads fused.
# Heads are sliced from the fused projection inside the kernel (no wrapper
# head-split transpose).  The output is assembled in registers and stored
# once as a lane-dense (Sq, D) slab.  Mask = shared (Sq, Sk) bf16 tile plus
# an optional per-batch (Sk,) additive padding bias; no (B, Sq, Sk) tensor
# is ever materialized.
# ----------------------------------------------------------------------------
def _attn_kernel(*refs, num_heads, dh, scale, fused_qkv, has_mask, has_kpm):
    D = num_heads * dh
    idx = 0
    if fused_qkv:
        blob = refs[idx][0]                    # (Sq, 3D) bf16
        idx += 1
        q_all = blob[:, :D]
        k_all = blob[:, D:2 * D]
        v_all = blob[:, 2 * D:]
    else:
        q_all = refs[idx][0]                   # (Sq, D) bf16
        idx += 1
        kvb = refs[idx][0]                     # (Sk, 2D) bf16
        idx += 1
        k_all = kvb[:, :D]
        v_all = kvb[:, D:]

    bias = None
    if has_mask:
        bias = refs[idx][0].astype(jnp.float32)       # (Sq, Sk)
        idx += 1
    if has_kpm:
        kb = refs[idx][0].astype(jnp.float32)         # (1, Sk), broadcasts over Sq
        idx += 1
        bias = kb if bias is None else bias + kb
    o_ref = refs[idx]

    # fold the softmax scale into q once (Sq*D muls instead of H*Sq*Sk)
    q_all = q_all * scale

    outs = []
    for h in range(num_heads):                 # static unroll over heads
        q = q_all[:, h * dh:(h + 1) * dh]
        k = k_all[:, h * dh:(h + 1) * dh]
        v = v_all[:, h * dh:(h + 1) * dh]
        # contract last dims directly -> no explicit K transpose (XLU relief)
        s = jax.lax.dot_general(q, k, (((1,), (1,)), ((), ())),
                                preferred_element_type=jnp.float32)
        if bias is not None:
            s = s + bias
        s = s - jnp.max(s, axis=-1, keepdims=True)
        p = jnp.exp(s)
        p = p / jnp.sum(p, axis=-1, keepdims=True)
        outs.append(jnp.dot(p.astype(v.dtype), v,
                            preferred_element_type=jnp.float32))
    # single lane-dense store of the full (Sq, D) result
    o_ref[0] = jnp.concatenate(outs, axis=-1).astype(o_ref.dtype)


def multihead_attention(q_in, kv_in, p, attn_mask, key_padding_mask, num_heads):
    B, Sq, D = q_in.shape
    Sk = kv_in.shape[1]
    dh = D // num_heads

    fused = "w_qkv" in p
    if fused:                                   # self-attn: one fused QKV matmul
        qkv = linear(q_in, p["w_qkv"], p["b_qkv"])          # (B, Sq, 3D) bf16
        inputs = [qkv]
        in_specs = [pl.BlockSpec((1, Sq, 3 * D), lambda b: (b, 0, 0))]
    else:                                       # cross-attn: Q + fused KV matmuls
        q = linear(q_in, p["wq"], p["bq"])                   # (B, Sq, D)  bf16
        kv = linear(kv_in, p["w_kv"], p["b_kv"])             # (B, Sk, 2D) bf16
        inputs = [q, kv]
        in_specs = [pl.BlockSpec((1, Sq, D), lambda b: (b, 0, 0)),
                    pl.BlockSpec((1, Sk, 2 * D), lambda b: (b, 0, 0))]

    has_mask = attn_mask is not None
    has_kpm = key_padding_mask is not None
    if has_mask:
        m = attn_mask.astype(jnp.bfloat16).reshape(1, Sq, Sk)   # shared, bf16
        inputs.append(m)
        in_specs.append(pl.BlockSpec((1, Sq, Sk), lambda b: (0, 0, 0)))
    if has_kpm:
        # NOTE: -1e9 instead of -inf; fully-padded rows give uniform probs.
        if key_padding_mask.dtype == jnp.bool_:
            kpb = jnp.where(key_padding_mask, -1e9, 0.0)
        else:
            kpb = key_padding_mask.astype(jnp.float32)
        kpb = kpb.astype(jnp.bfloat16).reshape(B, 1, Sk)
        inputs.append(kpb)
        in_specs.append(pl.BlockSpec((1, 1, Sk), lambda b: (b, 0, 0)))

    kernel = functools.partial(_attn_kernel, num_heads=num_heads, dh=dh,
                               scale=1.0 / math.sqrt(dh), fused_qkv=fused,
                               has_mask=has_mask, has_kpm=has_kpm)

    out = pl.pallas_call(
        kernel,
        grid=(B,),
        out_shape=jax.ShapeDtypeStruct((B, Sq, D), jnp.bfloat16),
        in_specs=in_specs,
        out_specs=pl.BlockSpec((1, Sq, D), lambda b: (b, 0, 0)),
        compiler_params=pltpu.CompilerParams(dimension_semantics=("parallel",)),
    )(*inputs)

    return linear(out, p["wo"], p["bo"])


# ----------------------------------------------------------------------------
# Encoder / decoder layers (post-norm, relu, dropout == identity)
# ----------------------------------------------------------------------------
def encoder_layer(x, p, src_mask, src_kpm, num_heads):
    a = multihead_attention(x, x, p["self_attn"], src_mask, src_kpm, num_heads)
    x = layer_norm(a, p["ln1_g"], p["ln1_b"], residual=x)
    h = linear(x, p["w1"], p["b1"], activation="relu")
    h = linear(h, p["w2"], p["b2"])
    x = layer_norm(h, p["ln2_g"], p["ln2_b"], residual=x)
    return x


def decoder_layer(x, memory, p, tgt_mask, memory_mask, tgt_kpm, mem_kpm, num_heads):
    a = multihead_attention(x, x, p["self_attn"], tgt_mask, tgt_kpm, num_heads)
    x = layer_norm(a, p["ln1_g"], p["ln1_b"], residual=x)
    a = multihead_attention(x, memory, p["cross_attn"], memory_mask, mem_kpm, num_heads)
    x = layer_norm(a, p["ln2_g"], p["ln2_b"], residual=x)
    h = linear(x, p["w1"], p["b1"], activation="relu")
    h = linear(h, p["w2"], p["b2"])
    x = layer_norm(h, p["ln3_g"], p["ln3_b"], residual=x)
    return x


# ----------------------------------------------------------------------------
# Full Seq2SeqTransformer forward
# ----------------------------------------------------------------------------
def seq2seq_transformer_forward(params, cfg, input_tokens, output_tokens,
                                input_mask, output_mask, memory_mask=None,
                                input_padding_mask=None, output_padding_mask=None,
                                memory_key_padding_mask=None):
    D = cfg["embedding_size"]
    H = cfg["num_heads"]
    V = cfg["output_size"]
    pe = params["pos_encoding"]

    # TokenEmbedder: lookup * sqrt(d_model); PositionalEncoder: +PE (JAX glue).
    # Single cast to bf16 here; all activations stay bf16 between kernels.
    S = input_tokens.shape[1]
    T = output_tokens.shape[1]
    src = (jnp.take(params["input_emb"], input_tokens, axis=0) * math.sqrt(D)
           + pe[:S][None]).astype(jnp.bfloat16)
    tgt = (jnp.take(params["output_emb"], output_tokens, axis=0) * math.sqrt(D)
           + pe[:T][None]).astype(jnp.bfloat16)

    memory = src
    for lp in params["encoder_layers"]:
        memory = encoder_layer(memory, lp, input_mask, input_padding_mask, H)
    memory = layer_norm(memory, params["enc_norm_g"], params["enc_norm_b"])

    x = tgt
    for lp in params["decoder_layers"]:
        x = decoder_layer(x, memory, lp, output_mask, memory_mask,
                          output_padding_mask, memory_key_padding_mask, H)
    x = layer_norm(x, params["dec_norm_g"], params["dec_norm_b"])

    # Logits projection: weight pre-padded to a lane-dense multiple of 128
    # output width; slice back to the true vocab size afterwards.
    logits = linear(x, params["out_w"], params["out_b"], out_dtype=jnp.float32)
    return logits[..., :V]


# ----------------------------------------------------------------------------
# Deterministic parameter init (synthetic, not a checkpoint).  Weights are
# pre-cast to bf16 once (MXU operands only); biases / LN params stay f32.
# ----------------------------------------------------------------------------
def init_params(key, embedding_size, num_heads, dim_feedforward,
                num_encoder_layers, num_decoder_layers,
                input_size, output_size, max_length):
    D, F = embedding_size, dim_feedforward
    keys = iter(jax.random.split(key, 256))

    def dense(shape):
        return (jax.random.normal(next(keys), shape, jnp.float32) * 0.02
                ).astype(jnp.bfloat16)

    def zf32(shape):
        return jnp.zeros(shape, jnp.float32)

    def self_attn_params():
        # fused QKV projection weight (D, 3D) — one matmul instead of three
        return dict(w_qkv=dense((D, 3 * D)), b_qkv=zf32((3 * D,)),
                    wo=dense((D, D)), bo=zf32((D,)))

    def cross_attn_params():
        # Q projection + fused KV projection (D, 2D)
        return dict(wq=dense((D, D)), bq=zf32((D,)),
                    w_kv=dense((D, 2 * D)), b_kv=zf32((2 * D,)),
                    wo=dense((D, D)), bo=zf32((D,)))

    def enc_layer():
        return dict(self_attn=self_attn_params(),
                    w1=dense((D, F)), b1=zf32((F,)),
                    w2=dense((F, D)), b2=zf32((D,)),
                    ln1_g=jnp.ones((D,), jnp.float32), ln1_b=zf32((D,)),
                    ln2_g=jnp.ones((D,), jnp.float32), ln2_b=zf32((D,)))

    def dec_layer():
        return dict(self_attn=self_attn_params(), cross_attn=cross_attn_params(),
                    w1=dense((D, F)), b1=zf32((F,)),
                    w2=dense((F, D)), b2=zf32((D,)),
                    ln1_g=jnp.ones((D,), jnp.float32), ln1_b=zf32((D,)),
                    ln2_g=jnp.ones((D,), jnp.float32), ln2_b=zf32((D,)),
                    ln3_g=jnp.ones((D,), jnp.float32), ln3_b=zf32((D,)))

    # sinusoidal positional encoding
    pos = jnp.arange(max_length, dtype=jnp.float32)[:, None]
    den = jnp.exp(-jnp.arange(0, D, 2, dtype=jnp.float32) * math.log(10000.0) / D)
    pe = jnp.zeros((max_length, D), jnp.float32)
    pe = pe.at[:, 0::2].set(jnp.sin(pos * den))
    pe = pe.at[:, 1::2].set(jnp.cos(pos * den))

    # final projection padded to a lane-dense (multiple-of-128) output width
    v_pad = _round_up(output_size, 128)
    out_w = jnp.zeros((D, v_pad), jnp.float32)
    out_w = out_w.at[:, :output_size].set(
        jax.random.normal(next(keys), (D, output_size), jnp.float32) * 0.02)
    out_w = out_w.astype(jnp.bfloat16)

    params = dict(
        pos_encoding=pe,
        input_emb=jax.random.normal(next(keys), (input_size, D), jnp.float32) * 0.02,
        output_emb=jax.random.normal(next(keys), (output_size, D), jnp.float32) * 0.02,
        encoder_layers=[enc_layer() for _ in range(num_encoder_layers)],
        decoder_layers=[dec_layer() for _ in range(num_decoder_layers)],
        enc_norm_g=jnp.ones((D,), jnp.float32), enc_norm_b=zf32((D,)),
        dec_norm_g=jnp.ones((D,), jnp.float32), dec_norm_b=zf32((D,)),
        out_w=out_w, out_b=zf32((v_pad,)),
    )
    # static (non-traced) config kept out of the jitted param pytree
    config = dict(embedding_size=D, num_heads=num_heads, output_size=output_size)
    return params, config


# ----------------------------------------------------------------------------
if __name__ == "__main__":
    # small config
    embedding_size, num_heads, dim_feedforward = 32, 4, 64
    num_encoder_layers, num_decoder_layers = 2, 2
    input_size, output_size, max_length = 50, 60, 16
    B, S, T = 2, 8, 8

    key = jax.random.PRNGKey(0)
    kp, ki, ko = jax.random.split(key, 3)
    params, cfg = init_params(kp, embedding_size, num_heads, dim_feedforward,
                              num_encoder_layers, num_decoder_layers,
                              input_size, output_size, max_length)

    input_tokens = jax.random.randint(ki, (B, S), 0, input_size, dtype=jnp.int32)
    output_tokens = jax.random.randint(ko, (B, T), 0, output_size, dtype=jnp.int32)

    # src mask: no masking; tgt mask: causal (additive, -1e9 stands in for -inf)
    input_mask = jnp.zeros((S, S), jnp.float32)
    output_mask = jnp.where(
        jnp.arange(T)[None, :] > jnp.arange(T)[:, None], -1e9, 0.0).astype(jnp.float32)

    fwd = jax.jit(lambda prm, it, ot, im, om:
                  seq2seq_transformer_forward(prm, cfg, it, ot, im, om))
    logits = fwd(params, input_tokens, output_tokens, input_mask, output_mask)
    logits = jax.block_until_ready(logits)

    assert logits.shape == (B, T, output_size), logits.shape
    assert bool(jnp.all(jnp.isfinite(logits)))
    print("KERNEL_OK")
</pallas_src>

<mosaic_0001>
module attributes {stable_mosaic.version = 11 : i64} {
  func.func @_attn_kernel(%arg0: i32, %arg1: memref<1x8x96xbf16, #tpu.memory_space<vmem>>, %arg2: memref<1x8x8xbf16, #tpu.memory_space<vmem>>, %arg3: memref<1x8x32xbf16, #tpu.memory_space<vmem>>) attributes {dimension_semantics = [#tpu.dimension_semantics<parallel>], iteration_bounds = array<i64: 2>, scalar_prefetch = 0 : i64, scratch_operands = 0 : i64, tpu.core_type = #tpu.core_type<tc>, window_params = [{transform_indices = @transform_0, window_bounds = array<i64: 1, 8, 96>}, {pipeline_mode = #tpu.pipeline_mode<synchronous>, transform_indices = @transform_1, window_bounds = array<i64: 1, 8, 8>}, {transform_indices = @transform_2, window_bounds = array<i64: 1, 8, 32>}]} {
    %c0 = arith.constant 0 : index
    %c0_0 = arith.constant 0 : index
    %c0_1 = arith.constant 0 : index
    %0 = vector.load %arg1[%c0, %c0_0, %c0_1] : memref<1x8x96xbf16, #tpu.memory_space<vmem>>, vector<1x8x96xbf16>
    %1 = vector.shape_cast %0 : vector<1x8x96xbf16> to vector<8x96xbf16>
    %2 = vector.extract_strided_slice %1 {offsets = [0, 0], sizes = [8, 32], strides = [1, 1]} : vector<8x96xbf16> to vector<8x32xbf16>
    %3 = vector.extract_strided_slice %1 {offsets = [0, 32], sizes = [8, 32], strides = [1, 1]} : vector<8x96xbf16> to vector<8x32xbf16>
    %4 = vector.extract_strided_slice %1 {offsets = [0, 64], sizes = [8, 32], strides = [1, 1]} : vector<8x96xbf16> to vector<8x32xbf16>
    %c0_2 = arith.constant 0 : index
    %c0_3 = arith.constant 0 : index
    %c0_4 = arith.constant 0 : index
    %5 = vector.load %arg2[%c0_2, %c0_3, %c0_4] : memref<1x8x8xbf16, #tpu.memory_space<vmem>>, vector<1x8x8xbf16>
    %6 = vector.shape_cast %5 : vector<1x8x8xbf16> to vector<8x8xbf16>
    %7 = arith.extf %6 : vector<8x8xbf16> to vector<8x8xf32>
    %cst = arith.constant 3.535160e-01 : bf16
    %8 = vector.broadcast %cst : bf16 to vector<8x32xbf16>
    %9 = arith.mulf %2, %8 : vector<8x32xbf16>
    %10 = vector.extract_strided_slice %9 {offsets = [0, 0], sizes = [8, 8], strides = [1, 1]} : vector<8x32xbf16> to vector<8x8xbf16>
    %11 = vector.extract_strided_slice %3 {offsets = [0, 0], sizes = [8, 8], strides = [1, 1]} : vector<8x32xbf16> to vector<8x8xbf16>
    %12 = vector.extract_strided_slice %4 {offsets = [0, 0], sizes = [8, 8], strides = [1, 1]} : vector<8x32xbf16> to vector<8x8xbf16>
    %cst_5 = arith.constant dense<0.000000e+00> : vector<8x8xf32>
    %13 = tpu.matmul %10, %11, %cst_5 {dimension_numbers = #tpu.dot_dimension_numbers<[1], [1], [0], [0], [0, 0, 1, 0], [], []>} : vector<8x8xbf16>, vector<8x8xbf16>, vector<8x8xf32> -> vector<8x8xf32>
    %14 = arith.addf %13, %7 : vector<8x8xf32>
    %cst_6 = arith.constant dense<0xFF800000> : vector<8xf32>
    %15 = vector.multi_reduction <maximumf>, %14, %cst_6 [1] : vector<8x8xf32> to vector<8xf32>
    %16 = vector.shape_cast %15 : vector<8xf32> to vector<8x1xf32>
    %17 = vector.broadcast %16 : vector<8x1xf32> to vector<8x8xf32>
    %18 = arith.subf %14, %17 : vector<8x8xf32>
    %19 = math.exp %18 : vector<8x8xf32>
    %cst_7 = arith.constant dense<0.000000e+00> : vector<8xf32>
    %20 = vector.multi_reduction <add>, %19, %cst_7 [1] : vector<8x8xf32> to vector<8xf32>
    %21 = vector.shape_cast %20 : vector<8xf32> to vector<8x1xf32>
    %22 = vector.broadcast %21 : vector<8x1xf32> to vector<8x8xf32>
    %23 = arith.divf %19, %22 : vector<8x8xf32>
    %24 = arith.truncf %23 : vector<8x8xf32> to vector<8x8xbf16>
    %cst_8 = arith.constant dense<0.000000e+00> : vector<8x8xf32>
    %25 = tpu.matmul %24, %12, %cst_8 {dimension_numbers = #tpu.dot_dimension_numbers<[1], [0], [0], [1], [0, 0, 1, 1], [], []>} : vector<8x8xbf16>, vector<8x8xbf16>, vector<8x8xf32> -> vector<8x8xf32>
    %26 = vector.extract_strided_slice %9 {offsets = [0, 8], sizes = [8, 8], strides = [1, 1]} : vector<8x32xbf16> to vector<8x8xbf16>
    %27 = vector.extract_strided_slice %3 {offsets = [0, 8], sizes = [8, 8], strides = [1, 1]} : vector<8x32xbf16> to vector<8x8xbf16>
    %28 = vector.extract_strided_slice %4 {offsets = [0, 8], sizes = [8, 8], strides = [1, 1]} : vector<8x32xbf16> to vector<8x8xbf16>
    %cst_9 = arith.constant dense<0.000000e+00> : vector<8x8xf32>
    %29 = tpu.matmul %26, %27, %cst_9 {dimension_numbers = #tpu.dot_dimension_numbers<[1], [1], [0], [0], [0, 0, 1, 0], [], []>} : vector<8x8xbf16>, vector<8x8xbf16>, vector<8x8xf32> -> vector<8x8xf32>
    %30 = arith.addf %29, %7 : vector<8x8xf32>
    %cst_10 = arith.constant dense<0xFF800000> : vector<8xf32>
    %31 = vector.multi_reduction <maximumf>, %30, %cst_10 [1] : vector<8x8xf32> to vector<8xf32>
    %32 = vector.shape_cast %31 : vector<8xf32> to vector<8x1xf32>
    %33 = vector.broadcast %32 : vector<8x1xf32> to vector<8x8xf32>
    %34 = arith.subf %30, %33 : vector<8x8xf32>
    %35 = math.exp %34 : vector<8x8xf32>
    %cst_11 = arith.constant dense<0.000000e+00> : vector<8xf32>
    %36 = vector.multi_reduction <add>, %35, %cst_11 [1] : vector<8x8xf32> to vector<8xf32>
    %37 = vector.shape_cast %36 : vector<8xf32> to vector<8x1xf32>
    %38 = vector.broadcast %37 : vector<8x1xf32> to vector<8x8xf32>
    %39 = arith.divf %35, %38 : vector<8x8xf32>
    %40 = arith.truncf %39 : vector<8x8xf32> to vector<8x8xbf16>
    %cst_12 = arith.constant dense<0.000000e+00> : vector<8x8xf32>
    %41 = tpu.matmul %40, %28, %cst_12 {dimension_numbers = #tpu.dot_dimension_numbers<[1], [0], [0], [1], [0, 0, 1, 1], [], []>} : vector<8x8xbf16>, vector<8x8xbf16>, vector<8x8xf32> -> vector<8x8xf32>
    %42 = vector.extract_strided_slice %9 {offsets = [0, 16], sizes = [8, 8], strides = [1, 1]} : vector<8x32xbf16> to vector<8x8xbf16>
    %43 = vector.extract_strided_slice %3 {offsets = [0, 16], sizes = [8, 8], strides = [1, 1]} : vector<8x32xbf16> to vector<8x8xbf16>
    %44 = vector.extract_strided_slice %4 {offsets = [0, 16], sizes = [8, 8], strides = [1, 1]} : vector<8x32xbf16> to vector<8x8xbf16>
    %cst_13 = arith.constant dense<0.000000e+00> : vector<8x8xf32>
    %45 = tpu.matmul %42, %43, %cst_13 {dimension_numbers = #tpu.dot_dimension_numbers<[1], [1], [0], [0], [0, 0, 1, 0], [], []>} : vector<8x8xbf16>, vector<8x8xbf16>, vector<8x8xf32> -> vector<8x8xf32>
    %46 = arith.addf %45, %7 : vector<8x8xf32>
    %cst_14 = arith.constant dense<0xFF800000> : vector<8xf32>
    %47 = vector.multi_reduction <maximumf>, %46, %cst_14 [1] : vector<8x8xf32> to vector<8xf32>
    %48 = vector.shape_cast %47 : vector<8xf32> to vector<8x1xf32>
    %49 = vector.broadcast %48 : vector<8x1xf32> to vector<8x8xf32>
    %50 = arith.subf %46, %49 : vector<8x8xf32>
    %51 = math.exp %50 : vector<8x8xf32>
    %cst_15 = arith.constant dense<0.000000e+00> : vector<8xf32>
    %52 = vector.multi_reduction <add>, %51, %cst_15 [1] : vector<8x8xf32> to vector<8xf32>
    %53 = vector.shape_cast %52 : vector<8xf32> to vector<8x1xf32>
    %54 = vector.broadcast %53 : vector<8x1xf32> to vector<8x8xf32>
    %55 = arith.divf %51, %54 : vector<8x8xf32>
    %56 = arith.truncf %55 : vector<8x8xf32> to vector<8x8xbf16>
    %cst_16 = arith.constant dense<0.000000e+00> : vector<8x8xf32>
    %57 = tpu.matmul %56, %44, %cst_16 {dimension_numbers = #tpu.dot_dimension_numbers<[1], [0], [0], [1], [0, 0, 1, 1], [], []>} : vector<8x8xbf16>, vector<8x8xbf16>, vector<8x8xf32> -> vector<8x8xf32>
    %58 = vector.extract_strided_slice %9 {offsets = [0, 24], sizes = [8, 8], strides = [1, 1]} : vector<8x32xbf16> to vector<8x8xbf16>
    %59 = vector.extract_strided_slice %3 {offsets = [0, 24], sizes = [8, 8], strides = [1, 1]} : vector<8x32xbf16> to vector<8x8xbf16>
    %60 = vector.extract_strided_slice %4 {offsets = [0, 24], sizes = [8, 8], strides = [1, 1]} : vector<8x32xbf16> to vector<8x8xbf16>
    %cst_17 = arith.constant dense<0.000000e+00> : vector<8x8xf32>
    %61 = tpu.matmul %58, %59, %cst_17 {dimension_numbers = #tpu.dot_dimension_numbers<[1], [1], [0], [0], [0, 0, 1, 0], [], []>} : vector<8x8xbf16>, vector<8x8xbf16>, vector<8x8xf32> -> vector<8x8xf32>
    %62 = arith.addf %61, %7 : vector<8x8xf32>
    %cst_18 = arith.constant dense<0xFF800000> : vector<8xf32>
    %63 = vector.multi_reduction <maximumf>, %62, %cst_18 [1] : vector<8x8xf32> to vector<8xf32>
    %64 = vector.shape_cast %63 : vector<8xf32> to vector<8x1xf32>
    %65 = vector.broadcast %64 : vector<8x1xf32> to vector<8x8xf32>
    %66 = arith.subf %62, %65 : vector<8x8xf32>
    %67 = math.exp %66 : vector<8x8xf32>
    %cst_19 = arith.constant dense<0.000000e+00> : vector<8xf32>
    %68 = vector.multi_reduction <add>, %67, %cst_19 [1] : vector<8x8xf32> to vector<8xf32>
    %69 = vector.shape_cast %68 : vector<8xf32> to vector<8x1xf32>
    %70 = vector.broadcast %69 : vector<8x1xf32> to vector<8x8xf32>
    %71 = arith.divf %67, %70 : vector<8x8xf32>
    %72 = arith.truncf %71 : vector<8x8xf32> to vector<8x8xbf16>
    %cst_20 = arith.constant dense<0.000000e+00> : vector<8x8xf32>
    %73 = tpu.matmul %72, %60, %cst_20 {dimension_numbers = #tpu.dot_dimension_numbers<[1], [0], [0], [1], [0, 0, 1, 1], [], []>} : vector<8x8xbf16>, vector<8x8xbf16>, vector<8x8xf32> -> vector<8x8xf32>
    %74 = tpu.concatenate %25, %41, %57, %73 in 1 : vector<8x8xf32>, vector<8x8xf32>, vector<8x8xf32>, vector<8x8xf32> -> vector<8x32xf32>
    %75 = arith.truncf %74 : vector<8x32xf32> to vector<8x32xbf16>
    %c0_21 = arith.constant 0 : index
    %c0_22 = arith.constant 0 : index
    %c0_23 = arith.constant 0 : index
    %76 = vector.load %arg3[%c0_21, %c0_22, %c0_23] : memref<1x8x32xbf16, #tpu.memory_space<vmem>>, vector<1x8x32xbf16>
    %77 = vector.shape_cast %76 : vector<1x8x32xbf16> to vector<8x32xbf16>
    %78 = vector.shape_cast %75 : vector<8x32xbf16> to vector<1x8x32xbf16>
    tpu.vector_store %arg3[%c0_21, %c0_22, %c0_23], %78 {strides = array<i32>} : memref<1x8x32xbf16, #tpu.memory_space<vmem>>, vector<1x8x32xbf16>,
    return
  }
  func.func @transform_0(%arg0: i32) -> (i32, i32, i32) {
    %c0_i32 = arith.constant 0 : i32
    %c0_i32_0 = arith.constant 0 : i32
    %c0_i32_1 = arith.constant 0 : i32
    return %arg0, %c0_i32, %c0_i32_0 : i32, i32, i32
  }
  func.func @transform_1(%arg0: i32) -> (i32, i32, i32) {
    %c0_i32 = arith.constant 0 : i32
    %c0_i32_0 = arith.constant 0 : i32
    %c0_i32_1 = arith.constant 0 : i32
    %c0_i32_2 = arith.constant 0 : i32
    return %c0_i32, %c0_i32_0, %c0_i32_1 : i32, i32, i32
  }
  func.func @transform_2(%arg0: i32) -> (i32, i32, i32) {
    %c0_i32 = arith.constant 0 : i32
    %c0_i32_0 = arith.constant 0 : i32
    %c0_i32_1 = arith.constant 0 : i32
    return %arg0, %c0_i32, %c0_i32_0 : i32, i32, i32
  }
}

module attributes {stable_mosaic.version = 11 : i64} {
  func.func @_matmul_kernel(%arg0: i32, %arg1: i32, %arg2: i32, %arg3: memref<16x32xbf16, #tpu.memory_space<vmem>>, %arg4: memref<32x96xbf16, #tpu.memory_space<vmem>>, %arg5: memref<1x96xf32, #tpu.memory_space<vmem>>, %arg6: memref<16x96xbf16, #tpu.memory_space<vmem>>, %arg7: memref<16x96xf32, #tpu.memory_space<vmem>>) attributes {dimension_semantics = [#tpu.dimension_semantics<parallel>, #tpu.dimension_semantics<parallel>, #tpu.dimension_semantics<arbitrary>], iteration_bounds = array<i64: 1, 1, 1>, scalar_prefetch = 0 : i64, scratch_operands = 1 : i64, tpu.core_type = #tpu.core_type<tc>, window_params = [{transform_indices = @transform_0, window_bounds = array<i64: 16, 32>}, {transform_indices = @transform_1, window_bounds = array<i64: 32, 96>}, {transform_indices = @transform_2, window_bounds = array<i64: 1, 96>}, {transform_indices = @transform_3, window_bounds = array<i64: 16, 96>}]} {
    %c0_i32 = arith.constant 0 : i32
    %0 = arith.cmpi eq, %arg2, %c0_i32 : i32
    %1 = arith.extui %0 : i1 to i32
    %c0_i32_0 = arith.constant 0 : i32
    %2 = arith.cmpi ne, %1, %c0_i32_0 : i32
    scf.if %2 {
      %cst_10 = arith.constant 0.000000e+00 : f32
      %12 = vector.broadcast %cst_10 : f32 to vector<16x96xf32>
      %c0_11 = arith.constant 0 : index
      %c0_12 = arith.constant 0 : index
      %13 = vector.load %arg7[%c0_11, %c0_12] : memref<16x96xf32, #tpu.memory_space<vmem>>, vector<16x96xf32>
      tpu.vector_store %arg7[%c0_11, %c0_12], %12 {strides = array<i32>} : memref<16x96xf32, #tpu.memory_space<vmem>>, vector<16x96xf32>,
    } else {
    }
    %c0 = arith.constant 0 : index
    %c0_1 = arith.constant 0 : index
    %3 = vector.load %arg7[%c0, %c0_1] : memref<16x96xf32, #tpu.memory_space<vmem>>, vector<16x96xf32>
    %c0_2 = arith.constant 0 : index
    %c0_3 = arith.constant 0 : index
    %4 = vector.load %arg3[%c0_2, %c0_3] : memref<16x32xbf16, #tpu.memory_space<vmem>>, vector<16x32xbf16>
    %c0_4 = arith.constant 0 : index
    %c0_5 = arith.constant 0 : index
    %5 = vector.load %arg4[%c0_4, %c0_5] : memref<32x96xbf16, #tpu.memory_space<vmem>>, vector<32x96xbf16>
    %cst = arith.constant dense<0.000000e+00> : vector<16x96xf32>
    %6 = tpu.matmul %4, %5, %cst {dimension_numbers = #tpu.dot_dimension_numbers<[1], [0], [0], [1], [0, 0, 1, 1], [], []>} : vector<16x32xbf16>, vector<32x96xbf16>, vector<16x96xf32> -> vector<16x96xf32>
    %7 = arith.addf %3, %6 : vector<16x96xf32>
    %c0_6 = arith.constant 0 : index
    %c0_7 = arith.constant 0 : index
    %8 = vector.load %arg7[%c0_6, %c0_7] : memref<16x96xf32, #tpu.memory_space<vmem>>, vector<16x96xf32>
    tpu.vector_store %arg7[%c0_6, %c0_7], %7 {strides = array<i32>} : memref<16x96xf32, #tpu.memory_space<vmem>>, vector<16x96xf32>,
    %c0_i32_8 = arith.constant 0 : i32
    %9 = arith.cmpi eq, %arg2, %c0_i32_8 : i32
    %10 = arith.extui %9 : i1 to i32
    %c0_i32_9 = arith.constant 0 : i32
    %11 = arith.cmpi ne, %10, %c0_i32_9 : i32
    scf.if %11 {
      %c0_10 = arith.constant 0 : index
      %c0_11 = arith.constant 0 : index
      %12 = vector.load %arg7[%c0_10, %c0_11] : memref<16x96xf32, #tpu.memory_space<vmem>>, vector<16x96xf32>
      %c0_12 = arith.constant 0 : index
      %c0_13 = arith.constant 0 : index
      %13 = vector.load %arg5[%c0_12, %c0_13] : memref<1x96xf32, #tpu.memory_space<vmem>>, vector<1x96xf32>
      %14 = vector.broadcast %13 : vector<1x96xf32> to vector<16x96xf32>
      %15 = arith.addf %12, %14 : vector<16x96xf32>
      %16 = arith.truncf %15 : vector<16x96xf32> to vector<16x96xbf16>
      %c0_14 = arith.constant 0 : index
      %c0_15 = arith.constant 0 : index
      %17 = vector.load %arg6[%c0_14, %c0_15] : memref<16x96xbf16, #tpu.memory_space<vmem>>, vector<16x96xbf16>
      tpu.vector_store %arg6[%c0_14, %c0_15], %16 {strides = array<i32>} : memref<16x96xbf16, #tpu.memory_space<vmem>>, vector<16x96xbf16>,
    } else {
    }
    return
  }
  func.func @transform_0(%arg0: i32, %arg1: i32, %arg2: i32) -> (i32, i32) {
    %c0_i32 = arith.constant 0 : i32
    return %arg0, %arg2 : i32, i32
  }
  func.func @transform_1(%arg0: i32, %arg1: i32, %arg2: i32) -> (i32, i32) {
    %c0_i32 = arith.constant 0 : i32
    return %arg2, %arg1 : i32, i32
  }
  func.func @transform_2(%arg0: i32, %arg1: i32, %arg2: i32) -> (i32, i32) {
    %c0_i32 = arith.constant 0 : i32
    %c0_i32_0 = arith.constant 0 : i32
    return %c0_i32, %arg1 : i32, i32
  }
  func.func @transform_3(%arg0: i32, %arg1: i32, %arg2: i32) -> (i32, i32) {
    %c0_i32 = arith.constant 0 : i32
    return %arg0, %arg1 : i32, i32
  }
}

module attributes {stable_mosaic.version = 11 : i64} {
  func.func @_ln_kernel(%arg0: i32, %arg1: memref<16x32xbf16, #tpu.memory_space<vmem>>, %arg2: memref<16x32xbf16, #tpu.memory_space<vmem>>, %arg3: memref<1x32xf32, #tpu.memory_space<vmem>>, %arg4: memref<1x32xf32, #tpu.memory_space<vmem>>, %arg5: memref<16x32xbf16, #tpu.memory_space<vmem>>) attributes {dimension_semantics = [#tpu.dimension_semantics<parallel>], iteration_bounds = array<i64: 1>, scalar_prefetch = 0 : i64, scratch_operands = 0 : i64, tpu.core_type = #tpu.core_type<tc>, window_params = [{transform_indices = @transform_0, window_bounds = array<i64: 16, 32>}, {transform_indices = @transform_1, window_bounds = array<i64: 16, 32>}, {pipeline_mode = #tpu.pipeline_mode<synchronous>, transform_indices = @transform_2, window_bounds = array<i64: 1, 32>}, {pipeline_mode = #tpu.pipeline_mode<synchronous>, transform_indices = @transform_3, window_bounds = array<i64: 1, 32>}, {transform_indices = @transform_4, window_bounds = array<i64: 16, 32>}]} {
    %c0 = arith.constant 0 : index
    %c0_0 = arith.constant 0 : index
    %0 = vector.load %arg1[%c0, %c0_0] : memref<16x32xbf16, #tpu.memory_space<vmem>>, vector<16x32xbf16>
    %1 = arith.extf %0 : vector<16x32xbf16> to vector<16x32xf32>
    %c0_1 = arith.constant 0 : index
    %c0_2 = arith.constant 0 : index
    %2 = vector.load %arg2[%c0_1, %c0_2] : memref<16x32xbf16, #tpu.memory_space<vmem>>, vector<16x32xbf16>
    %3 = arith.extf %2 : vector<16x32xbf16> to vector<16x32xf32>
    %4 = arith.addf %1, %3 : vector<16x32xf32>
    %cst = arith.constant dense<0.000000e+00> : vector<16xf32>
    %5 = vector.multi_reduction <add>, %4, %cst [1] : vector<16x32xf32> to vector<16xf32>
    %6 = vector.shape_cast %5 : vector<16xf32> to vector<16x1xf32>
    %cst_3 = arith.constant 3.200000e+01 : f32
    %7 = vector.broadcast %cst_3 : f32 to vector<16x1xf32>
    %8 = arith.divf %6, %7 : vector<16x1xf32>
    %9 = vector.broadcast %8 : vector<16x1xf32> to vector<16x32xf32>
    %10 = arith.subf %4, %9 : vector<16x32xf32>
    %11 = arith.mulf %10, %10 : vector<16x32xf32>
    %cst_4 = arith.constant dense<0.000000e+00> : vector<16xf32>
    %12 = vector.multi_reduction <add>, %11, %cst_4 [1] : vector<16x32xf32> to vector<16xf32>
    %13 = vector.shape_cast %12 : vector<16xf32> to vector<16x1xf32>
    %cst_5 = arith.constant 3.200000e+01 : f32
    %14 = vector.broadcast %cst_5 : f32 to vector<16x1xf32>
    %15 = arith.divf %13, %14 : vector<16x1xf32>
    %16 = vector.broadcast %8 : vector<16x1xf32> to vector<16x32xf32>
    %17 = arith.subf %4, %16 : vector<16x32xf32>
    %cst_6 = arith.constant 9.99999974E-6 : f32
    %18 = vector.broadcast %cst_6 : f32 to vector<16x1xf32>
    %19 = arith.addf %15, %18 : vector<16x1xf32>
    %20 = math.rsqrt %19 : vector<16x1xf32>
    %21 = vector.broadcast %20 : vector<16x1xf32> to vector<16x32xf32>
    %22 = arith.mulf %17, %21 : vector<16x32xf32>
    %c0_7 = arith.constant 0 : index
    %c0_8 = arith.constant 0 : index
    %23 = vector.load %arg3[%c0_7, %c0_8] : memref<1x32xf32, #tpu.memory_space<vmem>>, vector<1x32xf32>
    %24 = vector.broadcast %23 : vector<1x32xf32> to vector<16x32xf32>
    %25 = arith.mulf %22, %24 : vector<16x32xf32>
    %c0_9 = arith.constant 0 : index
    %c0_10 = arith.constant 0 : index
    %26 = vector.load %arg4[%c0_9, %c0_10] : memref<1x32xf32, #tpu.memory_space<vmem>>, vector<1x32xf32>
    %27 = vector.broadcast %26 : vector<1x32xf32> to vector<16x32xf32>
    %28 = arith.addf %25, %27 : vector<16x32xf32>
    %29 = arith.truncf %28 : vector<16x32xf32> to vector<16x32xbf16>
    %c0_11 = arith.constant 0 : index
    %c0_12 = arith.constant 0 : index
    %30 = vector.load %arg5[%c0_11, %c0_12] : memref<16x32xbf16, #tpu.memory_space<vmem>>, vector<16x32xbf16>
    tpu.vector_store %arg5[%c0_11, %c0_12], %29 {strides = array<i32>} : memref<16x32xbf16, #tpu.memory_space<vmem>>, vector<16x32xbf16>,
    return
  }
  func.func @transform_0(%arg0: i32) -> (i32, i32) {
    %c0_i32 = arith.constant 0 : i32
    %c0_i32_0 = arith.constant 0 : i32
    return %arg0, %c0_i32 : i32, i32
  }
  func.func @transform_1(%arg0: i32) -> (i32, i32) {
    %c0_i32 = arith.constant 0 : i32
    %c0_i32_0 = arith.constant 0 : i32
    return %arg0, %c0_i32 : i32, i32
  }
  func.func @transform_2(%arg0: i32) -> (i32, i32) {
    %c0_i32 = arith.constant 0 : i32
    %c0_i32_0 = arith.constant 0 : i32
    %c0_i32_1 = arith.constant 0 : i32
    return %c0_i32, %c0_i32_0 : i32, i32
  }
  func.func @transform_3(%arg0: i32) -> (i32, i32) {
    %c0_i32 = arith.constant 0 : i32
    %c0_i32_0 = arith.constant 0 : i32
    %c0_i32_1 = arith.constant 0 : i32
    return %c0_i32, %c0_i32_0 : i32, i32
  }
  func.func @transform_4(%arg0: i32) -> (i32, i32) {
    %c0_i32 = arith.constant 0 : i32
    %c0_i32_0 = arith.constant 0 : i32
    return %arg0, %c0_i32 : i32, i32
  }
}

module attributes {stable_mosaic.version = 11 : i64} {
  func.func @_matmul_kernel(%arg0: i32, %arg1: i32, %arg2: i32, %arg3: memref<16x32xbf16, #tpu.memory_space<vmem>>, %arg4: memref<32x32xbf16, #tpu.memory_space<vmem>>, %arg5: memref<1x32xf32, #tpu.memory_space<vmem>>, %arg6: memref<16x32xbf16, #tpu.memory_space<vmem>>, %arg7: memref<16x32xf32, #tpu.memory_space<vmem>>) attributes {dimension_semantics = [#tpu.dimension_semantics<parallel>, #tpu.dimension_semantics<parallel>, #tpu.dimension_semantics<arbitrary>], iteration_bounds = array<i64: 1, 1, 1>, scalar_prefetch = 0 : i64, scratch_operands = 1 : i64, tpu.core_type = #tpu.core_type<tc>, window_params = [{transform_indices = @transform_0, window_bounds = array<i64: 16, 32>}, {transform_indices = @transform_1, window_bounds = array<i64: 32, 32>}, {transform_indices = @transform_2, window_bounds = array<i64: 1, 32>}, {transform_indices = @transform_3, window_bounds = array<i64: 16, 32>}]} {
    %c0_i32 = arith.constant 0 : i32
    %0 = arith.cmpi eq, %arg2, %c0_i32 : i32
    %1 = arith.extui %0 : i1 to i32
    %c0_i32_0 = arith.constant 0 : i32
    %2 = arith.cmpi ne, %1, %c0_i32_0 : i32
    scf.if %2 {
      %cst_10 = arith.constant 0.000000e+00 : f32
      %12 = vector.broadcast %cst_10 : f32 to vector<16x32xf32>
      %c0_11 = arith.constant 0 : index
      %c0_12 = arith.constant 0 : index
      %13 = vector.load %arg7[%c0_11, %c0_12] : memref<16x32xf32, #tpu.memory_space<vmem>>, vector<16x32xf32>
      tpu.vector_store %arg7[%c0_11, %c0_12], %12 {strides = array<i32>} : memref<16x32xf32, #tpu.memory_space<vmem>>, vector<16x32xf32>,
    } else {
    }
    %c0 = arith.constant 0 : index
    %c0_1 = arith.constant 0 : index
    %3 = vector.load %arg7[%c0, %c0_1] : memref<16x32xf32, #tpu.memory_space<vmem>>, vector<16x32xf32>
    %c0_2 = arith.constant 0 : index
    %c0_3 = arith.constant 0 : index
    %4 = vector.load %arg3[%c0_2, %c0_3] : memref<16x32xbf16, #tpu.memory_space<vmem>>, vector<16x32xbf16>
    %c0_4 = arith.constant 0 : index
    %c0_5 = arith.constant 0 : index
    %5 = vector.load %arg4[%c0_4, %c0_5] : memref<32x32xbf16, #tpu.memory_space<vmem>>, vector<32x32xbf16>
    %cst = arith.constant dense<0.000000e+00> : vector<16x32xf32>
    %6 = tpu.matmul %4, %5, %cst {dimension_numbers = #tpu.dot_dimension_numbers<[1], [0], [0], [1], [0, 0, 1, 1], [], []>} : vector<16x32xbf16>, vector<32x32xbf16>, vector<16x32xf32> -> vector<16x32xf32>
    %7 = arith.addf %3, %6 : vector<16x32xf32>
    %c0_6 = arith.constant 0 : index
    %c0_7 = arith.constant 0 : index
    %8 = vector.load %arg7[%c0_6, %c0_7] : memref<16x32xf32, #tpu.memory_space<vmem>>, vector<16x32xf32>
    tpu.vector_store %arg7[%c0_6, %c0_7], %7 {strides = array<i32>} : memref<16x32xf32, #tpu.memory_space<vmem>>, vector<16x32xf32>,
    %c0_i32_8 = arith.constant 0 : i32
    %9 = arith.cmpi eq, %arg2, %c0_i32_8 : i32
    %10 = arith.extui %9 : i1 to i32
    %c0_i32_9 = arith.constant 0 : i32
    %11 = arith.cmpi ne, %10, %c0_i32_9 : i32
    scf.if %11 {
      %c0_10 = arith.constant 0 : index
      %c0_11 = arith.constant 0 : index
      %12 = vector.load %arg7[%c0_10, %c0_11] : memref<16x32xf32, #tpu.memory_space<vmem>>, vector<16x32xf32>
      %c0_12 = arith.constant 0 : index
      %c0_13 = arith.constant 0 : index
      %13 = vector.load %arg5[%c0_12, %c0_13] : memref<1x32xf32, #tpu.memory_space<vmem>>, vector<1x32xf32>
      %14 = vector.broadcast %13 : vector<1x32xf32> to vector<16x32xf32>
      %15 = arith.addf %12, %14 : vector<16x32xf32>
      %16 = arith.truncf %15 : vector<16x32xf32> to vector<16x32xbf16>
      %c0_14 = arith.constant 0 : index
      %c0_15 = arith.constant 0 : index
      %17 = vector.load %arg6[%c0_14, %c0_15] : memref<16x32xbf16, #tpu.memory_space<vmem>>, vector<16x32xbf16>
      tpu.vector_store %arg6[%c0_14, %c0_15], %16 {strides = array<i32>} : memref<16x32xbf16, #tpu.memory_space<vmem>>, vector<16x32xbf16>,
    } else {
    }
    return
  }
  func.func @transform_0(%arg0: i32, %arg1: i32, %arg2: i32) -> (i32, i32) {
    %c0_i32 = arith.constant 0 : i32
    return %arg0, %arg2 : i32, i32
  }
  func.func @transform_1(%arg0: i32, %arg1: i32, %arg2: i32) -> (i32, i32) {
    %c0_i32 = arith.constant 0 : i32
    return %arg2, %arg1 : i32, i32
  }
  func.func @transform_2(%arg0: i32, %arg1: i32, %arg2: i32) -> (i32, i32) {
    %c0_i32 = arith.constant 0 : i32
    %c0_i32_0 = arith.constant 0 : i32
    return %c0_i32, %arg1 : i32, i32
  }
  func.func @transform_3(%arg0: i32, %arg1: i32, %arg2: i32) -> (i32, i32) {
    %c0_i32 = arith.constant 0 : i32
    return %arg0, %arg1 : i32, i32
  }
}

module attributes {stable_mosaic.version = 11 : i64} {
  func.func @_matmul_kernel(%arg0: i32, %arg1: i32, %arg2: i32, %arg3: memref<16x64xbf16, #tpu.memory_space<vmem>>, %arg4: memref<64x32xbf16, #tpu.memory_space<vmem>>, %arg5: memref<1x32xf32, #tpu.memory_space<vmem>>, %arg6: memref<16x32xbf16, #tpu.memory_space<vmem>>, %arg7: memref<16x32xf32, #tpu.memory_space<vmem>>) attributes {dimension_semantics = [#tpu.dimension_semantics<parallel>, #tpu.dimension_semantics<parallel>, #tpu.dimension_semantics<arbitrary>], iteration_bounds = array<i64: 1, 1, 1>, scalar_prefetch = 0 : i64, scratch_operands = 1 : i64, tpu.core_type = #tpu.core_type<tc>, window_params = [{transform_indices = @transform_0, window_bounds = array<i64: 16, 64>}, {transform_indices = @transform_1, window_bounds = array<i64: 64, 32>}, {transform_indices = @transform_2, window_bounds = array<i64: 1, 32>}, {transform_indices = @transform_3, window_bounds = array<i64: 16, 32>}]} {
    %c0_i32 = arith.constant 0 : i32
    %0 = arith.cmpi eq, %arg2, %c0_i32 : i32
    %1 = arith.extui %0 : i1 to i32
    %c0_i32_0 = arith.constant 0 : i32
    %2 = arith.cmpi ne, %1, %c0_i32_0 : i32
    scf.if %2 {
      %cst_10 = arith.constant 0.000000e+00 : f32
      %12 = vector.broadcast %cst_10 : f32 to vector<16x32xf32>
      %c0_11 = arith.constant 0 : index
      %c0_12 = arith.constant 0 : index
      %13 = vector.load %arg7[%c0_11, %c0_12] : memref<16x32xf32, #tpu.memory_space<vmem>>, vector<16x32xf32>
      tpu.vector_store %arg7[%c0_11, %c0_12], %12 {strides = array<i32>} : memref<16x32xf32, #tpu.memory_space<vmem>>, vector<16x32xf32>,
    } else {
    }
    %c0 = arith.constant 0 : index
    %c0_1 = arith.constant 0 : index
    %3 = vector.load %arg7[%c0, %c0_1] : memref<16x32xf32, #tpu.memory_space<vmem>>, vector<16x32xf32>
    %c0_2 = arith.constant 0 : index
    %c0_3 = arith.constant 0 : index
    %4 = vector.load %arg3[%c0_2, %c0_3] : memref<16x64xbf16, #tpu.memory_space<vmem>>, vector<16x64xbf16>
    %c0_4 = arith.constant 0 : index
    %c0_5 = arith.constant 0 : index
    %5 = vector.load %arg4[%c0_4, %c0_5] : memref<64x32xbf16, #tpu.memory_space<vmem>>, vector<64x32xbf16>
    %cst = arith.constant dense<0.000000e+00> : vector<16x32xf32>
    %6 = tpu.matmul %4, %5, %cst {dimension_numbers = #tpu.dot_dimension_numbers<[1], [0], [0], [1], [0, 0, 1, 1], [], []>} : vector<16x64xbf16>, vector<64x32xbf16>, vector<16x32xf32> -> vector<16x32xf32>
    %7 = arith.addf %3, %6 : vector<16x32xf32>
    %c0_6 = arith.constant 0 : index
    %c0_7 = arith.constant 0 : index
    %8 = vector.load %arg7[%c0_6, %c0_7] : memref<16x32xf32, #tpu.memory_space<vmem>>, vector<16x32xf32>
    tpu.vector_store %arg7[%c0_6, %c0_7], %7 {strides = array<i32>} : memref<16x32xf32, #tpu.memory_space<vmem>>, vector<16x32xf32>,
    %c0_i32_8 = arith.constant 0 : i32
    %9 = arith.cmpi eq, %arg2, %c0_i32_8 : i32
    %10 = arith.extui %9 : i1 to i32
    %c0_i32_9 = arith.constant 0 : i32
    %11 = arith.cmpi ne, %10, %c0_i32_9 : i32
    scf.if %11 {
      %c0_10 = arith.constant 0 : index
      %c0_11 = arith.constant 0 : index
      %12 = vector.load %arg7[%c0_10, %c0_11] : memref<16x32xf32, #tpu.memory_space<vmem>>, vector<16x32xf32>
      %c0_12 = arith.constant 0 : index
      %c0_13 = arith.constant 0 : index
      %13 = vector.load %arg5[%c0_12, %c0_13] : memref<1x32xf32, #tpu.memory_space<vmem>>, vector<1x32xf32>
      %14 = vector.broadcast %13 : vector<1x32xf32> to vector<16x32xf32>
      %15 = arith.addf %12, %14 : vector<16x32xf32>
      %16 = arith.truncf %15 : vector<16x32xf32> to vector<16x32xbf16>
      %c0_14 = arith.constant 0 : index
      %c0_15 = arith.constant 0 : index
      %17 = vector.load %arg6[%c0_14, %c0_15] : memref<16x32xbf16, #tpu.memory_space<vmem>>, vector<16x32xbf16>
      tpu.vector_store %arg6[%c0_14, %c0_15], %16 {strides = array<i32>} : memref<16x32xbf16, #tpu.memory_space<vmem>>, vector<16x32xbf16>,
    } else {
    }
    return
  }
  func.func @transform_0(%arg0: i32, %arg1: i32, %arg2: i32) -> (i32, i32) {
    %c0_i32 = arith.constant 0 : i32
    return %arg0, %arg2 : i32, i32
  }
  func.func @transform_1(%arg0: i32, %arg1: i32, %arg2: i32) -> (i32, i32) {
    %c0_i32 = arith.constant 0 : i32
    return %arg2, %arg1 : i32, i32
  }
  func.func @transform_2(%arg0: i32, %arg1: i32, %arg2: i32) -> (i32, i32) {
    %c0_i32 = arith.constant 0 : i32
    %c0_i32_0 = arith.constant 0 : i32
    return %c0_i32, %arg1 : i32, i32
  }
  func.func @transform_3(%arg0: i32, %arg1: i32, %arg2: i32) -> (i32, i32) {
    %c0_i32 = arith.constant 0 : i32
    return %arg0, %arg1 : i32, i32
  }
}

module attributes {stable_mosaic.version = 11 : i64} {
  func.func @_matmul_kernel(%arg0: i32, %arg1: i32, %arg2: i32, %arg3: memref<16x32xbf16, #tpu.memory_space<vmem>>, %arg4: memref<32x64xbf16, #tpu.memory_space<vmem>>, %arg5: memref<1x64xf32, #tpu.memory_space<vmem>>, %arg6: memref<16x64xbf16, #tpu.memory_space<vmem>>, %arg7: memref<16x64xf32, #tpu.memory_space<vmem>>) attributes {dimension_semantics = [#tpu.dimension_semantics<parallel>, #tpu.dimension_semantics<parallel>, #tpu.dimension_semantics<arbitrary>], iteration_bounds = array<i64: 1, 1, 1>, scalar_prefetch = 0 : i64, scratch_operands = 1 : i64, tpu.core_type = #tpu.core_type<tc>, window_params = [{transform_indices = @transform_0, window_bounds = array<i64: 16, 32>}, {transform_indices = @transform_1, window_bounds = array<i64: 32, 64>}, {transform_indices = @transform_2, window_bounds = array<i64: 1, 64>}, {transform_indices = @transform_3, window_bounds = array<i64: 16, 64>}]} {
    %c0_i32 = arith.constant 0 : i32
    %0 = arith.cmpi eq, %arg2, %c0_i32 : i32
    %1 = arith.extui %0 : i1 to i32
    %c0_i32_0 = arith.constant 0 : i32
    %2 = arith.cmpi ne, %1, %c0_i32_0 : i32
    scf.if %2 {
      %cst_10 = arith.constant 0.000000e+00 : f32
      %12 = vector.broadcast %cst_10 : f32 to vector<16x64xf32>
      %c0_11 = arith.constant 0 : index
      %c0_12 = arith.constant 0 : index
      %13 = vector.load %arg7[%c0_11, %c0_12] : memref<16x64xf32, #tpu.memory_space<vmem>>, vector<16x64xf32>
      tpu.vector_store %arg7[%c0_11, %c0_12], %12 {strides = array<i32>} : memref<16x64xf32, #tpu.memory_space<vmem>>, vector<16x64xf32>,
    } else {
    }
    %c0 = arith.constant 0 : index
    %c0_1 = arith.constant 0 : index
    %3 = vector.load %arg7[%c0, %c0_1] : memref<16x64xf32, #tpu.memory_space<vmem>>, vector<16x64xf32>
    %c0_2 = arith.constant 0 : index
    %c0_3 = arith.constant 0 : index
    %4 = vector.load %arg3[%c0_2, %c0_3] : memref<16x32xbf16, #tpu.memory_space<vmem>>, vector<16x32xbf16>
    %c0_4 = arith.constant 0 : index
    %c0_5 = arith.constant 0 : index
    %5 = vector.load %arg4[%c0_4, %c0_5] : memref<32x64xbf16, #tpu.memory_space<vmem>>, vector<32x64xbf16>
    %cst = arith.constant dense<0.000000e+00> : vector<16x64xf32>
    %6 = tpu.matmul %4, %5, %cst {dimension_numbers = #tpu.dot_dimension_numbers<[1], [0], [0], [1], [0, 0, 1, 1], [], []>} : vector<16x32xbf16>, vector<32x64xbf16>, vector<16x64xf32> -> vector<16x64xf32>
    %7 = arith.addf %3, %6 : vector<16x64xf32>
    %c0_6 = arith.constant 0 : index
    %c0_7 = arith.constant 0 : index
    %8 = vector.load %arg7[%c0_6, %c0_7] : memref<16x64xf32, #tpu.memory_space<vmem>>, vector<16x64xf32>
    tpu.vector_store %arg7[%c0_6, %c0_7], %7 {strides = array<i32>} : memref<16x64xf32, #tpu.memory_space<vmem>>, vector<16x64xf32>,
    %c0_i32_8 = arith.constant 0 : i32
    %9 = arith.cmpi eq, %arg2, %c0_i32_8 : i32
    %10 = arith.extui %9 : i1 to i32
    %c0_i32_9 = arith.constant 0 : i32
    %11 = arith.cmpi ne, %10, %c0_i32_9 : i32
    scf.if %11 {
      %c0_10 = arith.constant 0 : index
      %c0_11 = arith.constant 0 : index
      %12 = vector.load %arg7[%c0_10, %c0_11] : memref<16x64xf32, #tpu.memory_space<vmem>>, vector<16x64xf32>
      %c0_12 = arith.constant 0 : index
      %c0_13 = arith.constant 0 : index
      %13 = vector.load %arg5[%c0_12, %c0_13] : memref<1x64xf32, #tpu.memory_space<vmem>>, vector<1x64xf32>
      %14 = vector.broadcast %13 : vector<1x64xf32> to vector<16x64xf32>
      %15 = arith.addf %12, %14 : vector<16x64xf32>
      %cst_14 = arith.constant 0.000000e+00 : f32
      %16 = vector.broadcast %cst_14 : f32 to vector<16x64xf32>
      %17 = arith.maximumf %15, %16 : vector<16x64xf32>
      %18 = arith.truncf %17 : vector<16x64xf32> to vector<16x64xbf16>
      %c0_15 = arith.constant 0 : index
      %c0_16 = arith.constant 0 : index
      %19 = vector.load %arg6[%c0_15, %c0_16] : memref<16x64xbf16, #tpu.memory_space<vmem>>, vector<16x64xbf16>
      tpu.vector_store %arg6[%c0_15, %c0_16], %18 {strides = array<i32>} : memref<16x64xbf16, #tpu.memory_space<vmem>>, vector<16x64xbf16>,
    } else {
    }
    return
  }
  func.func @transform_0(%arg0: i32, %arg1: i32, %arg2: i32) -> (i32, i32) {
    %c0_i32 = arith.constant 0 : i32
    return %arg0, %arg2 : i32, i32
  }
  func.func @transform_1(%arg0: i32, %arg1: i32, %arg2: i32) -> (i32, i32) {
    %c0_i32 = arith.constant 0 : i32
    return %arg2, %arg1 : i32, i32
  }
  func.func @transform_2(%arg0: i32, %arg1: i32, %arg2: i32) -> (i32, i32) {
    %c0_i32 = arith.constant 0 : i32
    %c0_i32_0 = arith.constant 0 : i32
    return %c0_i32, %arg1 : i32, i32
  }
  func.func @transform_3(%arg0: i32, %arg1: i32, %arg2: i32) -> (i32, i32) {
    %c0_i32 = arith.constant 0 : i32
    return %arg0, %arg1 : i32, i32
  }
}

module attributes {stable_mosaic.version = 11 : i64} {
  func.func @_matmul_kernel(%arg0: i32, %arg1: i32, %arg2: i32, %arg3: memref<16x32xbf16, #tpu.memory_space<vmem>>, %arg4: memref<32x64xbf16, #tpu.memory_space<vmem>>, %arg5: memref<1x64xf32, #tpu.memory_space<vmem>>, %arg6: memref<16x64xbf16, #tpu.memory_space<vmem>>, %arg7: memref<16x64xf32, #tpu.memory_space<vmem>>) attributes {dimension_semantics = [#tpu.dimension_semantics<parallel>, #tpu.dimension_semantics<parallel>, #tpu.dimension_semantics<arbitrary>], iteration_bounds = array<i64: 1, 1, 1>, scalar_prefetch = 0 : i64, scratch_operands = 1 : i64, tpu.core_type = #tpu.core_type<tc>, window_params = [{transform_indices = @transform_0, window_bounds = array<i64: 16, 32>}, {transform_indices = @transform_1, window_bounds = array<i64: 32, 64>}, {transform_indices = @transform_2, window_bounds = array<i64: 1, 64>}, {transform_indices = @transform_3, window_bounds = array<i64: 16, 64>}]} {
    %c0_i32 = arith.constant 0 : i32
    %0 = arith.cmpi eq, %arg2, %c0_i32 : i32
    %1 = arith.extui %0 : i1 to i32
    %c0_i32_0 = arith.constant 0 : i32
    %2 = arith.cmpi ne, %1, %c0_i32_0 : i32
    scf.if %2 {
      %cst_10 = arith.constant 0.000000e+00 : f32
      %12 = vector.broadcast %cst_10 : f32 to vector<16x64xf32>
      %c0_11 = arith.constant 0 : index
      %c0_12 = arith.constant 0 : index
      %13 = vector.load %arg7[%c0_11, %c0_12] : memref<16x64xf32, #tpu.memory_space<vmem>>, vector<16x64xf32>
      tpu.vector_store %arg7[%c0_11, %c0_12], %12 {strides = array<i32>} : memref<16x64xf32, #tpu.memory_space<vmem>>, vector<16x64xf32>,
    } else {
    }
    %c0 = arith.constant 0 : index
    %c0_1 = arith.constant 0 : index
    %3 = vector.load %arg7[%c0, %c0_1] : memref<16x64xf32, #tpu.memory_space<vmem>>, vector<16x64xf32>
    %c0_2 = arith.constant 0 : index
    %c0_3 = arith.constant 0 : index
    %4 = vector.load %arg3[%c0_2, %c0_3] : memref<16x32xbf16, #tpu.memory_space<vmem>>, vector<16x32xbf16>
    %c0_4 = arith.constant 0 : index
    %c0_5 = arith.constant 0 : index
    %5 = vector.load %arg4[%c0_4, %c0_5] : memref<32x64xbf16, #tpu.memory_space<vmem>>, vector<32x64xbf16>
    %cst = arith.constant dense<0.000000e+00> : vector<16x64xf32>
    %6 = tpu.matmul %4, %5, %cst {dimension_numbers = #tpu.dot_dimension_numbers<[1], [0], [0], [1], [0, 0, 1, 1], [], []>} : vector<16x32xbf16>, vector<32x64xbf16>, vector<16x64xf32> -> vector<16x64xf32>
    %7 = arith.addf %3, %6 : vector<16x64xf32>
    %c0_6 = arith.constant 0 : index
    %c0_7 = arith.constant 0 : index
    %8 = vector.load %arg7[%c0_6, %c0_7] : memref<16x64xf32, #tpu.memory_space<vmem>>, vector<16x64xf32>
    tpu.vector_store %arg7[%c0_6, %c0_7], %7 {strides = array<i32>} : memref<16x64xf32, #tpu.memory_space<vmem>>, vector<16x64xf32>,
    %c0_i32_8 = arith.constant 0 : i32
    %9 = arith.cmpi eq, %arg2, %c0_i32_8 : i32
    %10 = arith.extui %9 : i1 to i32
    %c0_i32_9 = arith.constant 0 : i32
    %11 = arith.cmpi ne, %10, %c0_i32_9 : i32
    scf.if %11 {
      %c0_10 = arith.constant 0 : index
      %c0_11 = arith.constant 0 : index
      %12 = vector.load %arg7[%c0_10, %c0_11] : memref<16x64xf32, #tpu.memory_space<vmem>>, vector<16x64xf32>
      %c0_12 = arith.constant 0 : index
      %c0_13 = arith.constant 0 : index
      %13 = vector.load %arg5[%c0_12, %c0_13] : memref<1x64xf32, #tpu.memory_space<vmem>>, vector<1x64xf32>
      %14 = vector.broadcast %13 : vector<1x64xf32> to vector<16x64xf32>
      %15 = arith.addf %12, %14 : vector<16x64xf32>
      %16 = arith.truncf %15 : vector<16x64xf32> to vector<16x64xbf16>
      %c0_14 = arith.constant 0 : index
      %c0_15 = arith.constant 0 : index
      %17 = vector.load %arg6[%c0_14, %c0_15] : memref<16x64xbf16, #tpu.memory_space<vmem>>, vector<16x64xbf16>
      tpu.vector_store %arg6[%c0_14, %c0_15], %16 {strides = array<i32>} : memref<16x64xbf16, #tpu.memory_space<vmem>>, vector<16x64xbf16>,
    } else {
    }
    return
  }
  func.func @transform_0(%arg0: i32, %arg1: i32, %arg2: i32) -> (i32, i32) {
    %c0_i32 = arith.constant 0 : i32
    return %arg0, %arg2 : i32, i32
  }
  func.func @transform_1(%arg0: i32, %arg1: i32, %arg2: i32) -> (i32, i32) {
    %c0_i32 = arith.constant 0 : i32
    return %arg2, %arg1 : i32, i32
  }
  func.func @transform_2(%arg0: i32, %arg1: i32, %arg2: i32) -> (i32, i32) {
    %c0_i32 = arith.constant 0 : i32
    %c0_i32_0 = arith.constant 0 : i32
    return %c0_i32, %arg1 : i32, i32
  }
  func.func @transform_3(%arg0: i32, %arg1: i32, %arg2: i32) -> (i32, i32) {
    %c0_i32 = arith.constant 0 : i32
    return %arg0, %arg1 : i32, i32
  }
}

module attributes {stable_mosaic.version = 11 : i64} {
  func.func @_ln_kernel(%arg0: i32, %arg1: memref<16x32xbf16, #tpu.memory_space<vmem>>, %arg2: memref<1x32xf32, #tpu.memory_space<vmem>>, %arg3: memref<1x32xf32, #tpu.memory_space<vmem>>, %arg4: memref<16x32xbf16, #tpu.memory_space<vmem>>) attributes {dimension_semantics = [#tpu.dimension_semantics<parallel>], iteration_bounds = array<i64: 1>, scalar_prefetch = 0 : i64, scratch_operands = 0 : i64, tpu.core_type = #tpu.core_type<tc>, window_params = [{transform_indices = @transform_0, window_bounds = array<i64: 16, 32>}, {pipeline_mode = #tpu.pipeline_mode<synchronous>, transform_indices = @transform_1, window_bounds = array<i64: 1, 32>}, {pipeline_mode = #tpu.pipeline_mode<synchronous>, transform_indices = @transform_2, window_bounds = array<i64: 1, 32>}, {transform_indices = @transform_3, window_bounds = array<i64: 16, 32>}]} {
    %c0 = arith.constant 0 : index
    %c0_0 = arith.constant 0 : index
    %0 = vector.load %arg1[%c0, %c0_0] : memref<16x32xbf16, #tpu.memory_space<vmem>>, vector<16x32xbf16>
    %1 = arith.extf %0 : vector<16x32xbf16> to vector<16x32xf32>
    %cst = arith.constant dense<0.000000e+00> : vector<16xf32>
    %2 = vector.multi_reduction <add>, %1, %cst [1] : vector<16x32xf32> to vector<16xf32>
    %3 = vector.shape_cast %2 : vector<16xf32> to vector<16x1xf32>
    %cst_1 = arith.constant 3.200000e+01 : f32
    %4 = vector.broadcast %cst_1 : f32 to vector<16x1xf32>
    %5 = arith.divf %3, %4 : vector<16x1xf32>
    %6 = vector.broadcast %5 : vector<16x1xf32> to vector<16x32xf32>
    %7 = arith.subf %1, %6 : vector<16x32xf32>
    %8 = arith.mulf %7, %7 : vector<16x32xf32>
    %cst_2 = arith.constant dense<0.000000e+00> : vector<16xf32>
    %9 = vector.multi_reduction <add>, %8, %cst_2 [1] : vector<16x32xf32> to vector<16xf32>
    %10 = vector.shape_cast %9 : vector<16xf32> to vector<16x1xf32>
    %cst_3 = arith.constant 3.200000e+01 : f32
    %11 = vector.broadcast %cst_3 : f32 to vector<16x1xf32>
    %12 = arith.divf %10, %11 : vector<16x1xf32>
    %13 = vector.broadcast %5 : vector<16x1xf32> to vector<16x32xf32>
    %14 = arith.subf %1, %13 : vector<16x32xf32>
    %cst_4 = arith.constant 9.99999974E-6 : f32
    %15 = vector.broadcast %cst_4 : f32 to vector<16x1xf32>
    %16 = arith.addf %12, %15 : vector<16x1xf32>
    %17 = math.rsqrt %16 : vector<16x1xf32>
    %18 = vector.broadcast %17 : vector<16x1xf32> to vector<16x32xf32>
    %19 = arith.mulf %14, %18 : vector<16x32xf32>
    %c0_5 = arith.constant 0 : index
    %c0_6 = arith.constant 0 : index
    %20 = vector.load %arg2[%c0_5, %c0_6] : memref<1x32xf32, #tpu.memory_space<vmem>>, vector<1x32xf32>
    %21 = vector.broadcast %20 : vector<1x32xf32> to vector<16x32xf32>
    %22 = arith.mulf %19, %21 : vector<16x32xf32>
    %c0_7 = arith.constant 0 : index
    %c0_8 = arith.constant 0 : index
    %23 = vector.load %arg3[%c0_7, %c0_8] : memref<1x32xf32, #tpu.memory_space<vmem>>, vector<1x32xf32>
    %24 = vector.broadcast %23 : vector<1x32xf32> to vector<16x32xf32>
    %25 = arith.addf %22, %24 : vector<16x32xf32>
    %26 = arith.truncf %25 : vector<16x32xf32> to vector<16x32xbf16>
    %c0_9 = arith.constant 0 : index
    %c0_10 = arith.constant 0 : index
    %27 = vector.load %arg4[%c0_9, %c0_10] : memref<16x32xbf16, #tpu.memory_space<vmem>>, vector<16x32xbf16>
    tpu.vector_store %arg4[%c0_9, %c0_10], %26 {strides = array<i32>} : memref<16x32xbf16, #tpu.memory_space<vmem>>, vector<16x32xbf16>,
    return
  }
  func.func @transform_0(%arg0: i32) -> (i32, i32) {
    %c0_i32 = arith.constant 0 : i32
    %c0_i32_0 = arith.constant 0 : i32
    return %arg0, %c0_i32 : i32, i32
  }
  func.func @transform_1(%arg0: i32) -> (i32, i32) {
    %c0_i32 = arith.constant 0 : i32
    %c0_i32_0 = arith.constant 0 : i32
    %c0_i32_1 = arith.constant 0 : i32
    return %c0_i32, %c0_i32_0 : i32, i32
  }
  func.func @transform_2(%arg0: i32) -> (i32, i32) {
    %c0_i32 = arith.constant 0 : i32
    %c0_i32_0 = arith.constant 0 : i32
    %c0_i32_1 = arith.constant 0 : i32
    return %c0_i32, %c0_i32_0 : i32, i32
  }
  func.func @transform_3(%arg0: i32) -> (i32, i32) {
    %c0_i32 = arith.constant 0 : i32
    %c0_i32_0 = arith.constant 0 : i32
    return %arg0, %c0_i32 : i32, i32
  }
}

module attributes {stable_mosaic.version = 11 : i64} {
  func.func @_ln_kernel(%arg0: i32, %arg1: memref<16x32xbf16, #tpu.memory_space<vmem>>, %arg2: memref<16x32xbf16, #tpu.memory_space<vmem>>, %arg3: memref<1x32xf32, #tpu.memory_space<vmem>>, %arg4: memref<1x32xf32, #tpu.memory_space<vmem>>, %arg5: memref<16x32xbf16, #tpu.memory_space<vmem>>) attributes {dimension_semantics = [#tpu.dimension_semantics<parallel>], iteration_bounds = array<i64: 1>, scalar_prefetch = 0 : i64, scratch_operands = 0 : i64, tpu.core_type = #tpu.core_type<tc>, window_params = [{transform_indices = @transform_0, window_bounds = array<i64: 16, 32>}, {transform_indices = @transform_1, window_bounds = array<i64: 16, 32>}, {pipeline_mode = #tpu.pipeline_mode<synchronous>, transform_indices = @transform_2, window_bounds = array<i64: 1, 32>}, {pipeline_mode = #tpu.pipeline_mode<synchronous>, transform_indices = @transform_3, window_bounds = array<i64: 1, 32>}, {transform_indices = @transform_4, window_bounds = array<i64: 16, 32>}]} {
    %c0 = arith.constant 0 : index
    %c0_0 = arith.constant 0 : index
    %0 = vector.load %arg1[%c0, %c0_0] : memref<16x32xbf16, #tpu.memory_space<vmem>>, vector<16x32xbf16>
    %1 = arith.extf %0 : vector<16x32xbf16> to vector<16x32xf32>
    %c0_1 = arith.constant 0 : index
    %c0_2 = arith.constant 0 : index
    %2 = vector.load %arg2[%c0_1, %c0_2] : memref<16x32xbf16, #tpu.memory_space<vmem>>, vector<16x32xbf16>
    %3 = arith.extf %2 : vector<16x32xbf16> to vector<16x32xf32>
    %4 = arith.addf %1, %3 : vector<16x32xf32>
    %cst = arith.constant dense<0.000000e+00> : vector<16xf32>
    %5 = vector.multi_reduction <add>, %4, %cst [1] : vector<16x32xf32> to vector<16xf32>
    %6 = vector.shape_cast %5 : vector<16xf32> to vector<16x1xf32>
    %cst_3 = arith.constant 3.200000e+01 : f32
    %7 = vector.broadcast %cst_3 : f32 to vector<16x1xf32>
    %8 = arith.divf %6, %7 : vector<16x1xf32>
    %9 = vector.broadcast %8 : vector<16x1xf32> to vector<16x32xf32>
    %10 = arith.subf %4, %9 : vector<16x32xf32>
    %11 = arith.mulf %10, %10 : vector<16x32xf32>
    %cst_4 = arith.constant dense<0.000000e+00> : vector<16xf32>
    %12 = vector.multi_reduction <add>, %11, %cst_4 [1] : vector<16x32xf32> to vector<16xf32>
    %13 = vector.shape_cast %12 : vector<16xf32> to vector<16x1xf32>
    %cst_5 = arith.constant 3.200000e+01 : f32
    %14 = vector.broadcast %cst_5 : f32 to vector<16x1xf32>
    %15 = arith.divf %13, %14 : vector<16x1xf32>
    %16 = vector.broadcast %8 : vector<16x1xf32> to vector<16x32xf32>
    %17 = arith.subf %4, %16 : vector<16x32xf32>
    %cst_6 = arith.constant 9.99999974E-6 : f32
    %18 = vector.broadcast %cst_6 : f32 to vector<16x1xf32>
    %19 = arith.addf %15, %18 : vector<16x1xf32>
    %20 = math.rsqrt %19 : vector<16x1xf32>
    %21 = vector.broadcast %20 : vector<16x1xf32> to vector<16x32xf32>
    %22 = arith.mulf %17, %21 : vector<16x32xf32>
    %c0_7 = arith.constant 0 : index
    %c0_8 = arith.constant 0 : index
    %23 = vector.load %arg3[%c0_7, %c0_8] : memref<1x32xf32, #tpu.memory_space<vmem>>, vector<1x32xf32>
    %24 = vector.broadcast %23 : vector<1x32xf32> to vector<16x32xf32>
    %25 = arith.mulf %22, %24 : vector<16x32xf32>
    %c0_9 = arith.constant 0 : index
    %c0_10 = arith.constant 0 : index
    %26 = vector.load %arg4[%c0_9, %c0_10] : memref<1x32xf32, #tpu.memory_space<vmem>>, vector<1x32xf32>
    %27 = vector.broadcast %26 : vector<1x32xf32> to vector<16x32xf32>
    %28 = arith.addf %25, %27 : vector<16x32xf32>
    %29 = arith.truncf %28 : vector<16x32xf32> to vector<16x32xbf16>
    %c0_11 = arith.constant 0 : index
    %c0_12 = arith.constant 0 : index
    %30 = vector.load %arg5[%c0_11, %c0_12] : memref<16x32xbf16, #tpu.memory_space<vmem>>, vector<16x32xbf16>
    tpu.vector_store %arg5[%c0_11, %c0_12], %29 {strides = array<i32>} : memref<16x32xbf16, #tpu.memory_space<vmem>>, vector<16x32xbf16>,
    return
  }
  func.func @transform_0(%arg0: i32) -> (i32, i32) {
    %c0_i32 = arith.constant 0 : i32
    %c0_i32_0 = arith.constant 0 : i32
    return %arg0, %c0_i32 : i32, i32
  }
  func.func @transform_1(%arg0: i32) -> (i32, i32) {
    %c0_i32 = arith.constant 0 : i32
    %c0_i32_0 = arith.constant 0 : i32
    return %arg0, %c0_i32 : i32, i32
  }
  func.func @transform_2(%arg0: i32) -> (i32, i32) {
    %c0_i32 = arith.constant 0 : i32
    %c0_i32_0 = arith.constant 0 : i32
    %c0_i32_1 = arith.constant 0 : i32
    return %c0_i32, %c0_i32_0 : i32, i32
  }
  func.func @transform_3(%arg0: i32) -> (i32, i32) {
    %c0_i32 = arith.constant 0 : i32
    %c0_i32_0 = arith.constant 0 : i32
    %c0_i32_1 = arith.constant 0 : i32
    return %c0_i32, %c0_i32_0 : i32, i32
  }
  func.func @transform_4(%arg0: i32) -> (i32, i32) {
    %c0_i32 = arith.constant 0 : i32
    %c0_i32_0 = arith.constant 0 : i32
    return %arg0, %c0_i32 : i32, i32
  }
}

module attributes {stable_mosaic.version = 11 : i64} {
  func.func @_attn_kernel(%arg0: i32, %arg1: memref<1x8x32xbf16, #tpu.memory_space<vmem>>, %arg2: memref<1x8x64xbf16, #tpu.memory_space<vmem>>, %arg3: memref<1x8x32xbf16, #tpu.memory_space<vmem>>) attributes {dimension_semantics = [#tpu.dimension_semantics<parallel>], iteration_bounds = array<i64: 2>, scalar_prefetch = 0 : i64, scratch_operands = 0 : i64, tpu.core_type = #tpu.core_type<tc>, window_params = [{transform_indices = @transform_0, window_bounds = array<i64: 1, 8, 32>}, {transform_indices = @transform_1, window_bounds = array<i64: 1, 8, 64>}, {transform_indices = @transform_2, window_bounds = array<i64: 1, 8, 32>}]} {
    %c0 = arith.constant 0 : index
    %c0_0 = arith.constant 0 : index
    %c0_1 = arith.constant 0 : index
    %0 = vector.load %arg1[%c0, %c0_0, %c0_1] : memref<1x8x32xbf16, #tpu.memory_space<vmem>>, vector<1x8x32xbf16>
    %1 = vector.shape_cast %0 : vector<1x8x32xbf16> to vector<8x32xbf16>
    %c0_2 = arith.constant 0 : index
    %c0_3 = arith.constant 0 : index
    %c0_4 = arith.constant 0 : index
    %2 = vector.load %arg2[%c0_2, %c0_3, %c0_4] : memref<1x8x64xbf16, #tpu.memory_space<vmem>>, vector<1x8x64xbf16>
    %3 = vector.shape_cast %2 : vector<1x8x64xbf16> to vector<8x64xbf16>
    %4 = vector.extract_strided_slice %3 {offsets = [0, 0], sizes = [8, 32], strides = [1, 1]} : vector<8x64xbf16> to vector<8x32xbf16>
    %5 = vector.extract_strided_slice %3 {offsets = [0, 32], sizes = [8, 32], strides = [1, 1]} : vector<8x64xbf16> to vector<8x32xbf16>
    %cst = arith.constant 3.535160e-01 : bf16
    %6 = vector.broadcast %cst : bf16 to vector<8x32xbf16>
    %7 = arith.mulf %1, %6 : vector<8x32xbf16>
    %8 = vector.extract_strided_slice %7 {offsets = [0, 0], sizes = [8, 8], strides = [1, 1]} : vector<8x32xbf16> to vector<8x8xbf16>
    %9 = vector.extract_strided_slice %4 {offsets = [0, 0], sizes = [8, 8], strides = [1, 1]} : vector<8x32xbf16> to vector<8x8xbf16>
    %10 = vector.extract_strided_slice %5 {offsets = [0, 0], sizes = [8, 8], strides = [1, 1]} : vector<8x32xbf16> to vector<8x8xbf16>
    %cst_5 = arith.constant dense<0.000000e+00> : vector<8x8xf32>
    %11 = tpu.matmul %8, %9, %cst_5 {dimension_numbers = #tpu.dot_dimension_numbers<[1], [1], [0], [0], [0, 0, 1, 0], [], []>} : vector<8x8xbf16>, vector<8x8xbf16>, vector<8x8xf32> -> vector<8x8xf32>
    %cst_6 = arith.constant dense<0xFF800000> : vector<8xf32>
    %12 = vector.multi_reduction <maximumf>, %11, %cst_6 [1] : vector<8x8xf32> to vector<8xf32>
    %13 = vector.shape_cast %12 : vector<8xf32> to vector<8x1xf32>
    %14 = vector.broadcast %13 : vector<8x1xf32> to vector<8x8xf32>
    %15 = arith.subf %11, %14 : vector<8x8xf32>
    %16 = math.exp %15 : vector<8x8xf32>
    %cst_7 = arith.constant dense<0.000000e+00> : vector<8xf32>
    %17 = vector.multi_reduction <add>, %16, %cst_7 [1] : vector<8x8xf32> to vector<8xf32>
    %18 = vector.shape_cast %17 : vector<8xf32> to vector<8x1xf32>
    %19 = vector.broadcast %18 : vector<8x1xf32> to vector<8x8xf32>
    %20 = arith.divf %16, %19 : vector<8x8xf32>
    %21 = arith.truncf %20 : vector<8x8xf32> to vector<8x8xbf16>
    %cst_8 = arith.constant dense<0.000000e+00> : vector<8x8xf32>
    %22 = tpu.matmul %21, %10, %cst_8 {dimension_numbers = #tpu.dot_dimension_numbers<[1], [0], [0], [1], [0, 0, 1, 1], [], []>} : vector<8x8xbf16>, vector<8x8xbf16>, vector<8x8xf32> -> vector<8x8xf32>
    %23 = vector.extract_strided_slice %7 {offsets = [0, 8], sizes = [8, 8], strides = [1, 1]} : vector<8x32xbf16> to vector<8x8xbf16>
    %24 = vector.extract_strided_slice %4 {offsets = [0, 8], sizes = [8, 8], strides = [1, 1]} : vector<8x32xbf16> to vector<8x8xbf16>
    %25 = vector.extract_strided_slice %5 {offsets = [0, 8], sizes = [8, 8], strides = [1, 1]} : vector<8x32xbf16> to vector<8x8xbf16>
    %cst_9 = arith.constant dense<0.000000e+00> : vector<8x8xf32>
    %26 = tpu.matmul %23, %24, %cst_9 {dimension_numbers = #tpu.dot_dimension_numbers<[1], [1], [0], [0], [0, 0, 1, 0], [], []>} : vector<8x8xbf16>, vector<8x8xbf16>, vector<8x8xf32> -> vector<8x8xf32>
    %cst_10 = arith.constant dense<0xFF800000> : vector<8xf32>
    %27 = vector.multi_reduction <maximumf>, %26, %cst_10 [1] : vector<8x8xf32> to vector<8xf32>
    %28 = vector.shape_cast %27 : vector<8xf32> to vector<8x1xf32>
    %29 = vector.broadcast %28 : vector<8x1xf32> to vector<8x8xf32>
    %30 = arith.subf %26, %29 : vector<8x8xf32>
    %31 = math.exp %30 : vector<8x8xf32>
    %cst_11 = arith.constant dense<0.000000e+00> : vector<8xf32>
    %32 = vector.multi_reduction <add>, %31, %cst_11 [1] : vector<8x8xf32> to vector<8xf32>
    %33 = vector.shape_cast %32 : vector<8xf32> to vector<8x1xf32>
    %34 = vector.broadcast %33 : vector<8x1xf32> to vector<8x8xf32>
    %35 = arith.divf %31, %34 : vector<8x8xf32>
    %36 = arith.truncf %35 : vector<8x8xf32> to vector<8x8xbf16>
    %cst_12 = arith.constant dense<0.000000e+00> : vector<8x8xf32>
    %37 = tpu.matmul %36, %25, %cst_12 {dimension_numbers = #tpu.dot_dimension_numbers<[1], [0], [0], [1], [0, 0, 1, 1], [], []>} : vector<8x8xbf16>, vector<8x8xbf16>, vector<8x8xf32> -> vector<8x8xf32>
    %38 = vector.extract_strided_slice %7 {offsets = [0, 16], sizes = [8, 8], strides = [1, 1]} : vector<8x32xbf16> to vector<8x8xbf16>
    %39 = vector.extract_strided_slice %4 {offsets = [0, 16], sizes = [8, 8], strides = [1, 1]} : vector<8x32xbf16> to vector<8x8xbf16>
    %40 = vector.extract_strided_slice %5 {offsets = [0, 16], sizes = [8, 8], strides = [1, 1]} : vector<8x32xbf16> to vector<8x8xbf16>
    %cst_13 = arith.constant dense<0.000000e+00> : vector<8x8xf32>
    %41 = tpu.matmul %38, %39, %cst_13 {dimension_numbers = #tpu.dot_dimension_numbers<[1], [1], [0], [0], [0, 0, 1, 0], [], []>} : vector<8x8xbf16>, vector<8x8xbf16>, vector<8x8xf32> -> vector<8x8xf32>
    %cst_14 = arith.constant dense<0xFF800000> : vector<8xf32>
    %42 = vector.multi_reduction <maximumf>, %41, %cst_14 [1] : vector<8x8xf32> to vector<8xf32>
    %43 = vector.shape_cast %42 : vector<8xf32> to vector<8x1xf32>
    %44 = vector.broadcast %43 : vector<8x1xf32> to vector<8x8xf32>
    %45 = arith.subf %41, %44 : vector<8x8xf32>
    %46 = math.exp %45 : vector<8x8xf32>
    %cst_15 = arith.constant dense<0.000000e+00> : vector<8xf32>
    %47 = vector.multi_reduction <add>, %46, %cst_15 [1] : vector<8x8xf32> to vector<8xf32>
    %48 = vector.shape_cast %47 : vector<8xf32> to vector<8x1xf32>
    %49 = vector.broadcast %48 : vector<8x1xf32> to vector<8x8xf32>
    %50 = arith.divf %46, %49 : vector<8x8xf32>
    %51 = arith.truncf %50 : vector<8x8xf32> to vector<8x8xbf16>
    %cst_16 = arith.constant dense<0.000000e+00> : vector<8x8xf32>
    %52 = tpu.matmul %51, %40, %cst_16 {dimension_numbers = #tpu.dot_dimension_numbers<[1], [0], [0], [1], [0, 0, 1, 1], [], []>} : vector<8x8xbf16>, vector<8x8xbf16>, vector<8x8xf32> -> vector<8x8xf32>
    %53 = vector.extract_strided_slice %7 {offsets = [0, 24], sizes = [8, 8], strides = [1, 1]} : vector<8x32xbf16> to vector<8x8xbf16>
    %54 = vector.extract_strided_slice %4 {offsets = [0, 24], sizes = [8, 8], strides = [1, 1]} : vector<8x32xbf16> to vector<8x8xbf16>
    %55 = vector.extract_strided_slice %5 {offsets = [0, 24], sizes = [8, 8], strides = [1, 1]} : vector<8x32xbf16> to vector<8x8xbf16>
    %cst_17 = arith.constant dense<0.000000e+00> : vector<8x8xf32>
    %56 = tpu.matmul %53, %54, %cst_17 {dimension_numbers = #tpu.dot_dimension_numbers<[1], [1], [0], [0], [0, 0, 1, 0], [], []>} : vector<8x8xbf16>, vector<8x8xbf16>, vector<8x8xf32> -> vector<8x8xf32>
    %cst_18 = arith.constant dense<0xFF800000> : vector<8xf32>
    %57 = vector.multi_reduction <maximumf>, %56, %cst_18 [1] : vector<8x8xf32> to vector<8xf32>
    %58 = vector.shape_cast %57 : vector<8xf32> to vector<8x1xf32>
    %59 = vector.broadcast %58 : vector<8x1xf32> to vector<8x8xf32>
    %60 = arith.subf %56, %59 : vector<8x8xf32>
    %61 = math.exp %60 : vector<8x8xf32>
    %cst_19 = arith.constant dense<0.000000e+00> : vector<8xf32>
    %62 = vector.multi_reduction <add>, %61, %cst_19 [1] : vector<8x8xf32> to vector<8xf32>
    %63 = vector.shape_cast %62 : vector<8xf32> to vector<8x1xf32>
    %64 = vector.broadcast %63 : vector<8x1xf32> to vector<8x8xf32>
    %65 = arith.divf %61, %64 : vector<8x8xf32>
    %66 = arith.truncf %65 : vector<8x8xf32> to vector<8x8xbf16>
    %cst_20 = arith.constant dense<0.000000e+00> : vector<8x8xf32>
    %67 = tpu.matmul %66, %55, %cst_20 {dimension_numbers = #tpu.dot_dimension_numbers<[1], [0], [0], [1], [0, 0, 1, 1], [], []>} : vector<8x8xbf16>, vector<8x8xbf16>, vector<8x8xf32> -> vector<8x8xf32>
    %68 = tpu.concatenate %22, %37, %52, %67 in 1 : vector<8x8xf32>, vector<8x8xf32>, vector<8x8xf32>, vector<8x8xf32> -> vector<8x32xf32>
    %69 = arith.truncf %68 : vector<8x32xf32> to vector<8x32xbf16>
    %c0_21 = arith.constant 0 : index
    %c0_22 = arith.constant 0 : index
    %c0_23 = arith.constant 0 : index
    %70 = vector.load %arg3[%c0_21, %c0_22, %c0_23] : memref<1x8x32xbf16, #tpu.memory_space<vmem>>, vector<1x8x32xbf16>
    %71 = vector.shape_cast %70 : vector<1x8x32xbf16> to vector<8x32xbf16>
    %72 = vector.shape_cast %69 : vector<8x32xbf16> to vector<1x8x32xbf16>
    tpu.vector_store %arg3[%c0_21, %c0_22, %c0_23], %72 {strides = array<i32>} : memref<1x8x32xbf16, #tpu.memory_space<vmem>>, vector<1x8x32xbf16>,
    return
  }
  func.func @transform_0(%arg0: i32) -> (i32, i32, i32) {
    %c0_i32 = arith.constant 0 : i32
    %c0_i32_0 = arith.constant 0 : i32
    %c0_i32_1 = arith.constant 0 : i32
    return %arg0, %c0_i32, %c0_i32_0 : i32, i32, i32
  }
  func.func @transform_1(%arg0: i32) -> (i32, i32, i32) {
    %c0_i32 = arith.constant 0 : i32
    %c0_i32_0 = arith.constant 0 : i32
    %c0_i32_1 = arith.constant 0 : i32
    return %arg0, %c0_i32, %c0_i32_0 : i32, i32, i32
  }
  func.func @transform_2(%arg0: i32) -> (i32, i32, i32) {
    %c0_i32 = arith.constant 0 : i32
    %c0_i32_0 = arith.constant 0 : i32
    %c0_i32_1 = arith.constant 0 : i32
    return %arg0, %c0_i32, %c0_i32_0 : i32, i32, i32
  }
}

module attributes {stable_mosaic.version = 11 : i64} {
  func.func @_matmul_kernel(%arg0: i32, %arg1: i32, %arg2: i32, %arg3: memref<16x32xbf16, #tpu.memory_space<vmem>>, %arg4: memref<32x32xbf16, #tpu.memory_space<vmem>>, %arg5: memref<1x32xf32, #tpu.memory_space<vmem>>, %arg6: memref<16x32xbf16, #tpu.memory_space<vmem>>, %arg7: memref<16x32xf32, #tpu.memory_space<vmem>>) attributes {dimension_semantics = [#tpu.dimension_semantics<parallel>, #tpu.dimension_semantics<parallel>, #tpu.dimension_semantics<arbitrary>], iteration_bounds = array<i64: 1, 1, 1>, scalar_prefetch = 0 : i64, scratch_operands = 1 : i64, tpu.core_type = #tpu.core_type<tc>, window_params = [{transform_indices = @transform_0, window_bounds = array<i64: 16, 32>}, {transform_indices = @transform_1, window_bounds = array<i64: 32, 32>}, {transform_indices = @transform_2, window_bounds = array<i64: 1, 32>}, {transform_indices = @transform_3, window_bounds = array<i64: 16, 32>}]} {
    %c0_i32 = arith.constant 0 : i32
    %0 = arith.cmpi eq, %arg2, %c0_i32 : i32
    %1 = arith.extui %0 : i1 to i32
    %c0_i32_0 = arith.constant 0 : i32
    %2 = arith.cmpi ne, %1, %c0_i32_0 : i32
    scf.if %2 {
      %cst_10 = arith.constant 0.000000e+00 : f32
      %12 = vector.broadcast %cst_10 : f32 to vector<16x32xf32>
      %c0_11 = arith.constant 0 : index
      %c0_12 = arith.constant 0 : index
      %13 = vector.load %arg7[%c0_11, %c0_12] : memref<16x32xf32, #tpu.memory_space<vmem>>, vector<16x32xf32>
      tpu.vector_store %arg7[%c0_11, %c0_12], %12 {strides = array<i32>} : memref<16x32xf32, #tpu.memory_space<vmem>>, vector<16x32xf32>,
    } else {
    }
    %c0 = arith.constant 0 : index
    %c0_1 = arith.constant 0 : index
    %3 = vector.load %arg7[%c0, %c0_1] : memref<16x32xf32, #tpu.memory_space<vmem>>, vector<16x32xf32>
    %c0_2 = arith.constant 0 : index
    %c0_3 = arith.constant 0 : index
    %4 = vector.load %arg3[%c0_2, %c0_3] : memref<16x32xbf16, #tpu.memory_space<vmem>>, vector<16x32xbf16>
    %c0_4 = arith.constant 0 : index
    %c0_5 = arith.constant 0 : index
    %5 = vector.load %arg4[%c0_4, %c0_5] : memref<32x32xbf16, #tpu.memory_space<vmem>>, vector<32x32xbf16>
    %cst = arith.constant dense<0.000000e+00> : vector<16x32xf32>
    %6 = tpu.matmul %4, %5, %cst {dimension_numbers = #tpu.dot_dimension_numbers<[1], [0], [0], [1], [0, 0, 1, 1], [], []>} : vector<16x32xbf16>, vector<32x32xbf16>, vector<16x32xf32> -> vector<16x32xf32>
    %7 = arith.addf %3, %6 : vector<16x32xf32>
    %c0_6 = arith.constant 0 : index
    %c0_7 = arith.constant 0 : index
    %8 = vector.load %arg7[%c0_6, %c0_7] : memref<16x32xf32, #tpu.memory_space<vmem>>, vector<16x32xf32>
    tpu.vector_store %arg7[%c0_6, %c0_7], %7 {strides = array<i32>} : memref<16x32xf32, #tpu.memory_space<vmem>>, vector<16x32xf32>,
    %c0_i32_8 = arith.constant 0 : i32
    %9 = arith.cmpi eq, %arg2, %c0_i32_8 : i32
    %10 = arith.extui %9 : i1 to i32
    %c0_i32_9 = arith.constant 0 : i32
    %11 = arith.cmpi ne, %10, %c0_i32_9 : i32
    scf.if %11 {
      %c0_10 = arith.constant 0 : index
      %c0_11 = arith.constant 0 : index
      %12 = vector.load %arg7[%c0_10, %c0_11] : memref<16x32xf32, #tpu.memory_space<vmem>>, vector<16x32xf32>
      %c0_12 = arith.constant 0 : index
      %c0_13 = arith.constant 0 : index
      %13 = vector.load %arg5[%c0_12, %c0_13] : memref<1x32xf32, #tpu.memory_space<vmem>>, vector<1x32xf32>
      %14 = vector.broadcast %13 : vector<1x32xf32> to vector<16x32xf32>
      %15 = arith.addf %12, %14 : vector<16x32xf32>
      %16 = arith.truncf %15 : vector<16x32xf32> to vector<16x32xbf16>
      %c0_14 = arith.constant 0 : index
      %c0_15 = arith.constant 0 : index
      %17 = vector.load %arg6[%c0_14, %c0_15] : memref<16x32xbf16, #tpu.memory_space<vmem>>, vector<16x32xbf16>
      tpu.vector_store %arg6[%c0_14, %c0_15], %16 {strides = array<i32>} : memref<16x32xbf16, #tpu.memory_space<vmem>>, vector<16x32xbf16>,
    } else {
    }
    return
  }
  func.func @transform_0(%arg0: i32, %arg1: i32, %arg2: i32) -> (i32, i32) {
    %c0_i32 = arith.constant 0 : i32
    return %arg0, %arg2 : i32, i32
  }
  func.func @transform_1(%arg0: i32, %arg1: i32, %arg2: i32) -> (i32, i32) {
    %c0_i32 = arith.constant 0 : i32
    return %arg2, %arg1 : i32, i32
  }
  func.func @transform_2(%arg0: i32, %arg1: i32, %arg2: i32) -> (i32, i32) {
    %c0_i32 = arith.constant 0 : i32
    %c0_i32_0 = arith.constant 0 : i32
    return %c0_i32, %arg1 : i32, i32
  }
  func.func @transform_3(%arg0: i32, %arg1: i32, %arg2: i32) -> (i32, i32) {
    %c0_i32 = arith.constant 0 : i32
    return %arg0, %arg1 : i32, i32
  }
}

module attributes {stable_mosaic.version = 11 : i64} {
  func.func @_matmul_kernel(%arg0: i32, %arg1: i32, %arg2: i32, %arg3: memref<16x32xbf16, #tpu.memory_space<vmem>>, %arg4: memref<32x64xbf16, #tpu.memory_space<vmem>>, %arg5: memref<1x64xf32, #tpu.memory_space<vmem>>, %arg6: memref<16x64xbf16, #tpu.memory_space<vmem>>, %arg7: memref<16x64xf32, #tpu.memory_space<vmem>>) attributes {dimension_semantics = [#tpu.dimension_semantics<parallel>, #tpu.dimension_semantics<parallel>, #tpu.dimension_semantics<arbitrary>], iteration_bounds = array<i64: 1, 1, 1>, scalar_prefetch = 0 : i64, scratch_operands = 1 : i64, tpu.core_type = #tpu.core_type<tc>, window_params = [{transform_indices = @transform_0, window_bounds = array<i64: 16, 32>}, {transform_indices = @transform_1, window_bounds = array<i64: 32, 64>}, {transform_indices = @transform_2, window_bounds = array<i64: 1, 64>}, {transform_indices = @transform_3, window_bounds = array<i64: 16, 64>}]} {
    %c0_i32 = arith.constant 0 : i32
    %0 = arith.cmpi eq, %arg2, %c0_i32 : i32
    %1 = arith.extui %0 : i1 to i32
    %c0_i32_0 = arith.constant 0 : i32
    %2 = arith.cmpi ne, %1, %c0_i32_0 : i32
    scf.if %2 {
      %cst_10 = arith.constant 0.000000e+00 : f32
      %12 = vector.broadcast %cst_10 : f32 to vector<16x64xf32>
      %c0_11 = arith.constant 0 : index
      %c0_12 = arith.constant 0 : index
      %13 = vector.load %arg7[%c0_11, %c0_12] : memref<16x64xf32, #tpu.memory_space<vmem>>, vector<16x64xf32>
      tpu.vector_store %arg7[%c0_11, %c0_12], %12 {strides = array<i32>} : memref<16x64xf32, #tpu.memory_space<vmem>>, vector<16x64xf32>,
    } else {
    }
    %c0 = arith.constant 0 : index
    %c0_1 = arith.constant 0 : index
    %3 = vector.load %arg7[%c0, %c0_1] : memref<16x64xf32, #tpu.memory_space<vmem>>, vector<16x64xf32>
    %c0_2 = arith.constant 0 : index
    %c0_3 = arith.constant 0 : index
    %4 = vector.load %arg3[%c0_2, %c0_3] : memref<16x32xbf16, #tpu.memory_space<vmem>>, vector<16x32xbf16>
    %c0_4 = arith.constant 0 : index
    %c0_5 = arith.constant 0 : index
    %5 = vector.load %arg4[%c0_4, %c0_5] : memref<32x64xbf16, #tpu.memory_space<vmem>>, vector<32x64xbf16>
    %cst = arith.constant dense<0.000000e+00> : vector<16x64xf32>
    %6 = tpu.matmul %4, %5, %cst {dimension_numbers = #tpu.dot_dimension_numbers<[1], [0], [0], [1], [0, 0, 1, 1], [], []>} : vector<16x32xbf16>, vector<32x64xbf16>, vector<16x64xf32> -> vector<16x64xf32>
    %7 = arith.addf %3, %6 : vector<16x64xf32>
    %c0_6 = arith.constant 0 : index
    %c0_7 = arith.constant 0 : index
    %8 = vector.load %arg7[%c0_6, %c0_7] : memref<16x64xf32, #tpu.memory_space<vmem>>, vector<16x64xf32>
    tpu.vector_store %arg7[%c0_6, %c0_7], %7 {strides = array<i32>} : memref<16x64xf32, #tpu.memory_space<vmem>>, vector<16x64xf32>,
    %c0_i32_8 = arith.constant 0 : i32
    %9 = arith.cmpi eq, %arg2, %c0_i32_8 : i32
    %10 = arith.extui %9 : i1 to i32
    %c0_i32_9 = arith.constant 0 : i32
    %11 = arith.cmpi ne, %10, %c0_i32_9 : i32
    scf.if %11 {
      %c0_10 = arith.constant 0 : index
      %c0_11 = arith.constant 0 : index
      %12 = vector.load %arg7[%c0_10, %c0_11] : memref<16x64xf32, #tpu.memory_space<vmem>>, vector<16x64xf32>
      %c0_12 = arith.constant 0 : index
      %c0_13 = arith.constant 0 : index
      %13 = vector.load %arg5[%c0_12, %c0_13] : memref<1x64xf32, #tpu.memory_space<vmem>>, vector<1x64xf32>
      %14 = vector.broadcast %13 : vector<1x64xf32> to vector<16x64xf32>
      %15 = arith.addf %12, %14 : vector<16x64xf32>
      %cst_14 = arith.constant 0.000000e+00 : f32
      %16 = vector.broadcast %cst_14 : f32 to vector<16x64xf32>
      %17 = arith.maximumf %15, %16 : vector<16x64xf32>
      %18 = arith.truncf %17 : vector<16x64xf32> to vector<16x64xbf16>
      %c0_15 = arith.constant 0 : index
      %c0_16 = arith.constant 0 : index
      %19 = vector.load %arg6[%c0_15, %c0_16] : memref<16x64xbf16, #tpu.memory_space<vmem>>, vector<16x64xbf16>
      tpu.vector_store %arg6[%c0_15, %c0_16], %18 {strides = array<i32>} : memref<16x64xbf16, #tpu.memory_space<vmem>>, vector<16x64xbf16>,
    } else {
    }
    return
  }
  func.func @transform_0(%arg0: i32, %arg1: i32, %arg2: i32) -> (i32, i32) {
    %c0_i32 = arith.constant 0 : i32
    return %arg0, %arg2 : i32, i32
  }
  func.func @transform_1(%arg0: i32, %arg1: i32, %arg2: i32) -> (i32, i32) {
    %c0_i32 = arith.constant 0 : i32
    return %arg2, %arg1 : i32, i32
  }
  func.func @transform_2(%arg0: i32, %arg1: i32, %arg2: i32) -> (i32, i32) {
    %c0_i32 = arith.constant 0 : i32
    %c0_i32_0 = arith.constant 0 : i32
    return %c0_i32, %arg1 : i32, i32
  }
  func.func @transform_3(%arg0: i32, %arg1: i32, %arg2: i32) -> (i32, i32) {
    %c0_i32 = arith.constant 0 : i32
    return %arg0, %arg1 : i32, i32
  }
}

module attributes {stable_mosaic.version = 11 : i64} {
  func.func @_matmul_kernel(%arg0: i32, %arg1: i32, %arg2: i32, %arg3: memref<16x64xbf16, #tpu.memory_space<vmem>>, %arg4: memref<64x32xbf16, #tpu.memory_space<vmem>>, %arg5: memref<1x32xf32, #tpu.memory_space<vmem>>, %arg6: memref<16x32xbf16, #tpu.memory_space<vmem>>, %arg7: memref<16x32xf32, #tpu.memory_space<vmem>>) attributes {dimension_semantics = [#tpu.dimension_semantics<parallel>, #tpu.dimension_semantics<parallel>, #tpu.dimension_semantics<arbitrary>], iteration_bounds = array<i64: 1, 1, 1>, scalar_prefetch = 0 : i64, scratch_operands = 1 : i64, tpu.core_type = #tpu.core_type<tc>, window_params = [{transform_indices = @transform_0, window_bounds = array<i64: 16, 64>}, {transform_indices = @transform_1, window_bounds = array<i64: 64, 32>}, {transform_indices = @transform_2, window_bounds = array<i64: 1, 32>}, {transform_indices = @transform_3, window_bounds = array<i64: 16, 32>}]} {
    %c0_i32 = arith.constant 0 : i32
    %0 = arith.cmpi eq, %arg2, %c0_i32 : i32
    %1 = arith.extui %0 : i1 to i32
    %c0_i32_0 = arith.constant 0 : i32
    %2 = arith.cmpi ne, %1, %c0_i32_0 : i32
    scf.if %2 {
      %cst_10 = arith.constant 0.000000e+00 : f32
      %12 = vector.broadcast %cst_10 : f32 to vector<16x32xf32>
      %c0_11 = arith.constant 0 : index
      %c0_12 = arith.constant 0 : index
      %13 = vector.load %arg7[%c0_11, %c0_12] : memref<16x32xf32, #tpu.memory_space<vmem>>, vector<16x32xf32>
      tpu.vector_store %arg7[%c0_11, %c0_12], %12 {strides = array<i32>} : memref<16x32xf32, #tpu.memory_space<vmem>>, vector<16x32xf32>,
    } else {
    }
    %c0 = arith.constant 0 : index
    %c0_1 = arith.constant 0 : index
    %3 = vector.load %arg7[%c0, %c0_1] : memref<16x32xf32, #tpu.memory_space<vmem>>, vector<16x32xf32>
    %c0_2 = arith.constant 0 : index
    %c0_3 = arith.constant 0 : index
    %4 = vector.load %arg3[%c0_2, %c0_3] : memref<16x64xbf16, #tpu.memory_space<vmem>>, vector<16x64xbf16>
    %c0_4 = arith.constant 0 : index
    %c0_5 = arith.constant 0 : index
    %5 = vector.load %arg4[%c0_4, %c0_5] : memref<64x32xbf16, #tpu.memory_space<vmem>>, vector<64x32xbf16>
    %cst = arith.constant dense<0.000000e+00> : vector<16x32xf32>
    %6 = tpu.matmul %4, %5, %cst {dimension_numbers = #tpu.dot_dimension_numbers<[1], [0], [0], [1], [0, 0, 1, 1], [], []>} : vector<16x64xbf16>, vector<64x32xbf16>, vector<16x32xf32> -> vector<16x32xf32>
    %7 = arith.addf %3, %6 : vector<16x32xf32>
    %c0_6 = arith.constant 0 : index
    %c0_7 = arith.constant 0 : index
    %8 = vector.load %arg7[%c0_6, %c0_7] : memref<16x32xf32, #tpu.memory_space<vmem>>, vector<16x32xf32>
    tpu.vector_store %arg7[%c0_6, %c0_7], %7 {strides = array<i32>} : memref<16x32xf32, #tpu.memory_space<vmem>>, vector<16x32xf32>,
    %c0_i32_8 = arith.constant 0 : i32
    %9 = arith.cmpi eq, %arg2, %c0_i32_8 : i32
    %10 = arith.extui %9 : i1 to i32
    %c0_i32_9 = arith.constant 0 : i32
    %11 = arith.cmpi ne, %10, %c0_i32_9 : i32
    scf.if %11 {
      %c0_10 = arith.constant 0 : index
      %c0_11 = arith.constant 0 : index
      %12 = vector.load %arg7[%c0_10, %c0_11] : memref<16x32xf32, #tpu.memory_space<vmem>>, vector<16x32xf32>
      %c0_12 = arith.constant 0 : index
      %c0_13 = arith.constant 0 : index
      %13 = vector.load %arg5[%c0_12, %c0_13] : memref<1x32xf32, #tpu.memory_space<vmem>>, vector<1x32xf32>
      %14 = vector.broadcast %13 : vector<1x32xf32> to vector<16x32xf32>
      %15 = arith.addf %12, %14 : vector<16x32xf32>
      %16 = arith.truncf %15 : vector<16x32xf32> to vector<16x32xbf16>
      %c0_14 = arith.constant 0 : index
      %c0_15 = arith.constant 0 : index
      %17 = vector.load %arg6[%c0_14, %c0_15] : memref<16x32xbf16, #tpu.memory_space<vmem>>, vector<16x32xbf16>
      tpu.vector_store %arg6[%c0_14, %c0_15], %16 {strides = array<i32>} : memref<16x32xbf16, #tpu.memory_space<vmem>>, vector<16x32xbf16>,
    } else {
    }
    return
  }
  func.func @transform_0(%arg0: i32, %arg1: i32, %arg2: i32) -> (i32, i32) {
    %c0_i32 = arith.constant 0 : i32
    return %arg0, %arg2 : i32, i32
  }
  func.func @transform_1(%arg0: i32, %arg1: i32, %arg2: i32) -> (i32, i32) {
    %c0_i32 = arith.constant 0 : i32
    return %arg2, %arg1 : i32, i32
  }
  func.func @transform_2(%arg0: i32, %arg1: i32, %arg2: i32) -> (i32, i32) {
    %c0_i32 = arith.constant 0 : i32
    %c0_i32_0 = arith.constant 0 : i32
    return %c0_i32, %arg1 : i32, i32
  }
  func.func @transform_3(%arg0: i32, %arg1: i32, %arg2: i32) -> (i32, i32) {
    %c0_i32 = arith.constant 0 : i32
    return %arg0, %arg1 : i32, i32
  }
}

module attributes {stable_mosaic.version = 11 : i64} {
  func.func @_matmul_kernel(%arg0: i32, %arg1: i32, %arg2: i32, %arg3: memref<16x32xbf16, #tpu.memory_space<vmem>>, %arg4: memref<32x96xbf16, #tpu.memory_space<vmem>>, %arg5: memref<1x96xf32, #tpu.memory_space<vmem>>, %arg6: memref<16x96xbf16, #tpu.memory_space<vmem>>, %arg7: memref<16x96xf32, #tpu.memory_space<vmem>>) attributes {dimension_semantics = [#tpu.dimension_semantics<parallel>, #tpu.dimension_semantics<parallel>, #tpu.dimension_semantics<arbitrary>], iteration_bounds = array<i64: 1, 1, 1>, scalar_prefetch = 0 : i64, scratch_operands = 1 : i64, tpu.core_type = #tpu.core_type<tc>, window_params = [{transform_indices = @transform_0, window_bounds = array<i64: 16, 32>}, {transform_indices = @transform_1, window_bounds = array<i64: 32, 96>}, {transform_indices = @transform_2, window_bounds = array<i64: 1, 96>}, {transform_indices = @transform_3, window_bounds = array<i64: 16, 96>}]} {
    %c0_i32 = arith.constant 0 : i32
    %0 = arith.cmpi eq, %arg2, %c0_i32 : i32
    %1 = arith.extui %0 : i1 to i32
    %c0_i32_0 = arith.constant 0 : i32
    %2 = arith.cmpi ne, %1, %c0_i32_0 : i32
    scf.if %2 {
      %cst_10 = arith.constant 0.000000e+00 : f32
      %12 = vector.broadcast %cst_10 : f32 to vector<16x96xf32>
      %c0_11 = arith.constant 0 : index
      %c0_12 = arith.constant 0 : index
      %13 = vector.load %arg7[%c0_11, %c0_12] : memref<16x96xf32, #tpu.memory_space<vmem>>, vector<16x96xf32>
      tpu.vector_store %arg7[%c0_11, %c0_12], %12 {strides = array<i32>} : memref<16x96xf32, #tpu.memory_space<vmem>>, vector<16x96xf32>,
    } else {
    }
    %c0 = arith.constant 0 : index
    %c0_1 = arith.constant 0 : index
    %3 = vector.load %arg7[%c0, %c0_1] : memref<16x96xf32, #tpu.memory_space<vmem>>, vector<16x96xf32>
    %c0_2 = arith.constant 0 : index
    %c0_3 = arith.constant 0 : index
    %4 = vector.load %arg3[%c0_2, %c0_3] : memref<16x32xbf16, #tpu.memory_space<vmem>>, vector<16x32xbf16>
    %c0_4 = arith.constant 0 : index
    %c0_5 = arith.constant 0 : index
    %5 = vector.load %arg4[%c0_4, %c0_5] : memref<32x96xbf16, #tpu.memory_space<vmem>>, vector<32x96xbf16>
    %cst = arith.constant dense<0.000000e+00> : vector<16x96xf32>
    %6 = tpu.matmul %4, %5, %cst {dimension_numbers = #tpu.dot_dimension_numbers<[1], [0], [0], [1], [0, 0, 1, 1], [], []>} : vector<16x32xbf16>, vector<32x96xbf16>, vector<16x96xf32> -> vector<16x96xf32>
    %7 = arith.addf %3, %6 : vector<16x96xf32>
    %c0_6 = arith.constant 0 : index
    %c0_7 = arith.constant 0 : index
    %8 = vector.load %arg7[%c0_6, %c0_7] : memref<16x96xf32, #tpu.memory_space<vmem>>, vector<16x96xf32>
    tpu.vector_store %arg7[%c0_6, %c0_7], %7 {strides = array<i32>} : memref<16x96xf32, #tpu.memory_space<vmem>>, vector<16x96xf32>,
    %c0_i32_8 = arith.constant 0 : i32
    %9 = arith.cmpi eq, %arg2, %c0_i32_8 : i32
    %10 = arith.extui %9 : i1 to i32
    %c0_i32_9 = arith.constant 0 : i32
    %11 = arith.cmpi ne, %10, %c0_i32_9 : i32
    scf.if %11 {
      %c0_10 = arith.constant 0 : index
      %c0_11 = arith.constant 0 : index
      %12 = vector.load %arg7[%c0_10, %c0_11] : memref<16x96xf32, #tpu.memory_space<vmem>>, vector<16x96xf32>
      %c0_12 = arith.constant 0 : index
      %c0_13 = arith.constant 0 : index
      %13 = vector.load %arg5[%c0_12, %c0_13] : memref<1x96xf32, #tpu.memory_space<vmem>>, vector<1x96xf32>
      %14 = vector.broadcast %13 : vector<1x96xf32> to vector<16x96xf32>
      %15 = arith.addf %12, %14 : vector<16x96xf32>
      %16 = arith.truncf %15 : vector<16x96xf32> to vector<16x96xbf16>
      %c0_14 = arith.constant 0 : index
      %c0_15 = arith.constant 0 : index
      %17 = vector.load %arg6[%c0_14, %c0_15] : memref<16x96xbf16, #tpu.memory_space<vmem>>, vector<16x96xbf16>
      tpu.vector_store %arg6[%c0_14, %c0_15], %16 {strides = array<i32>} : memref<16x96xbf16, #tpu.memory_space<vmem>>, vector<16x96xbf16>,
    } else {
    }
    return
  }
  func.func @transform_0(%arg0: i32, %arg1: i32, %arg2: i32) -> (i32, i32) {
    %c0_i32 = arith.constant 0 : i32
    return %arg0, %arg2 : i32, i32
  }
  func.func @transform_1(%arg0: i32, %arg1: i32, %arg2: i32) -> (i32, i32) {
    %c0_i32 = arith.constant 0 : i32
    return %arg2, %arg1 : i32, i32
  }
  func.func @transform_2(%arg0: i32, %arg1: i32, %arg2: i32) -> (i32, i32) {
    %c0_i32 = arith.constant 0 : i32
    %c0_i32_0 = arith.constant 0 : i32
    return %c0_i32, %arg1 : i32, i32
  }
  func.func @transform_3(%arg0: i32, %arg1: i32, %arg2: i32) -> (i32, i32) {
    %c0_i32 = arith.constant 0 : i32
    return %arg0, %arg1 : i32, i32
  }
}

module attributes {stable_mosaic.version = 11 : i64} {
  func.func @_matmul_kernel(%arg0: i32, %arg1: i32, %arg2: i32, %arg3: memref<16x32xbf16, #tpu.memory_space<vmem>>, %arg4: memref<32x64xbf16, #tpu.memory_space<vmem>>, %arg5: memref<1x64xf32, #tpu.memory_space<vmem>>, %arg6: memref<16x64xbf16, #tpu.memory_space<vmem>>, %arg7: memref<16x64xf32, #tpu.memory_space<vmem>>) attributes {dimension_semantics = [#tpu.dimension_semantics<parallel>, #tpu.dimension_semantics<parallel>, #tpu.dimension_semantics<arbitrary>], iteration_bounds = array<i64: 1, 1, 1>, scalar_prefetch = 0 : i64, scratch_operands = 1 : i64, tpu.core_type = #tpu.core_type<tc>, window_params = [{transform_indices = @transform_0, window_bounds = array<i64: 16, 32>}, {transform_indices = @transform_1, window_bounds = array<i64: 32, 64>}, {transform_indices = @transform_2, window_bounds = array<i64: 1, 64>}, {transform_indices = @transform_3, window_bounds = array<i64: 16, 64>}]} {
    %c0_i32 = arith.constant 0 : i32
    %0 = arith.cmpi eq, %arg2, %c0_i32 : i32
    %1 = arith.extui %0 : i1 to i32
    %c0_i32_0 = arith.constant 0 : i32
    %2 = arith.cmpi ne, %1, %c0_i32_0 : i32
    scf.if %2 {
      %cst_10 = arith.constant 0.000000e+00 : f32
      %12 = vector.broadcast %cst_10 : f32 to vector<16x64xf32>
      %c0_11 = arith.constant 0 : index
      %c0_12 = arith.constant 0 : index
      %13 = vector.load %arg7[%c0_11, %c0_12] : memref<16x64xf32, #tpu.memory_space<vmem>>, vector<16x64xf32>
      tpu.vector_store %arg7[%c0_11, %c0_12], %12 {strides = array<i32>} : memref<16x64xf32, #tpu.memory_space<vmem>>, vector<16x64xf32>,
    } else {
    }
    %c0 = arith.constant 0 : index
    %c0_1 = arith.constant 0 : index
    %3 = vector.load %arg7[%c0, %c0_1] : memref<16x64xf32, #tpu.memory_space<vmem>>, vector<16x64xf32>
    %c0_2 = arith.constant 0 : index
    %c0_3 = arith.constant 0 : index
    %4 = vector.load %arg3[%c0_2, %c0_3] : memref<16x32xbf16, #tpu.memory_space<vmem>>, vector<16x32xbf16>
    %c0_4 = arith.constant 0 : index
    %c0_5 = arith.constant 0 : index
    %5 = vector.load %arg4[%c0_4, %c0_5] : memref<32x64xbf16, #tpu.memory_space<vmem>>, vector<32x64xbf16>
    %cst = arith.constant dense<0.000000e+00> : vector<16x64xf32>
    %6 = tpu.matmul %4, %5, %cst {dimension_numbers = #tpu.dot_dimension_numbers<[1], [0], [0], [1], [0, 0, 1, 1], [], []>} : vector<16x32xbf16>, vector<32x64xbf16>, vector<16x64xf32> -> vector<16x64xf32>
    %7 = arith.addf %3, %6 : vector<16x64xf32>
    %c0_6 = arith.constant 0 : index
    %c0_7 = arith.constant 0 : index
    %8 = vector.load %arg7[%c0_6, %c0_7] : memref<16x64xf32, #tpu.memory_space<vmem>>, vector<16x64xf32>
    tpu.vector_store %arg7[%c0_6, %c0_7], %7 {strides = array<i32>} : memref<16x64xf32, #tpu.memory_space<vmem>>, vector<16x64xf32>,
    %c0_i32_8 = arith.constant 0 : i32
    %9 = arith.cmpi eq, %arg2, %c0_i32_8 : i32
    %10 = arith.extui %9 : i1 to i32
    %c0_i32_9 = arith.constant 0 : i32
    %11 = arith.cmpi ne, %10, %c0_i32_9 : i32
    scf.if %11 {
      %c0_10 = arith.constant 0 : index
      %c0_11 = arith.constant 0 : index
      %12 = vector.load %arg7[%c0_10, %c0_11] : memref<16x64xf32, #tpu.memory_space<vmem>>, vector<16x64xf32>
      %c0_12 = arith.constant 0 : index
      %c0_13 = arith.constant 0 : index
      %13 = vector.load %arg5[%c0_12, %c0_13] : memref<1x64xf32, #tpu.memory_space<vmem>>, vector<1x64xf32>
      %14 = vector.broadcast %13 : vector<1x64xf32> to vector<16x64xf32>
      %15 = arith.addf %12, %14 : vector<16x64xf32>
      %16 = arith.truncf %15 : vector<16x64xf32> to vector<16x64xbf16>
      %c0_14 = arith.constant 0 : index
      %c0_15 = arith.constant 0 : index
      %17 = vector.load %arg6[%c0_14, %c0_15] : memref<16x64xbf16, #tpu.memory_space<vmem>>, vector<16x64xbf16>
      tpu.vector_store %arg6[%c0_14, %c0_15], %16 {strides = array<i32>} : memref<16x64xbf16, #tpu.memory_space<vmem>>, vector<16x64xbf16>,
    } else {
    }
    return
  }
  func.func @transform_0(%arg0: i32, %arg1: i32, %arg2: i32) -> (i32, i32) {
    %c0_i32 = arith.constant 0 : i32
    return %arg0, %arg2 : i32, i32
  }
  func.func @transform_1(%arg0: i32, %arg1: i32, %arg2: i32) -> (i32, i32) {
    %c0_i32 = arith.constant 0 : i32
    return %arg2, %arg1 : i32, i32
  }
  func.func @transform_2(%arg0: i32, %arg1: i32, %arg2: i32) -> (i32, i32) {
    %c0_i32 = arith.constant 0 : i32
    %c0_i32_0 = arith.constant 0 : i32
    return %c0_i32, %arg1 : i32, i32
  }
  func.func @transform_3(%arg0: i32, %arg1: i32, %arg2: i32) -> (i32, i32) {
    %c0_i32 = arith.constant 0 : i32
    return %arg0, %arg1 : i32, i32
  }
}

module attributes {stable_mosaic.version = 11 : i64} {
  func.func @_matmul_kernel(%arg0: i32, %arg1: i32, %arg2: i32, %arg3: memref<16x32xbf16, #tpu.memory_space<vmem>>, %arg4: memref<32x128xbf16, #tpu.memory_space<vmem>>, %arg5: memref<1x128xf32, #tpu.memory_space<vmem>>, %arg6: memref<16x128xf32, #tpu.memory_space<vmem>>, %arg7: memref<16x128xf32, #tpu.memory_space<vmem>>) attributes {dimension_semantics = [#tpu.dimension_semantics<parallel>, #tpu.dimension_semantics<parallel>, #tpu.dimension_semantics<arbitrary>], iteration_bounds = array<i64: 1, 1, 1>, scalar_prefetch = 0 : i64, scratch_operands = 1 : i64, tpu.core_type = #tpu.core_type<tc>, window_params = [{transform_indices = @transform_0, window_bounds = array<i64: 16, 32>}, {transform_indices = @transform_1, window_bounds = array<i64: 32, 128>}, {transform_indices = @transform_2, window_bounds = array<i64: 1, 128>}, {transform_indices = @transform_3, window_bounds = array<i64: 16, 128>}]} {
    %c0_i32 = arith.constant 0 : i32
    %0 = arith.cmpi eq, %arg2, %c0_i32 : i32
    %1 = arith.extui %0 : i1 to i32
    %c0_i32_0 = arith.constant 0 : i32
    %2 = arith.cmpi ne, %1, %c0_i32_0 : i32
    scf.if %2 {
      %cst_10 = arith.constant 0.000000e+00 : f32
      %12 = vector.broadcast %cst_10 : f32 to vector<16x128xf32>
      %c0_11 = arith.constant 0 : index
      %c0_12 = arith.constant 0 : index
      %13 = vector.load %arg7[%c0_11, %c0_12] : memref<16x128xf32, #tpu.memory_space<vmem>>, vector<16x128xf32>
      tpu.vector_store %arg7[%c0_11, %c0_12], %12 {strides = array<i32>} : memref<16x128xf32, #tpu.memory_space<vmem>>, vector<16x128xf32>,
    } else {
    }
    %c0 = arith.constant 0 : index
    %c0_1 = arith.constant 0 : index
    %3 = vector.load %arg7[%c0, %c0_1] : memref<16x128xf32, #tpu.memory_space<vmem>>, vector<16x128xf32>
    %c0_2 = arith.constant 0 : index
    %c0_3 = arith.constant 0 : index
    %4 = vector.load %arg3[%c0_2, %c0_3] : memref<16x32xbf16, #tpu.memory_space<vmem>>, vector<16x32xbf16>
    %c0_4 = arith.constant 0 : index
    %c0_5 = arith.constant 0 : index
    %5 = vector.load %arg4[%c0_4, %c0_5] : memref<32x128xbf16, #tpu.memory_space<vmem>>, vector<32x128xbf16>
    %cst = arith.constant dense<0.000000e+00> : vector<16x128xf32>
    %6 = tpu.matmul %4, %5, %cst {dimension_numbers = #tpu.dot_dimension_numbers<[1], [0], [0], [1], [0, 0, 1, 1], [], []>} : vector<16x32xbf16>, vector<32x128xbf16>, vector<16x128xf32> -> vector<16x128xf32>
    %7 = arith.addf %3, %6 : vector<16x128xf32>
    %c0_6 = arith.constant 0 : index
    %c0_7 = arith.constant 0 : index
    %8 = vector.load %arg7[%c0_6, %c0_7] : memref<16x128xf32, #tpu.memory_space<vmem>>, vector<16x128xf32>
    tpu.vector_store %arg7[%c0_6, %c0_7], %7 {strides = array<i32>} : memref<16x128xf32, #tpu.memory_space<vmem>>, vector<16x128xf32>,
    %c0_i32_8 = arith.constant 0 : i32
    %9 = arith.cmpi eq, %arg2, %c0_i32_8 : i32
    %10 = arith.extui %9 : i1 to i32
    %c0_i32_9 = arith.constant 0 : i32
    %11 = arith.cmpi ne, %10, %c0_i32_9 : i32
    scf.if %11 {
      %c0_10 = arith.constant 0 : index
      %c0_11 = arith.constant 0 : index
      %12 = vector.load %arg7[%c0_10, %c0_11] : memref<16x128xf32, #tpu.memory_space<vmem>>, vector<16x128xf32>
      %c0_12 = arith.constant 0 : index
      %c0_13 = arith.constant 0 : index
      %13 = vector.load %arg5[%c0_12, %c0_13] : memref<1x128xf32, #tpu.memory_space<vmem>>, vector<1x128xf32>
      %14 = vector.broadcast %13 : vector<1x128xf32> to vector<16x128xf32>
      %15 = arith.addf %12, %14 : vector<16x128xf32>
      %c0_14 = arith.constant 0 : index
      %c0_15 = arith.constant 0 : index
      %16 = vector.load %arg6[%c0_14, %c0_15] : memref<16x128xf32, #tpu.memory_space<vmem>>, vector<16x128xf32>
      tpu.vector_store %arg6[%c0_14, %c0_15], %15 {strides = array<i32>} : memref<16x128xf32, #tpu.memory_space<vmem>>, vector<16x128xf32>,
    } else {
    }
    return
  }
  func.func @transform_0(%arg0: i32, %arg1: i32, %arg2: i32) -> (i32, i32) {
    %c0_i32 = arith.constant 0 : i32
    return %arg0, %arg2 : i32, i32
  }
  func.func @transform_1(%arg0: i32, %arg1: i32, %arg2: i32) -> (i32, i32) {
    %c0_i32 = arith.constant 0 : i32
    return %arg2, %arg1 : i32, i32
  }
  func.func @transform_2(%arg0: i32, %arg1: i32, %arg2: i32) -> (i32, i32) {
    %c0_i32 = arith.constant 0 : i32
    %c0_i32_0 = arith.constant 0 : i32
    return %c0_i32, %arg1 : i32, i32
  }
  func.func @transform_3(%arg0: i32, %arg1: i32, %arg2: i32) -> (i32, i32) {
    %c0_i32 = arith.constant 0 : i32
    return %arg0, %arg1 : i32, i32
  }
}

</mosaic_0001>

<llo_original>
// kernel: _lambda_.44
$region0: #{_lambda_.44}
  #allocation0 [shape = 'u32[]', space=smem, size = 0x4, offset = 0x4, fixed_abs, tag = 'smem constant byte address 0x4 - core index']
  #allocation1 [shape = 'u32[72,128]{1,0:T(1,128)}', space=vmem, size = 0x9000, scoped, tag = 'internal scratch']
  %s0 = inlined_call_operand.vmem [shape: bf16[16,32], index: 0, kind: input, shape index: {}]
  %s1 = inlined_call_operand.vmem [shape: bf16[16,32], index: 1, kind: input, shape index: {}]
  %s2 = inlined_call_operand.vmem [shape: f32[1,32], index: 2, kind: input, shape index: {}]
  %s3 = inlined_call_operand.vmem [shape: f32[1,32], index: 3, kind: input, shape index: {}]
  %s4 = inlined_call_operand.vmem [shape: bf16[16,32], index: 4, kind: output, shape index: {}]
  %s5 = sld [smem:[#allocation0]]
  $region26: #{_lambda_.44} parent=0
    _
  %s7 = ssub.s32 1, %s5
  %s8 = scalar_select 0, %s7, %s5
  // Predicated region
  $region2: #{_lambda_.44} parent=0 // pred_check
    _
  $region3: #{_lambda_.44} parent=0 // pred_check_branch
    %10 = sbr.rel (0) target = $region5
  $region4: #{_lambda_.44} parent=0 // pred_region
    _
  $region5: #{_lambda_.44} parent=0 // pred_fallthru
    _
  // Predicated region
  $region6: #{_lambda_.44} parent=0 // pred_check
    _
  $region7: #{_lambda_.44} parent=0 // pred_check_branch
    %12 = sbr.rel (0) target = $region9
  $region8: #{_lambda_.44} parent=0 // pred_region
    _
  $region9: #{_lambda_.44} parent=0 // pred_fallthru
    _
  // Predicated region
  $region10: #{_lambda_.44} parent=0 // pred_check
    _
  $region11: #{_lambda_.44} parent=0 // pred_check_branch
    %14 = sbr.rel (0) target = $region13
  $region12: #{_lambda_.44} parent=0 // pred_region
    _
  $region13: #{_lambda_.44} parent=0 // pred_fallthru
    _
  // Predicated region
  $region14: #{_lambda_.44} parent=0 // pred_check
    _
  $region15: #{_lambda_.44} parent=0 // pred_check_branch
    %16 = sbr.rel (0) target = $region17
  $region16: #{_lambda_.44} parent=0 // pred_region
    _
  $region17: #{_lambda_.44} parent=0 // pred_fallthru
    _
  %v17 = vld [vmem:[%s0] sm:$0xf]
  %v18 = vld [vmem:[%s0 + $0x4] sm:$0xf]
  %v19 = vunpack.c.l.bf16 %v17
  %v20 = vunpack.c.l.bf16 %v18
  %v21 = vld [vmem:[%s1] sm:$0xf]
  %v22 = vld [vmem:[%s1 + $0x4] sm:$0xf]
  %v23 = vunpack.c.l.bf16 %v21
  %v24 = vunpack.c.l.bf16 %v22
  %v25 = vadd.f32 %v19, %v23
  %v26 = vadd.f32 %v20, %v24
  %vm27 = vcmask 261120
  %v28 = vsel %vm27, %v25, 0.0
  %29 = vadd.xlane.f32.xlu0 %v28
  %v30 = vpop.xlane.xlu0 %29
  %v31 = vsel %vm27, %v26, 0.0
  %32 = vadd.xlane.f32.xlu0 %v31
  %v33 = vpop.xlane.xlu0 %32
  %v34 = vrcp.pop 32.0
  %v35 = vmul.f32 32.0, %v34
  %v36 = vsub.f32 1.0, %v35
  %v37 = vmul.f32 %v34, %v36
  %v38 = vadd.f32 %v34, %v37
  %vm39 = vweird.f32 %v34
  %v40 = vsel %vm39, %v34, %v38
  %v41 = vmul.f32 %v30, %v40
  %v42 = vmul.f32 %v33, %v40
  %v43 = vsub.f32 %v25, %v41
  %v44 = vsub.f32 %v26, %v42
  %v45 = vmul.f32 %v43, %v43
  %v46 = vmul.f32 %v44, %v44
  %v47 = vsel %vm27, %v45, 0.0
  %48 = vadd.xlane.f32.xlu0 %v47
  %v49 = vpop.xlane.xlu0 %48
  %v50 = vsel %vm27, %v46, 0.0
  %51 = vadd.xlane.f32.xlu0 %v50
  %v52 = vpop.xlane.xlu0 %51
  %v53 = vmul.f32 %v49, %v40
  %v54 = vmul.f32 %v52, %v40
  %v55 = vadd.f32 %v53, 1e-05
  %v56 = vadd.f32 %v54, 1e-05
  %v57 = vrsqrt.pop %v55
  %v58 = vmul.f32 %v57, %v55
  %v59 = vmul.f32 %v58, %v57
  %v60 = vmul.f32 0.5, %v59
  %v61 = vsub.f32 1.5, %v60
  %v62 = vmul.f32 %v57, %v61
  %vm63 = vweird.f32 %v55
  %vm64 = vweird.f32 %v57
  %vm65 = vmor %vm63, %vm64
  %v66 = vsel %vm65, %v57, %v62
  %v67 = vrsqrt.pop %v56
  %v68 = vmul.f32 %v67, %v56
  %v69 = vmul.f32 %v68, %v67
  %v70 = vmul.f32 0.5, %v69
  %v71 = vsub.f32 1.5, %v70
  %v72 = vmul.f32 %v67, %v71
  %vm73 = vweird.f32 %v56
  %vm74 = vweird.f32 %v67
  %vm75 = vmor %vm73, %vm74
  %v76 = vsel %vm75, %v67, %v72
  %v77 = vmul.f32 %v43, %v66
  %v78 = vmul.f32 %v44, %v76
  %v79 = vld [vmem:[%s2] sm:$0x1]
  %v81 = vperm.slane %v79, 0
  %v83 = vmul.f32 %v77, %v81
  %v84 = vmul.f32 %v78, %v81
  %v85 = vld [vmem:[%s3] sm:$0x1]
  %v87 = vperm.slane %v85, 0
  %v89 = vadd.f32 %v83, %v87
  %v90 = vadd.f32 %v84, %v87
  %v91 = vpack.c.bf16 %v89, %v89
  %v92 = vpack.c.bf16 %v90, %v90
  %vm93 = vcmask 257024
  %94 = vst.msk [vmem:[%s4] sm:$0xf] %vm93, %v91
  %95 = vst.msk [vmem:[%s4 + $0x4] sm:$0xf] %vm93, %v92
  // Predicated region
  $region18: #{_lambda_.44} parent=0 // pred_check
    _
  $region19: #{_lambda_.44} parent=0 // pred_check_branch
    %97 = sbr.rel (0) target = $region21
  $region20: #{_lambda_.44} parent=0 // pred_region
    _
  $region21: #{_lambda_.44} parent=0 // pred_fallthru
    _
  // Predicated region
  $region22: #{_lambda_.44} parent=0 // pred_check
    _
  $region23: #{_lambda_.44} parent=0 // pred_check_branch
    %99 = sbr.rel (0) target = $region25
  $region24: #{_lambda_.44} parent=0 // pred_region
    _
  $region25: #{_lambda_.44} parent=0 // pred_fallthru
    _

// kernel: _lambda_.43
$region0: #{_lambda_.43}
  #allocation0 [shape = 'u32[]', space=smem, size = 0x4, offset = 0x4, fixed_abs, tag = 'smem constant byte address 0x4 - core index']
  #allocation1 [shape = 'u32[72,128]{1,0:T(1,128)}', space=vmem, size = 0x9000, scoped, tag = 'internal scratch']
  #allocation2 [shape = 'f32[16,32]{1,0:T(8,128)}', space=vmem, size = 0x2000, scoped, tag = 'scratch operand']
  %s0 = inlined_call_operand.vmem [shape: bf16[16,32], index: 0, kind: input, shape index: {}]
  %s1 = inlined_call_operand.vmem [shape: bf16[32,32], index: 1, kind: input, shape index: {}]
  %s2 = inlined_call_operand.vmem [shape: f32[1,32], index: 2, kind: input, shape index: {}]
  %s3 = inlined_call_operand.vmem [shape: bf16[16,32], index: 3, kind: output, shape index: {}]
  %s4 = sld [smem:[#allocation0]]
  $region30: #{_lambda_.43} parent=0
    _
  %s6 = ssub.s32 1, %s4
  %s7 = scalar_select 0, %s6, %s4
  // Predicated region
  $region2: #{_lambda_.43} parent=0 // pred_check
    _
  $region3: #{_lambda_.43} parent=0 // pred_check_branch
    %9 = sbr.rel (0) target = $region5
  $region4: #{_lambda_.43} parent=0 // pred_region
    _
  $region5: #{_lambda_.43} parent=0 // pred_fallthru
    _
  // Predicated region
  $region6: #{_lambda_.43} parent=0 // pred_check
    _
  $region7: #{_lambda_.43} parent=0 // pred_check_branch
    %11 = sbr.rel (0) target = $region9
  $region8: #{_lambda_.43} parent=0 // pred_region
    _
  $region9: #{_lambda_.43} parent=0 // pred_fallthru
    _
  // Predicated region
  $region10: #{_lambda_.43} parent=0 // pred_check
    _
  $region11: #{_lambda_.43} parent=0 // pred_check_branch
    %13 = sbr.rel (0) target = $region13
  $region12: #{_lambda_.43} parent=0 // pred_region
    _
  $region13: #{_lambda_.43} parent=0 // pred_fallthru
    _
  %p15 = scmp.eq.s32.totalorder 0, 0
  // Predicated region
  $region14: #{_lambda_.43} parent=0 // pred_check
    %p16 = pneg %p15
  $region15: #{_lambda_.43} parent=0 // pred_check_branch
    %18 = sbr.rel (%p16) target = $region17
  $region16: #{_lambda_.43} parent=0 // pred_region
    %vm19 = vcmask 261120
    %20 = vst.msk [vmem:[#allocation2] sm:$0xff] %vm19, 0.0
    %21 = vst.msk [vmem:[#allocation2 + $0x8] sm:$0xff] %vm19, 0.0
  $region17: #{_lambda_.43} parent=0 // pred_fallthru
    _
  %v22 = vld [vmem:[#allocation2] sm:$0xff]
  %v23 = vld [vmem:[#allocation2 + $0x8] sm:$0xff]
  %v24 = vld [vmem:[%s0] sm:$0xf]
  %v25 = vld [vmem:[%s0 + $0x4] sm:$0xf]
  %v26 = vld [vmem:[%s1] sm:$0xf]
  %v27 = vld [vmem:[%s1 + $0x4] sm:$0xf]
  %v28 = vld [vmem:[%s1 + $0x8] sm:$0xf]
  %v29 = vld [vmem:[%s1 + $0xc] sm:$0xf]
  %v32 = vunpack.c.l.b16 %v24
  %v33 = vunpack.c.l.b16 %v25
  %v34 = vpack.c.b16 %v33, %v32
  %v39 = vunpack.c.l.b16 %v26
  %v40 = vunpack.c.l.b16 %v27
  %v41 = vunpack.c.l.b16 %v28
  %v42 = vunpack.c.l.b16 %v29
  %v43 = vpack.c.b16 %v40, %v39
  %v44 = vpack.c.b16 %v42, %v41
  %vm47 = vcmask 261120
  %v49 = vsel %vm47, %v34, 0
  %51 = vmatpush.bf16.msra.mxu0 0
  %52 = vmatpush.bf16.msra.mxu0 0
  %53 = vmatpush.bf16.msra.mxu0 0
  %54 = vmatpush.bf16.msra.mxu0 0
  %55 = vmatpush.bf16.msra.mxu0 0
  %56 = vmatpush.bf16.msra.mxu0 0
  %57 = vmatpush.bf16.msra.mxu0 %v44
  %58 = vmatpush.bf16.msra.mxu0 %v43
  %59 = vmatmul.bf16.gmra.mxu0 %v49
  %v60 = vpop.f32.mrf.mxu0
  %v61 = vadd.f32 0.0, %v60
  %v62 = vpop.f32.mrf.mxu0
  %v63 = vadd.f32 0.0, %v62
  %64 = vdwg.mxu0
  %v65 = vadd.f32 %v22, %v61
  %v66 = vadd.f32 %v23, %v63
  %67 = vst.msk [vmem:[#allocation2] sm:$0xff] %vm47, %v65
  %68 = vst.msk [vmem:[#allocation2 + $0x8] sm:$0xff] %vm47, %v66
  // Predicated region
  $region18: #{_lambda_.43} parent=0 // pred_check
    %p69 = pneg %p15
  $region19: #{_lambda_.43} parent=0 // pred_check_branch
    %71 = sbr.rel (%p69) target = $region21
  $region20: #{_lambda_.43} parent=0 // pred_region
    %v72 = vld [vmem:[#allocation2] sm:$0xff]
    %v73 = vld [vmem:[#allocation2 + $0x8] sm:$0xff]
    %v74 = vld [vmem:[%s2] sm:$0x1]
    %v76 = vperm.slane %v74, 0
    %v78 = vadd.f32 %v72, %v76
    %v79 = vadd.f32 %v73, %v76
    %v80 = vpack.c.bf16 %v78, %v78
    %v81 = vpack.c.bf16 %v79, %v79
    %vm82 = vcmask 257024
    %83 = vst.msk [vmem:[%s3] sm:$0xf] %vm82, %v80
    %84 = vst.msk [vmem:[%s3 + $0x4] sm:$0xf] %vm82, %v81
  $region21: #{_lambda_.43} parent=0 // pred_fallthru
    _
  // Predicated region
  $region22: #{_lambda_.43} parent=0 // pred_check
    _
  $region23: #{_lambda_.43} parent=0 // pred_check_branch
    %86 = sbr.rel (0) target = $region25
  $region24: #{_lambda_.43} parent=0 // pred_region
    _
  $region25: #{_lambda_.43} parent=0 // pred_fallthru
    _
  // Predicated region
  $region26: #{_lambda_.43} parent=0 // pred_check
    _
  $region27: #{_lambda_.43} parent=0 // pred_check_branch
    %88 = sbr.rel (0) target = $region29
  $region28: #{_lambda_.43} parent=0 // pred_region
    _
  $region29: #{_lambda_.43} parent=0 // pred_fallthru
    _

// kernel: _lambda_.41
$region0: #{_lambda_.41}
  #allocation0 [shape = 'u32[]', space=smem, size = 0x4, offset = 0x4, fixed_abs, tag = 'smem constant byte address 0x4 - core index']
  #allocation1 [shape = 'u32[72,128]{1,0:T(1,128)}', space=vmem, size = 0x9000, scoped, tag = 'internal scratch']
  #allocation2 [shape = 'f32[16,96]{1,0:T(8,128)}', space=vmem, size = 0x2000, scoped, tag = 'scratch operand']
  %s0 = inlined_call_operand.vmem [shape: bf16[16,32], index: 0, kind: input, shape index: {}]
  %s1 = inlined_call_operand.vmem [shape: bf16[32,96], index: 1, kind: input, shape index: {}]
  %s2 = inlined_call_operand.vmem [shape: f32[1,96], index: 2, kind: input, shape index: {}]
  %s3 = inlined_call_operand.vmem [shape: bf16[16,96], index: 3, kind: output, shape index: {}]
  %s4 = sld [smem:[#allocation0]]
  $region30: #{_lambda_.41} parent=0
    _
  %s6 = ssub.s32 1, %s4
  %s7 = scalar_select 0, %s6, %s4
  // Predicated region
  $region2: #{_lambda_.41} parent=0 // pred_check
    _
  $region3: #{_lambda_.41} parent=0 // pred_check_branch
    %9 = sbr.rel (0) target = $region5
  $region4: #{_lambda_.41} parent=0 // pred_region
    _
  $region5: #{_lambda_.41} parent=0 // pred_fallthru
    _
  // Predicated region
  $region6: #{_lambda_.41} parent=0 // pred_check
    _
  $region7: #{_lambda_.41} parent=0 // pred_check_branch
    %11 = sbr.rel (0) target = $region9
  $region8: #{_lambda_.41} parent=0 // pred_region
    _
  $region9: #{_lambda_.41} parent=0 // pred_fallthru
    _
  // Predicated region
  $region10: #{_lambda_.41} parent=0 // pred_check
    _
  $region11: #{_lambda_.41} parent=0 // pred_check_branch
    %13 = sbr.rel (0) target = $region13
  $region12: #{_lambda_.41} parent=0 // pred_region
    _
  $region13: #{_lambda_.41} parent=0 // pred_fallthru
    _
  %p15 = scmp.eq.s32.totalorder 0, 0
  // Predicated region
  $region14: #{_lambda_.41} parent=0 // pred_check
    %p16 = pneg %p15
  $region15: #{_lambda_.41} parent=0 // pred_check_branch
    %18 = sbr.rel (%p16) target = $region17
  $region16: #{_lambda_.41} parent=0 // pred_region
    %vm19 = vcmask 785408
    %20 = vst.msk [vmem:[#allocation2] sm:$0xff] %vm19, 0.0
    %21 = vst.msk [vmem:[#allocation2 + $0x8] sm:$0xff] %vm19, 0.0
  $region17: #{_lambda_.41} parent=0 // pred_fallthru
    _
  %v22 = vld [vmem:[#allocation2] sm:$0xff]
  %v23 = vld [vmem:[#allocation2 + $0x8] sm:$0xff]
  %v24 = vld [vmem:[%s0] sm:$0xf]
  %v25 = vld [vmem:[%s0 + $0x4] sm:$0xf]
  %v26 = vld [vmem:[%s1] sm:$0xf]
  %v27 = vld [vmem:[%s1 + $0x4] sm:$0xf]
  %v28 = vld [vmem:[%s1 + $0x8] sm:$0xf]
  %v29 = vld [vmem:[%s1 + $0xc] sm:$0xf]
  %v32 = vunpack.c.l.b16 %v24
  %v33 = vunpack.c.l.b16 %v25
  %v34 = vpack.c.b16 %v33, %v32
  %v39 = vunpack.c.l.b16 %v26
  %v40 = vunpack.c.l.b16 %v27
  %v41 = vunpack.c.l.b16 %v28
  %v42 = vunpack.c.l.b16 %v29
  %v43 = vpack.c.b16 %v40, %v39
  %v44 = vpack.c.b16 %v42, %v41
  %vm47 = vcmask 261120
  %v49 = vsel %vm47, %v34, 0
  %51 = vmatpush.bf16.msra.mxu0 0
  %52 = vmatpush.bf16.msra.mxu0 0
  %53 = vmatpush.bf16.msra.mxu0 0
  %54 = vmatpush.bf16.msra.mxu0 0
  %55 = vmatpush.bf16.msra.mxu0 0
  %56 = vmatpush.bf16.msra.mxu0 0
  %57 = vmatpush.bf16.msra.mxu0 %v44
  %58 = vmatpush.bf16.msra.mxu0 %v43
  %59 = vmatmul.bf16.gmra.mxu0 %v49
  %v60 = vpop.f32.mrf.mxu0
  %v61 = vadd.f32 0.0, %v60
  %v62 = vpop.f32.mrf.mxu0
  %v63 = vadd.f32 0.0, %v62
  %64 = vdwg.mxu0
  %v65 = vadd.f32 %v22, %v61
  %v66 = vadd.f32 %v23, %v63
  %vm67 = vcmask 785408
  %68 = vst.msk [vmem:[#allocation2] sm:$0xff] %vm67, %v65
  %69 = vst.msk [vmem:[#allocation2 + $0x8] sm:$0xff] %vm67, %v66
  // Predicated region
  $region18: #{_lambda_.41} parent=0 // pred_check
    %p70 = pneg %p15
  $region19: #{_lambda_.41} parent=0 // pred_check_branch
    %72 = sbr.rel (%p70) target = $region21
  $region20: #{_lambda_.41} parent=0 // pred_region
    %v73 = vld [vmem:[#allocation2] sm:$0xff]
    %v74 = vld [vmem:[#allocation2 + $0x8] sm:$0xff]
    %v75 = vld [vmem:[%s2] sm:$0x1]
    %v77 = vperm.slane %v75, 0
    %v79 = vadd.f32 %v73, %v77
    %v80 = vadd.f32 %v74, %v77
    %v81 = vpack.c.bf16 %v79, %v79
    %v82 = vpack.c.bf16 %v80, %v80
    %vm83 = vcmask 781312
    %84 = vst.msk [vmem:[%s3] sm:$0xf] %vm83, %v81
    %85 = vst.msk [vmem:[%s3 + $0x4] sm:$0xf] %vm83, %v82
  $region21: #{_lambda_.41} parent=0 // pred_fallthru
    _
  // Predicated region
  $region22: #{_lambda_.41} parent=0 // pred_check
    _
  $region23: #{_lambda_.41} parent=0 // pred_check_branch
    %87 = sbr.rel (0) target = $region25
  $region24: #{_lambda_.41} parent=0 // pred_region
    _
  $region25: #{_lambda_.41} parent=0 // pred_fallthru
    _
  // Predicated region
  $region26: #{_lambda_.41} parent=0 // pred_check
    _
  $region27: #{_lambda_.41} parent=0 // pred_check_branch
    %89 = sbr.rel (0) target = $region29
  $region28: #{_lambda_.41} parent=0 // pred_region
    _
  $region29: #{_lambda_.41} parent=0 // pred_fallthru
    _

// kernel: _lambda_.42
$region0: #{_lambda_.42}
  #allocation0 [shape = 'u32[]', space=smem, size = 0x4, offset = 0x4, fixed_abs, tag = 'smem constant byte address 0x4 - core index']
  #allocation1 [shape = 'u32[72,128]{1,0:T(1,128)}', space=vmem, size = 0x9000, scoped, tag = 'internal scratch']
  %s0 = inlined_call_operand.vmem [shape: bf16[2,8,96], index: 0, kind: input, shape index: {}]
  %s1 = inlined_call_operand.vmem [shape: bf16[1,8,8], index: 1, kind: input, shape index: {}]
  %s2 = inlined_call_operand.vmem [shape: bf16[2,8,32], index: 2, kind: output, shape index: {}]
  %s3 = sld [smem:[#allocation0]]
  $region41: #{_lambda_.42} parent=0
    _
  %s5 = ssub.s32 1, %s3
  %s6 = scalar_select 0, %s5, %s3
  loop: start=0, step=1, limit=4
  $region2: #{_lambda_.42} parent=0 // loop_pre_header
    _
  $region3: #{_lambda_.42} parent=0 // loop_header
    %s8 = sphi 0, %s12
    %p9 = scmp.ge.s32.totalorder %s8, 4
    %s18 = sphi 0, %s20
    %s21 = sphi 0, %s18
    %s22 = sphi 0, %s21
    %s38 = sphi 0, %s22
    %s42 = sphi 0, %s42
    %s44 = sphi 0, %s42
    %s45 = sphi 0, %s44
    %s59 = sphi 0, %s45
    %s65 = sphi 0, %s67
    %s68 = sphi 0, %s65
    %s69 = sphi 0, %s68
    %s85 = sphi 0, %s69
  $region4: #{_lambda_.42} parent=0 // loop_header_branch
    %11 = sbr.rel (%p9) target = $region8
  $region5: #{_lambda_.42} parent=0 // loop_body
    %s13 = ssub.s32 %s8, 1
    %s14 = ssub.s32 %s8, 2
    %s15 = sadd.s32 %s8, 1
    %s16 = ssub.s32 %s8, %s15
    %p17 = scmp.eq.s32.totalorder %s16, 0
    %s19 = sadd.s32 %s18, 1
    %s20 = scalar_select %p17, %s18, %s19
    %p23 = pneg %p17
    %p24 = scmp.eq.s32.totalorder %s8, 1
    %p25 = por %p23, %p24
    %p26 = scmp.ne.s32.totalorder %s18, %s21
    %p27 = scmp.eq.s32.totalorder %s8, 0
    %p28 = por %p26, %p27
    %p29 = scmp.ne.s32.totalorder %s18, %s21
    %p30 = scmp.eq.s32.totalorder %s13, 1
    %p31 = por %p29, %p30
    %p32 = scmp.ne.s32.totalorder %s21, %s22
    %p33 = scmp.eq.s32.totalorder %s13, 0
    %p34 = por %p32, %p33
    %p35 = scmp.ne.s32.totalorder %s21, %s22
    %p36 = scmp.eq.s32.totalorder %s14, 1
    %p37 = por %p35, %p36
    %p39 = scmp.ne.s32.totalorder %s22, %s38
    %p40 = scmp.eq.s32.totalorder %s14, 0
    %p41 = por %p39, %p40
    %s43 = sadd.s32 %s42, 1
    %p46 = scmp.eq.s32.totalorder %s8, 1
    %p47 = scmp.ne.s32.totalorder %s42, %s44
    %p48 = scmp.eq.s32.totalorder %s8, 0
    %p49 = por %p47, %p48
    %p50 = scmp.ne.s32.totalorder %s42, %s44
    %p51 = scmp.eq.s32.totalorder %s13, 1
    %p52 = por %p50, %p51
    %p53 = scmp.ne.s32.totalorder %s44, %s45
    %p54 = scmp.eq.s32.totalorder %s13, 0
    %p55 = por %p53, %p54
    %p56 = scmp.ne.s32.totalorder %s44, %s45
    %p57 = scmp.eq.s32.totalorder %s14, 1
    %p58 = por %p56, %p57
    %p60 = scmp.ne.s32.totalorder %s45, %s59
    %p61 = scmp.eq.s32.totalorder %s14, 0
    %p62 = por %p60, %p61
    %s63 = ssub.s32 %s8, %s15
    %p64 = scmp.eq.s32.totalorder %s63, 0
    %s66 = sadd.s32 %s65, 1
    %s67 = scalar_select %p64, %s65, %s66
    %p70 = pneg %p64
    %p71 = scmp.eq.s32.totalorder %s8, 1
    %p72 = por %p70, %p71
    %p73 = scmp.ne.s32.totalorder %s65, %s68
    %p74 = scmp.eq.s32.totalorder %s8, 0
    %p75 = por %p73, %p74
    %p76 = scmp.ne.s32.totalorder %s65, %s68
    %p77 = scmp.eq.s32.totalorder %s13, 1
    %p78 = por %p76, %p77
    %p79 = scmp.ne.s32.totalorder %s68, %s69
    %p80 = scmp.eq.s32.totalorder %s13, 0
    %p81 = por %p79, %p80
    %p82 = scmp.ne.s32.totalorder %s68, %s69
    %p83 = scmp.eq.s32.totalorder %s14, 1
    %p84 = por %p82, %p83
    %p86 = scmp.ne.s32.totalorder %s69, %s85
    %p87 = scmp.eq.s32.totalorder %s14, 0
    %p88 = por %p86, %p87
    %p89 = scmp.le.s32.totalorder 1, %s8
    %p90 = scmp.lt.s32.totalorder %s8, 3
    %p91 = pnand %p89, %p90
    %p92 = pneg %p91
    // Predicated region
    $region9: #{_lambda_.42} parent=5 // pred_check
      _
    $region10: #{_lambda_.42} parent=5 // pred_check_branch
      %94 = sbr.rel (%p91) target = $region12
    $region11: #{_lambda_.42} parent=5 // pred_region
      %s95 = ssub.s32 %s8, 1
      // Predicated region
      $region13: #{_lambda_.42} parent=11 // pred_check
        %p96 = pneg %p55
      $region14: #{_lambda_.42} parent=11 // pred_check_branch
        %98 = sbr.rel (%p96) target = $region16
      $region15: #{_lambda_.42} parent=11 // pred_region
        _
      $region16: #{_lambda_.42} parent=11 // pred_fallthru
        _
    $region12: #{_lambda_.42} parent=5 // pred_fallthru
      _
    %p99 = scmp.lt.s32.totalorder %s8, 2
    // Predicated region
    $region17: #{_lambda_.42} parent=5 // pred_check
      %p100 = pneg %p99
    $region18: #{_lambda_.42} parent=5 // pred_check_branch
      %102 = sbr.rel (%p100) target = $region20
    $region19: #{_lambda_.42} parent=5 // pred_region
      // Predicated region
      $region21: #{_lambda_.42} parent=19 // pred_check
        %p103 = pneg %p28
      $region22: #{_lambda_.42} parent=19 // pred_check_branch
        %105 = sbr.rel (%p103) target = $region24
      $region23: #{_lambda_.42} parent=19 // pred_region
        %p106 = scmp.lt.s32.totalorder %s8, 1
        %s107 = scalar_select %p106, %s8, 1
        %s108 = smul.addr %s107, 4
        %s109 = scalar_lea.vmem %s0, %s108
      $region24: #{_lambda_.42} parent=19 // pred_fallthru
        _
    $region20: #{_lambda_.42} parent=5 // pred_fallthru
      _
    %p110 = scmp.le.s32.totalorder 1, %s8
    %p111 = scmp.lt.s32.totalorder %s8, 3
    %p112 = pnand %p110, %p111
    %p113 = pneg %p112
    // Predicated region
    $region25: #{_lambda_.42} parent=5 // pred_check
      _
    $region26: #{_lambda_.42} parent=5 // pred_check_branch
      %115 = sbr.rel (%p112) target = $region28
    $region27: #{_lambda_.42} parent=5 // pred_region
      %s116 = ssub.s32 %s8, 1
      %p117 = scmp.lt.s32.totalorder %s13, 1
      %s118 = scalar_select %p117, %s13, 1
      %s119 = smul.addr %s118, 4
      %s120 = scalar_lea.vmem %s0, %s119
      %p121 = pneg %p34
      %p122 = pneg %p31
      %p123 = pneg %p55
      %p124 = pneg %p52
      %p125 = pneg %p81
      %p126 = pneg %p78
      %p127 = scmp.lt.s32.totalorder %s13, 1
      %s128 = scalar_select %p127, %s13, 1
      %s129 = smul.addr %s128, 4
      %s130 = scalar_lea.vmem %s2, %s129
      %p131 = scmp.lt.s32.totalorder %s13, 1
      %s132 = scalar_select %p131, %s13, 1
      %s133 = smul.addr %s132, 4
      %s134 = scalar_lea.vmem %s0, %s133
      %p135 = scmp.lt.s32.totalorder %s13, 1
      %s136 = scalar_select %p135, %s13, 1
      %s137 = smul.addr %s136, 4
      %s138 = scalar_lea.vmem %s2, %s137
      %v140 = vld [vmem:[%s134] sm:$0xf]
      %v141 = vld [vmem:[%s1] sm:$0xf]
      %v142 = vunpack.c.l.bf16 %v141
      %v143 = vunpack.c.l.bf16 %v140
      %v144 = vmul.f32 %v143, 0.35351563
      %v145 = vpack.c.bf16 %v144, %v144
      %v147 = vunpack.c.l.b16 %v140
      %v148 = vpack.c.b16 %v147, %v147
      %149 = vrot.lane.b32.xlu0 %v148, 96
      %v150 = vpop.permute.xlu0 %149
      %vm151 = vcmask 64512
      %v153 = vsel %vm151, %v145, 0
      %v156 = vsel %vm151, %v150, 0
      %158 = vmatpush.bf16.xpose.msra.mxu0 0
      %159 = vmatpush.bf16.xpose.msra.mxu0 0
      %160 = vmatpush.bf16.xpose.msra.mxu0 0
      %161 = vmatpush.bf16.xpose.msra.mxu0 0
      %162 = vmatpush.bf16.xpose.msra.mxu0 0
      %163 = vmatpush.bf16.xpose.msra.mxu0 0
      %164 = vmatpush.bf16.xpose.msra.mxu0 0
      %165 = vmatpush.bf16.xpose.msra.mxu0 %v156
      %166 = vmatmul.bf16.gmra.mxu0 %v153
      %v167 = vpop.f32.mrf.mxu0
      %v168 = vadd.f32 %v142, %v167
      %v169 = vpop.f32.mrf.mxu0
      %170 = vdwg.mxu0
      %v171 = vsel %vm151, %v168, -inf
      %172 = vmax.xlane.f32.xlu0 %v171
      %v173 = vpop.xlane.xlu0 %172
      %v174 = vsub.f32 %v168, %v173
      %v175 = vmul.f32 %v174, 1.442695
      %v176 = vpow.pop %v175
      %v177 = vsel %vm151, %v176, 0.0
      %178 = vadd.xlane.f32.xlu0 %v177
      %v179 = vpop.xlane.xlu0 %178
      %v180 = vrcp.pop %v179
      %v181 = vmul.f32 %v179, %v180
      %v182 = vsub.f32 1.0, %v181
      %v183 = vmul.f32 %v180, %v182
      %v184 = vadd.f32 %v180, %v183
      %vm185 = vweird.f32 %v179
      %vm186 = vweird.f32 %v180
      %vm187 = vmor %vm185, %vm186
      %v188 = vsel %vm187, %v180, %v184
      %v189 = vand.u32 2147483647, %v179
      %vm190 = vcmp.eq.f32.partialorder %v189, 8.507059e+37
      %v191 = vand.u32 %v179, 2147483648
      %v192 = vor.u32 1.1754944e-38, %v191
      %v193 = vsel %vm190, %v192, %v188
      %v194 = vmul.f32 %v176, %v193
      %v195 = vpack.c.bf16 %v194, %v194
      %196 = vrot.lane.b32.xlu0 %v148, 64
      %v197 = vpop.permute.xlu0 %196
      %v199 = vsel %vm151, %v195, 0
      %vm201 = vcmask 1043456
      %v203 = vsel %vm201, %v197, 0
      %205 = vmatpush.bf16.msra.mxu0 0
      %206 = vmatpush.bf16.msra.mxu0 0
      %207 = vmatpush.bf16.msra.mxu0 0
      %208 = vmatpush.bf16.msra.mxu0 0
      %209 = vmatpush.bf16.msra.mxu0 0
      %210 = vmatpush.bf16.msra.mxu0 0
      %211 = vmatpush.bf16.msra.mxu0 0
      %212 = vmatpush.bf16.msra.mxu0 %v203
      %213 = vmatmul.bf16.gmra.mxu0 %v199
      %v214 = vpop.f32.mrf.mxu0
      %v215 = vadd.f32 0.0, %v214
      %v216 = vpop.f32.mrf.mxu0
      %217 = vdwg.mxu0
      %v219 = vunpack.c.l.b16 %v145
      %v220 = vpack.c.b16 %v219, %v219
      %221 = vrot.lane.b32.xlu0 %v220, 120
      %v222 = vpop.permute.xlu0 %221
      %223 = vrot.lane.b32.xlu0 %v148, 88
      %v224 = vpop.permute.xlu0 %223
      %v226 = vsel %vm151, %v222, 0
      %v229 = vsel %vm151, %v224, 0
      %231 = vmatpush.bf16.xpose.msra.mxu0 0
      %232 = vmatpush.bf16.xpose.msra.mxu0 0
      %233 = vmatpush.bf16.xpose.msra.mxu0 0
      %234 = vmatpush.bf16.xpose.msra.mxu0 0
      %235 = vmatpush.bf16.xpose.msra.mxu0 0
      %236 = vmatpush.bf16.xpose.msra.mxu0 0
      %237 = vmatpush.bf16.xpose.msra.mxu0 0
      %238 = vmatpush.bf16.xpose.msra.mxu0 %v229
      %239 = vmatmul.bf16.gmra.mxu0 %v226
      %v240 = vpop.f32.mrf.mxu0
      %v241 = vadd.f32 %v142, %v240
      %v242 = vpop.f32.mrf.mxu0
      %243 = vdwg.mxu0
      %v244 = vsel %vm151, %v241, -inf
      %245 = vmax.xlane.f32.xlu0 %v244
      %v246 = vpop.xlane.xlu0 %245
      %v247 = vsub.f32 %v241, %v246
      %v248 = vmul.f32 %v247, 1.442695
      %v249 = vpow.pop %v248
      %v250 = vsel %vm151, %v249, 0.0
      %251 = vadd.xlane.f32.xlu0 %v250
      %v252 = vpop.xlane.xlu0 %251
      %v253 = vrcp.pop %v252
      %v254 = vmul.f32 %v252, %v253
      %v255 = vsub.f32 1.0, %v254
      %v256 = vmul.f32 %v253, %v255
      %v257 = vadd.f32 %v253, %v256
      %vm258 = vweird.f32 %v252
      %vm259 = vweird.f32 %v253
      %vm260 = vmor %vm258, %vm259
      %v261 = vsel %vm260, %v253, %v257
      %v262 = vand.u32 2147483647, %v252
      %vm263 = vcmp.eq.f32.partialorder %v262, 8.507059e+37
      %v264 = vand.u32 %v252, 2147483648
      %v265 = vor.u32 1.1754944e-38, %v264
      %v266 = vsel %vm263, %v265, %v261
      %v267 = vmul.f32 %v249, %v266
      %v268 = vpack.c.bf16 %v267, %v267
      %269 = vrot.lane.b32.xlu0 %v148, 56
      %v270 = vpop.permute.xlu0 %269
      %v272 = vsel %vm151, %v268, 0
      %v275 = vsel %vm201, %v270, 0
      %277 = vmatpush.bf16.msra.mxu0 0
      %278 = vmatpush.bf16.msra.mxu0 0
      %279 = vmatpush.bf16.msra.mxu0 0
      %280 = vmatpush.bf16.msra.mxu0 0
      %281 = vmatpush.bf16.msra.mxu0 0
      %282 = vmatpush.bf16.msra.mxu0 0
      %283 = vmatpush.bf16.msra.mxu0 0
      %284 = vmatpush.bf16.msra.mxu0 %v275
      %285 = vmatmul.bf16.gmra.mxu0 %v272
      %v286 = vpop.f32.mrf.mxu0
      %v287 = vadd.f32 0.0, %v286
      %v288 = vpop.f32.mrf.mxu0
      %289 = vdwg.mxu0
      %290 = vrot.lane.b32.xlu0 %v220, 112
      %v291 = vpop.permute.xlu0 %290
      %292 = vrot.lane.b32.xlu0 %v148, 80
      %v293 = vpop.permute.xlu0 %292
      %v295 = vsel %vm151, %v291, 0
      %v298 = vsel %vm151, %v293, 0
      %300 = vmatpush.bf16.xpose.msra.mxu0 0
      %301 = vmatpush.bf16.xpose.msra.mxu0 0
      %302 = vmatpush.bf16.xpose.msra.mxu0 0
      %303 = vmatpush.bf16.xpose.msra.mxu0 0
      %304 = vmatpush.bf16.xpose.msra.mxu0 0
      %305 = vmatpush.bf16.xpose.msra.mxu0 0
      %306 = vmatpush.bf16.xpose.msra.mxu0 0
      %307 = vmatpush.bf16.xpose.msra.mxu0 %v298
      %308 = vmatmul.bf16.gmra.mxu0 %v295
      %v309 = vpop.f32.mrf.mxu0
      %v310 = vadd.f32 %v142, %v309
      %v311 = vpop.f32.mrf.mxu0
      %312 = vdwg.mxu0
      %v313 = vsel %vm151, %v310, -inf
      %314 = vmax.xlane.f32.xlu0 %v313
      %v315 = vpop.xlane.xlu0 %314
      %v316 = vsub.f32 %v310, %v315
      %v317 = vmul.f32 %v316, 1.442695
      %v318 = vpow.pop %v317
      %v319 = vsel %vm151, %v318, 0.0
      %320 = vadd.xlane.f32.xlu0 %v319
      %v321 = vpop.xlane.xlu0 %320
      %v322 = vrcp.pop %v321
      %v323 = vmul.f32 %v321, %v322
      %v324 = vsub.f32 1.0, %v323
      %v325 = vmul.f32 %v322, %v324
      %v326 = vadd.f32 %v322, %v325
      %vm327 = vweird.f32 %v321
      %vm328 = vweird.f32 %v322
      %vm329 = vmor %vm327, %vm328
      %v330 = vsel %vm329, %v322, %v326
      %v331 = vand.u32 2147483647, %v321
      %vm332 = vcmp.eq.f32.partialorder %v331, 8.507059e+37
      %v333 = vand.u32 %v321, 2147483648
      %v334 = vor.u32 1.1754944e-38, %v333
      %v335 = vsel %vm332, %v334, %v330
      %v336 = vmul.f32 %v318, %v335
      %v337 = vpack.c.bf16 %v336, %v336
      %338 = vrot.lane.b32.xlu0 %v148, 48
      %v339 = vpop.permute.xlu0 %338
      %v341 = vsel %vm151, %v337, 0
      %v344 = vsel %vm201, %v339, 0
      %346 = vmatpush.bf16.msra.mxu0 0
      %347 = vmatpush.bf16.msra.mxu0 0
      %348 = vmatpush.bf16.msra.mxu0 0
      %349 = vmatpush.bf16.msra.mxu0 0
      %350 = vmatpush.bf16.msra.mxu0 0
      %351 = vmatpush.bf16.msra.mxu0 0
      %352 = vmatpush.bf16.msra.mxu0 0
      %353 = vmatpush.bf16.msra.mxu0 %v344
      %354 = vmatmul.bf16.gmra.mxu0 %v341
      %v355 = vpop.f32.mrf.mxu0
      %v356 = vadd.f32 0.0, %v355
      %v357 = vpop.f32.mrf.mxu0
      %358 = vdwg.mxu0
      %359 = vrot.lane.b32.xlu0 %v220, 104
      %v360 = vpop.permute.xlu0 %359
      %361 = vrot.lane.b32.xlu0 %v148, 72
      %v362 = vpop.permute.xlu0 %361
      %v364 = vsel %vm151, %v360, 0
      %v367 = vsel %vm151, %v362, 0
      %369 = vmatpush.bf16.xpose.msra.mxu0 0
      %370 = vmatpush.bf16.xpose.msra.mxu0 0
      %371 = vmatpush.bf16.xpose.msra.mxu0 0
      %372 = vmatpush.bf16.xpose.msra.mxu0 0
      %373 = vmatpush.bf16.xpose.msra.mxu0 0
      %374 = vmatpush.bf16.xpose.msra.mxu0 0
      %375 = vmatpush.bf16.xpose.msra.mxu0 0
      %376 = vmatpush.bf16.xpose.msra.mxu0 %v367
      %377 = vmatmul.bf16.gmra.mxu0 %v364
      %v378 = vpop.f32.mrf.mxu0
      %v379 = vadd.f32 %v142, %v378
      %v380 = vpop.f32.mrf.mxu0
      %381 = vdwg.mxu0
      %v382 = vsel %vm151, %v379, -inf
      %383 = vmax.xlane.f32.xlu0 %v382
      %v384 = vpop.xlane.xlu0 %383
      %v385 = vsub.f32 %v379, %v384
      %v386 = vmul.f32 %v385, 1.442695
      %v387 = vpow.pop %v386
      %v388 = vsel %vm151, %v387, 0.0
      %389 = vadd.xlane.f32.xlu0 %v388
      %v390 = vpop.xlane.xlu0 %389
      %v391 = vrcp.pop %v390
      %v392 = vmul.f32 %v390, %v391
      %v393 = vsub.f32 1.0, %v392
      %v394 = vmul.f32 %v391, %v393
      %v395 = vadd.f32 %v391, %v394
      %vm396 = vweird.f32 %v390
      %vm397 = vweird.f32 %v391
      %vm398 = vmor %vm396, %vm397
      %v399 = vsel %vm398, %v391, %v395
      %v400 = vand.u32 2147483647, %v390
      %vm401 = vcmp.eq.f32.partialorder %v400, 8.507059e+37
      %v402 = vand.u32 %v390, 2147483648
      %v403 = vor.u32 1.1754944e-38, %v402
      %v404 = vsel %vm401, %v403, %v399
      %v405 = vmul.f32 %v387, %v404
      %v406 = vpack.c.bf16 %v405, %v405
      %407 = vrot.lane.b32.xlu0 %v148, 40
      %v408 = vpop.permute.xlu0 %407
      %v410 = vsel %vm151, %v406, 0
      %v413 = vsel %vm201, %v408, 0
      %415 = vmatpush.bf16.msra.mxu0 0
      %416 = vmatpush.bf16.msra.mxu0 0
      %417 = vmatpush.bf16.msra.mxu0 0
      %418 = vmatpush.bf16.msra.mxu0 0
      %419 = vmatpush.bf16.msra.mxu0 0
      %420 = vmatpush.bf16.msra.mxu0 0
      %421 = vmatpush.bf16.msra.mxu0 0
      %422 = vmatpush.bf16.msra.mxu0 %v413
      %423 = vmatmul.bf16.gmra.mxu0 %v410
      %v424 = vpop.f32.mrf.mxu0
      %v425 = vadd.f32 0.0, %v424
      %v426 = vpop.f32.mrf.mxu0
      %427 = vdwg.mxu0
      %429 = vrot.lane.b32.xlu0 %v287, 8
      %v430 = vpop.permute.xlu0 %429
      %433 = vrot.lane.b32.xlu0 %v356, 16
      %v434 = vpop.permute.xlu0 %433
      %437 = vrot.lane.b32.xlu0 %v425, 24
      %v438 = vpop.permute.xlu0 %437
      %v440 = vsel %vm151, %v215, %v430
      %vm441 = vcmask 130048
      %v442 = vsel %vm441, %v440, %v434
      %vm443 = vcmask 195584
      %v444 = vsel %vm443, %v442, %v438
      %v445 = vpack.c.bf16 %v444, %v444
      %vm446 = vcmask 257024
      %447 = vst.msk [vmem:[%s138] sm:$0xf] %vm446, %v445
      %p448 = scmp.lt.s32.totalorder %s13, 1
      %s449 = scalar_select %p448, %s13, 1
      %s450 = smul.addr %s449, 4
      %s451 = scalar_lea.vmem %s2, %s450
      // Predicated region
      $region29: #{_lambda_.42} parent=27 // pred_check
        %p452 = pneg %p78
      $region30: #{_lambda_.42} parent=27 // pred_check_branch
        %454 = sbr.rel (%p452) target = $region32
      $region31: #{_lambda_.42} parent=27 // pred_region
        _
      $region32: #{_lambda_.42} parent=27 // pred_fallthru
        _
    $region28: #{_lambda_.42} parent=5 // pred_fallthru
      _
    %p455 = scmp.le.s32.totalorder 2, %s8
    // Predicated region
    $region33: #{_lambda_.42} parent=5 // pred_check
      %p456 = pneg %p455
    $region34: #{_lambda_.42} parent=5 // pred_check_branch
      %458 = sbr.rel (%p456) target = $region36
    $region35: #{_lambda_.42} parent=5 // pred_region
      %s459 = ssub.s32 %s8, 2
      // Predicated region
      $region37: #{_lambda_.42} parent=35 // pred_check
        %p460 = pneg %p84
      $region38: #{_lambda_.42} parent=35 // pred_check_branch
        %462 = sbr.rel (%p460) target = $region40
      $region39: #{_lambda_.42} parent=35 // pred_region
        %p463 = scmp.lt.s32.totalorder %s14, 1
        %s464 = scalar_select %p463, %s14, 1
        %s465 = smul.addr %s464, 4
        %s466 = scalar_lea.vmem %s2, %s465
      $region40: #{_lambda_.42} parent=35 // pred_fallthru
        _
    $region36: #{_lambda_.42} parent=5 // pred_fallthru
      _
  $region6: #{_lambda_.42} parent=0 // loop_footer
    %s12 = sadd.s32 1, %s8
  $region7: #{_lambda_.42} parent=0 // loop_footer_branch
    %7 = sbr.rel target = $region3
  $region8: #{_lambda_.42} parent=0 // loop_exit
    _

// kernel: _lambda_.46
$region0: #{_lambda_.46}
  #allocation0 [shape = 'u32[]', space=smem, size = 0x4, offset = 0x4, fixed_abs, tag = 'smem constant byte address 0x4 - core index']
  #allocation1 [shape = 'u32[72,128]{1,0:T(1,128)}', space=vmem, size = 0x9000, scoped, tag = 'internal scratch']
  #allocation2 [shape = 'f32[16,32]{1,0:T(8,128)}', space=vmem, size = 0x2000, scoped, tag = 'scratch operand']
  %s0 = inlined_call_operand.vmem [shape: bf16[16,64], index: 0, kind: input, shape index: {}]
  %s1 = inlined_call_operand.vmem [shape: bf16[64,32], index: 1, kind: input, shape index: {}]
  %s2 = inlined_call_operand.vmem [shape: f32[1,32], index: 2, kind: input, shape index: {}]
  %s3 = inlined_call_operand.vmem [shape: bf16[16,32], index: 3, kind: output, shape index: {}]
  %s4 = sld [smem:[#allocation0]]
  $region30: #{_lambda_.46} parent=0
    _
  %s6 = ssub.s32 1, %s4
  %s7 = scalar_select 0, %s6, %s4
  // Predicated region
  $region2: #{_lambda_.46} parent=0 // pred_check
    _
  $region3: #{_lambda_.46} parent=0 // pred_check_branch
    %9 = sbr.rel (0) target = $region5
  $region4: #{_lambda_.46} parent=0 // pred_region
    _
  $region5: #{_lambda_.46} parent=0 // pred_fallthru
    _
  // Predicated region
  $region6: #{_lambda_.46} parent=0 // pred_check
    _
  $region7: #{_lambda_.46} parent=0 // pred_check_branch
    %11 = sbr.rel (0) target = $region9
  $region8: #{_lambda_.46} parent=0 // pred_region
    _
  $region9: #{_lambda_.46} parent=0 // pred_fallthru
    _
  // Predicated region
  $region10: #{_lambda_.46} parent=0 // pred_check
    _
  $region11: #{_lambda_.46} parent=0 // pred_check_branch
    %13 = sbr.rel (0) target = $region13
  $region12: #{_lambda_.46} parent=0 // pred_region
    _
  $region13: #{_lambda_.46} parent=0 // pred_fallthru
    _
  %p15 = scmp.eq.s32.totalorder 0, 0
  // Predicated region
  $region14: #{_lambda_.46} parent=0 // pred_check
    %p16 = pneg %p15
  $region15: #{_lambda_.46} parent=0 // pred_check_branch
    %18 = sbr.rel (%p16) target = $region17
  $region16: #{_lambda_.46} parent=0 // pred_region
    %vm19 = vcmask 261120
    %20 = vst.msk [vmem:[#allocation2] sm:$0xff] %vm19, 0.0
    %21 = vst.msk [vmem:[#allocation2 + $0x8] sm:$0xff] %vm19, 0.0
  $region17: #{_lambda_.46} parent=0 // pred_fallthru
    _
  %v22 = vld [vmem:[#allocation2] sm:$0xff]
  %v23 = vld [vmem:[#allocation2 + $0x8] sm:$0xff]
  %v24 = vld [vmem:[%s0] sm:$0xf]
  %v25 = vld [vmem:[%s0 + $0x4] sm:$0xf]
  %v26 = vld [vmem:[%s1] sm:$0xf]
  %v27 = vld [vmem:[%s1 + $0x4] sm:$0xf]
  %v28 = vld [vmem:[%s1 + $0x8] sm:$0xf]
  %v29 = vld [vmem:[%s1 + $0xc] sm:$0xf]
  %v30 = vld [vmem:[%s1 + $0x10] sm:$0xf]
  %v31 = vld [vmem:[%s1 + $0x14] sm:$0xf]
  %v32 = vld [vmem:[%s1 + $0x18] sm:$0xf]
  %v33 = vld [vmem:[%s1 + $0x1c] sm:$0xf]
  %v36 = vunpack.c.l.b16 %v24
  %v37 = vunpack.c.l.b16 %v25
  %v38 = vpack.c.b16 %v37, %v36
  %v47 = vunpack.c.l.b16 %v26
  %v48 = vunpack.c.l.b16 %v27
  %v49 = vunpack.c.l.b16 %v28
  %v50 = vunpack.c.l.b16 %v29
  %v51 = vunpack.c.l.b16 %v30
  %v52 = vunpack.c.l.b16 %v31
  %v53 = vunpack.c.l.b16 %v32
  %v54 = vunpack.c.l.b16 %v33
  %v55 = vpack.c.b16 %v48, %v47
  %v56 = vpack.c.b16 %v50, %v49
  %v57 = vpack.c.b16 %v52, %v51
  %v58 = vpack.c.b16 %v54, %v53
  %vm63 = vcmask 523264
  %v65 = vsel %vm63, %v38, 0
  %67 = vmatpush.bf16.msra.mxu0 0
  %68 = vmatpush.bf16.msra.mxu0 0
  %69 = vmatpush.bf16.msra.mxu0 0
  %70 = vmatpush.bf16.msra.mxu0 0
  %71 = vmatpush.bf16.msra.mxu0 %v58
  %72 = vmatpush.bf16.msra.mxu0 %v57
  %73 = vmatpush.bf16.msra.mxu0 %v56
  %74 = vmatpush.bf16.msra.mxu0 %v55
  %75 = vmatmul.bf16.gmra.mxu0 %v65
  %v76 = vpop.f32.mrf.mxu0
  %v77 = vadd.f32 0.0, %v76
  %v78 = vpop.f32.mrf.mxu0
  %v79 = vadd.f32 0.0, %v78
  %80 = vdwg.mxu0
  %v81 = vadd.f32 %v22, %v77
  %v82 = vadd.f32 %v23, %v79
  %vm83 = vcmask 261120
  %84 = vst.msk [vmem:[#allocation2] sm:$0xff] %vm83, %v81
  %85 = vst.msk [vmem:[#allocation2 + $0x8] sm:$0xff] %vm83, %v82
  // Predicated region
  $region18: #{_lambda_.46} parent=0 // pred_check
    %p86 = pneg %p15
  $region19: #{_lambda_.46} parent=0 // pred_check_branch
    %88 = sbr.rel (%p86) target = $region21
  $region20: #{_lambda_.46} parent=0 // pred_region
    %v89 = vld [vmem:[#allocation2] sm:$0xff]
    %v90 = vld [vmem:[#allocation2 + $0x8] sm:$0xff]
    %v91 = vld [vmem:[%s2] sm:$0x1]
    %v93 = vperm.slane %v91, 0
    %v95 = vadd.f32 %v89, %v93
    %v96 = vadd.f32 %v90, %v93
    %v97 = vpack.c.bf16 %v95, %v95
    %v98 = vpack.c.bf16 %v96, %v96
    %vm99 = vcmask 257024
    %100 = vst.msk [vmem:[%s3] sm:$0xf] %vm99, %v97
    %101 = vst.msk [vmem:[%s3 + $0x4] sm:$0xf] %vm99, %v98
  $region21: #{_lambda_.46} parent=0 // pred_fallthru
    _
  // Predicated region
  $region22: #{_lambda_.46} parent=0 // pred_check
    _
  $region23: #{_lambda_.46} parent=0 // pred_check_branch
    %103 = sbr.rel (0) target = $region25
  $region24: #{_lambda_.46} parent=0 // pred_region
    _
  $region25: #{_lambda_.46} parent=0 // pred_fallthru
    _
  // Predicated region
  $region26: #{_lambda_.46} parent=0 // pred_check
    _
  $region27: #{_lambda_.46} parent=0 // pred_check_branch
    %105 = sbr.rel (0) target = $region29
  $region28: #{_lambda_.46} parent=0 // pred_region
    _
  $region29: #{_lambda_.46} parent=0 // pred_fallthru
    _

// kernel: _lambda_.45
$region0: #{_lambda_.45}
  #allocation0 [shape = 'u32[]', space=smem, size = 0x4, offset = 0x4, fixed_abs, tag = 'smem constant byte address 0x4 - core index']
  #allocation1 [shape = 'u32[72,128]{1,0:T(1,128)}', space=vmem, size = 0x9000, scoped, tag = 'internal scratch']
  #allocation2 [shape = 'f32[16,64]{1,0:T(8,128)}', space=vmem, size = 0x2000, scoped, tag = 'scratch operand']
  %s0 = inlined_call_operand.vmem [shape: bf16[16,32], index: 0, kind: input, shape index: {}]
  %s1 = inlined_call_operand.vmem [shape: bf16[32,64], index: 1, kind: input, shape index: {}]
  %s2 = inlined_call_operand.vmem [shape: f32[1,64], index: 2, kind: input, shape index: {}]
  %s3 = inlined_call_operand.vmem [shape: bf16[16,64], index: 3, kind: output, shape index: {}]
  %s4 = sld [smem:[#allocation0]]
  $region30: #{_lambda_.45} parent=0
    _
  %s6 = ssub.s32 1, %s4
  %s7 = scalar_select 0, %s6, %s4
  // Predicated region
  $region2: #{_lambda_.45} parent=0 // pred_check
    _
  $region3: #{_lambda_.45} parent=0 // pred_check_branch
    %9 = sbr.rel (0) target = $region5
  $region4: #{_lambda_.45} parent=0 // pred_region
    _
  $region5: #{_lambda_.45} parent=0 // pred_fallthru
    _
  // Predicated region
  $region6: #{_lambda_.45} parent=0 // pred_check
    _
  $region7: #{_lambda_.45} parent=0 // pred_check_branch
    %11 = sbr.rel (0) target = $region9
  $region8: #{_lambda_.45} parent=0 // pred_region
    _
  $region9: #{_lambda_.45} parent=0 // pred_fallthru
    _
  // Predicated region
  $region10: #{_lambda_.45} parent=0 // pred_check
    _
  $region11: #{_lambda_.45} parent=0 // pred_check_branch
    %13 = sbr.rel (0) target = $region13
  $region12: #{_lambda_.45} parent=0 // pred_region
    _
  $region13: #{_lambda_.45} parent=0 // pred_fallthru
    _
  %p15 = scmp.eq.s32.totalorder 0, 0
  // Predicated region
  $region14: #{_lambda_.45} parent=0 // pred_check
    %p16 = pneg %p15
  $region15: #{_lambda_.45} parent=0 // pred_check_branch
    %18 = sbr.rel (%p16) target = $region17
  $region16: #{_lambda_.45} parent=0 // pred_region
    %vm19 = vcmask 523264
    %20 = vst.msk [vmem:[#allocation2] sm:$0xff] %vm19, 0.0
    %21 = vst.msk [vmem:[#allocation2 + $0x8] sm:$0xff] %vm19, 0.0
  $region17: #{_lambda_.45} parent=0 // pred_fallthru
    _
  %v22 = vld [vmem:[#allocation2] sm:$0xff]
  %v23 = vld [vmem:[#allocation2 + $0x8] sm:$0xff]
  %v24 = vld [vmem:[%s0] sm:$0xf]
  %v25 = vld [vmem:[%s0 + $0x4] sm:$0xf]
  %v26 = vld [vmem:[%s1] sm:$0xf]
  %v27 = vld [vmem:[%s1 + $0x4] sm:$0xf]
  %v28 = vld [vmem:[%s1 + $0x8] sm:$0xf]
  %v29 = vld [vmem:[%s1 + $0xc] sm:$0xf]
  %v32 = vunpack.c.l.b16 %v24
  %v33 = vunpack.c.l.b16 %v25
  %v34 = vpack.c.b16 %v33, %v32
  %v39 = vunpack.c.l.b16 %v26
  %v40 = vunpack.c.l.b16 %v27
  %v41 = vunpack.c.l.b16 %v28
  %v42 = vunpack.c.l.b16 %v29
  %v43 = vpack.c.b16 %v40, %v39
  %v44 = vpack.c.b16 %v42, %v41
  %vm47 = vcmask 261120
  %v49 = vsel %vm47, %v34, 0
  %51 = vmatpush.bf16.msra.mxu0 0
  %52 = vmatpush.bf16.msra.mxu0 0
  %53 = vmatpush.bf16.msra.mxu0 0
  %54 = vmatpush.bf16.msra.mxu0 0
  %55 = vmatpush.bf16.msra.mxu0 0
  %56 = vmatpush.bf16.msra.mxu0 0
  %57 = vmatpush.bf16.msra.mxu0 %v44
  %58 = vmatpush.bf16.msra.mxu0 %v43
  %59 = vmatmul.bf16.gmra.mxu0 %v49
  %v60 = vpop.f32.mrf.mxu0
  %v61 = vadd.f32 0.0, %v60
  %v62 = vpop.f32.mrf.mxu0
  %v63 = vadd.f32 0.0, %v62
  %64 = vdwg.mxu0
  %v65 = vadd.f32 %v22, %v61
  %v66 = vadd.f32 %v23, %v63
  %vm67 = vcmask 523264
  %68 = vst.msk [vmem:[#allocation2] sm:$0xff] %vm67, %v65
  %69 = vst.msk [vmem:[#allocation2 + $0x8] sm:$0xff] %vm67, %v66
  // Predicated region
  $region18: #{_lambda_.45} parent=0 // pred_check
    %p70 = pneg %p15
  $region19: #{_lambda_.45} parent=0 // pred_check_branch
    %72 = sbr.rel (%p70) target = $region21
  $region20: #{_lambda_.45} parent=0 // pred_region
    %v73 = vld [vmem:[#allocation2] sm:$0xff]
    %v74 = vld [vmem:[#allocation2 + $0x8] sm:$0xff]
    %v75 = vld [vmem:[%s2] sm:$0x1]
    %v77 = vperm.slane %v75, 0
    %v79 = vadd.f32 %v73, %v77
    %v80 = vadd.f32 %v74, %v77
    %v81 = vmax.f32 %v79, 0.0
    %v82 = vmax.f32 %v80, 0.0
    %v83 = vpack.c.bf16 %v81, %v81
    %v84 = vpack.c.bf16 %v82, %v82
    %vm85 = vcmask 519168
    %86 = vst.msk [vmem:[%s3] sm:$0xf] %vm85, %v83
    %87 = vst.msk [vmem:[%s3 + $0x4] sm:$0xf] %vm85, %v84
  $region21: #{_lambda_.45} parent=0 // pred_fallthru
    _
  // Predicated region
  $region22: #{_lambda_.45} parent=0 // pred_check
    _
  $region23: #{_lambda_.45} parent=0 // pred_check_branch
    %89 = sbr.rel (0) target = $region25
  $region24: #{_lambda_.45} parent=0 // pred_region
    _
  $region25: #{_lambda_.45} parent=0 // pred_fallthru
    _
  // Predicated region
  $region26: #{_lambda_.45} parent=0 // pred_check
    _
  $region27: #{_lambda_.45} parent=0 // pred_check_branch
    %91 = sbr.rel (0) target = $region29
  $region28: #{_lambda_.45} parent=0 // pred_region
    _
  $region29: #{_lambda_.45} parent=0 // pred_fallthru
    _

// kernel: _lambda_.61
$region0: #{_lambda_.61}
  #allocation0 [shape = 'u32[]', space=smem, size = 0x4, offset = 0x4, fixed_abs, tag = 'smem constant byte address 0x4 - core index']
  #allocation1 [shape = 'u32[72,128]{1,0:T(1,128)}', space=vmem, size = 0x9000, scoped, tag = 'internal scratch']
  #allocation2 [shape = 'f32[16,64]{1,0:T(8,128)}', space=vmem, size = 0x2000, scoped, tag = 'scratch operand']
  %s0 = inlined_call_operand.vmem [shape: bf16[16,32], index: 0, kind: input, shape index: {}]
  %s1 = inlined_call_operand.vmem [shape: bf16[32,64], index: 1, kind: input, shape index: {}]
  %s2 = inlined_call_operand.vmem [shape: f32[1,64], index: 2, kind: input, shape index: {}]
  %s3 = inlined_call_operand.vmem [shape: bf16[16,64], index: 3, kind: output, shape index: {}]
  %s4 = sld [smem:[#allocation0]]
  $region30: #{_lambda_.61} parent=0
    _
  %s6 = ssub.s32 1, %s4
  %s7 = scalar_select 0, %s6, %s4
  // Predicated region
  $region2: #{_lambda_.61} parent=0 // pred_check
    _
  $region3: #{_lambda_.61} parent=0 // pred_check_branch
    %9 = sbr.rel (0) target = $region5
  $region4: #{_lambda_.61} parent=0 // pred_region
    _
  $region5: #{_lambda_.61} parent=0 // pred_fallthru
    _
  // Predicated region
  $region6: #{_lambda_.61} parent=0 // pred_check
    _
  $region7: #{_lambda_.61} parent=0 // pred_check_branch
    %11 = sbr.rel (0) target = $region9
  $region8: #{_lambda_.61} parent=0 // pred_region
    _
  $region9: #{_lambda_.61} parent=0 // pred_fallthru
    _
  // Predicated region
  $region10: #{_lambda_.61} parent=0 // pred_check
    _
  $region11: #{_lambda_.61} parent=0 // pred_check_branch
    %13 = sbr.rel (0) target = $region13
  $region12: #{_lambda_.61} parent=0 // pred_region
    _
  $region13: #{_lambda_.61} parent=0 // pred_fallthru
    _
  %p15 = scmp.eq.s32.totalorder 0, 0
  // Predicated region
  $region14: #{_lambda_.61} parent=0 // pred_check
    %p16 = pneg %p15
  $region15: #{_lambda_.61} parent=0 // pred_check_branch
    %18 = sbr.rel (%p16) target = $region17
  $region16: #{_lambda_.61} parent=0 // pred_region
    %vm19 = vcmask 523264
    %20 = vst.msk [vmem:[#allocation2] sm:$0xff] %vm19, 0.0
    %21 = vst.msk [vmem:[#allocation2 + $0x8] sm:$0xff] %vm19, 0.0
  $region17: #{_lambda_.61} parent=0 // pred_fallthru
    _
  %v22 = vld [vmem:[#allocation2] sm:$0xff]
  %v23 = vld [vmem:[#allocation2 + $0x8] sm:$0xff]
  %v24 = vld [vmem:[%s0] sm:$0xf]
  %v25 = vld [vmem:[%s0 + $0x4] sm:$0xf]
  %v26 = vld [vmem:[%s1] sm:$0xf]
  %v27 = vld [vmem:[%s1 + $0x4] sm:$0xf]
  %v28 = vld [vmem:[%s1 + $0x8] sm:$0xf]
  %v29 = vld [vmem:[%s1 + $0xc] sm:$0xf]
  %v32 = vunpack.c.l.b16 %v24
  %v33 = vunpack.c.l.b16 %v25
  %v34 = vpack.c.b16 %v33, %v32
  %v39 = vunpack.c.l.b16 %v26
  %v40 = vunpack.c.l.b16 %v27
  %v41 = vunpack.c.l.b16 %v28
  %v42 = vunpack.c.l.b16 %v29
  %v43 = vpack.c.b16 %v40, %v39
  %v44 = vpack.c.b16 %v42, %v41
  %vm47 = vcmask 261120
  %v49 = vsel %vm47, %v34, 0
  %51 = vmatpush.bf16.msra.mxu0 0
  %52 = vmatpush.bf16.msra.mxu0 0
  %53 = vmatpush.bf16.msra.mxu0 0
  %54 = vmatpush.bf16.msra.mxu0 0
  %55 = vmatpush.bf16.msra.mxu0 0
  %56 = vmatpush.bf16.msra.mxu0 0
  %57 = vmatpush.bf16.msra.mxu0 %v44
  %58 = vmatpush.bf16.msra.mxu0 %v43
  %59 = vmatmul.bf16.gmra.mxu0 %v49
  %v60 = vpop.f32.mrf.mxu0
  %v61 = vadd.f32 0.0, %v60
  %v62 = vpop.f32.mrf.mxu0
  %v63 = vadd.f32 0.0, %v62
  %64 = vdwg.mxu0
  %v65 = vadd.f32 %v22, %v61
  %v66 = vadd.f32 %v23, %v63
  %vm67 = vcmask 523264
  %68 = vst.msk [vmem:[#allocation2] sm:$0xff] %vm67, %v65
  %69 = vst.msk [vmem:[#allocation2 + $0x8] sm:$0xff] %vm67, %v66
  // Predicated region
  $region18: #{_lambda_.61} parent=0 // pred_check
    %p70 = pneg %p15
  $region19: #{_lambda_.61} parent=0 // pred_check_branch
    %72 = sbr.rel (%p70) target = $region21
  $region20: #{_lambda_.61} parent=0 // pred_region
    %v73 = vld [vmem:[#allocation2] sm:$0xff]
    %v74 = vld [vmem:[#allocation2 + $0x8] sm:$0xff]
    %v75 = vld [vmem:[%s2] sm:$0x1]
    %v77 = vperm.slane %v75, 0
    %v79 = vadd.f32 %v73, %v77
    %v80 = vadd.f32 %v74, %v77
    %v81 = vpack.c.bf16 %v79, %v79
    %v82 = vpack.c.bf16 %v80, %v80
    %vm83 = vcmask 519168
    %84 = vst.msk [vmem:[%s3] sm:$0xf] %vm83, %v81
    %85 = vst.msk [vmem:[%s3 + $0x4] sm:$0xf] %vm83, %v82
  $region21: #{_lambda_.61} parent=0 // pred_fallthru
    _
  // Predicated region
  $region22: #{_lambda_.61} parent=0 // pred_check
    _
  $region23: #{_lambda_.61} parent=0 // pred_check_branch
    %87 = sbr.rel (0) target = $region25
  $region24: #{_lambda_.61} parent=0 // pred_region
    _
  $region25: #{_lambda_.61} parent=0 // pred_fallthru
    _
  // Predicated region
  $region26: #{_lambda_.61} parent=0 // pred_check
    _
  $region27: #{_lambda_.61} parent=0 // pred_check_branch
    %89 = sbr.rel (0) target = $region29
  $region28: #{_lambda_.61} parent=0 // pred_region
    _
  $region29: #{_lambda_.61} parent=0 // pred_fallthru
    _

// kernel: _lambda_.55
$region0: #{_lambda_.55}
  #allocation0 [shape = 'u32[]', space=smem, size = 0x4, offset = 0x4, fixed_abs, tag = 'smem constant byte address 0x4 - core index']
  #allocation1 [shape = 'u32[72,128]{1,0:T(1,128)}', space=vmem, size = 0x9000, scoped, tag = 'internal scratch']
  %s0 = inlined_call_operand.vmem [shape: bf16[16,32], index: 0, kind: input, shape index: {}]
  %s1 = inlined_call_operand.vmem [shape: f32[1,32], index: 1, kind: input, shape index: {}]
  %s2 = inlined_call_operand.vmem [shape: f32[1,32], index: 2, kind: input, shape index: {}]
  %s3 = inlined_call_operand.vmem [shape: bf16[16,32], index: 3, kind: output, shape index: {}]
  %s4 = sld [smem:[#allocation0]]
  $region22: #{_lambda_.55} parent=0
    _
  %s6 = ssub.s32 1, %s4
  %s7 = scalar_select 0, %s6, %s4
  // Predicated region
  $region2: #{_lambda_.55} parent=0 // pred_check
    _
  $region3: #{_lambda_.55} parent=0 // pred_check_branch
    %9 = sbr.rel (0) target = $region5
  $region4: #{_lambda_.55} parent=0 // pred_region
    _
  $region5: #{_lambda_.55} parent=0 // pred_fallthru
    _
  // Predicated region
  $region6: #{_lambda_.55} parent=0 // pred_check
    _
  $region7: #{_lambda_.55} parent=0 // pred_check_branch
    %11 = sbr.rel (0) target = $region9
  $region8: #{_lambda_.55} parent=0 // pred_region
    _
  $region9: #{_lambda_.55} parent=0 // pred_fallthru
    _
  // Predicated region
  $region10: #{_lambda_.55} parent=0 // pred_check
    _
  $region11: #{_lambda_.55} parent=0 // pred_check_branch
    %13 = sbr.rel (0) target = $region13
  $region12: #{_lambda_.55} parent=0 // pred_region
    _
  $region13: #{_lambda_.55} parent=0 // pred_fallthru
    _
  %v14 = vld [vmem:[%s0] sm:$0xf]
  %v15 = vld [vmem:[%s0 + $0x4] sm:$0xf]
  %v16 = vunpack.c.l.bf16 %v14
  %v17 = vunpack.c.l.bf16 %v15
  %vm18 = vcmask 261120
  %v19 = vsel %vm18, %v16, 0.0
  %20 = vadd.xlane.f32.xlu0 %v19
  %v21 = vpop.xlane.xlu0 %20
  %v22 = vsel %vm18, %v17, 0.0
  %23 = vadd.xlane.f32.xlu0 %v22
  %v24 = vpop.xlane.xlu0 %23
  %v25 = vrcp.pop 32.0
  %v26 = vmul.f32 32.0, %v25
  %v27 = vsub.f32 1.0, %v26
  %v28 = vmul.f32 %v25, %v27
  %v29 = vadd.f32 %v25, %v28
  %vm30 = vweird.f32 %v25
  %v31 = vsel %vm30, %v25, %v29
  %v32 = vmul.f32 %v21, %v31
  %v33 = vmul.f32 %v24, %v31
  %v34 = vsub.f32 %v16, %v32
  %v35 = vsub.f32 %v17, %v33
  %v36 = vmul.f32 %v34, %v34
  %v37 = vmul.f32 %v35, %v35
  %v38 = vsel %vm18, %v36, 0.0
  %39 = vadd.xlane.f32.xlu0 %v38
  %v40 = vpop.xlane.xlu0 %39
  %v41 = vsel %vm18, %v37, 0.0
  %42 = vadd.xlane.f32.xlu0 %v41
  %v43 = vpop.xlane.xlu0 %42
  %v44 = vmul.f32 %v40, %v31
  %v45 = vmul.f32 %v43, %v31
  %v46 = vadd.f32 %v44, 1e-05
  %v47 = vadd.f32 %v45, 1e-05
  %v48 = vrsqrt.pop %v46
  %v49 = vmul.f32 %v48, %v46
  %v50 = vmul.f32 %v49, %v48
  %v51 = vmul.f32 0.5, %v50
  %v52 = vsub.f32 1.5, %v51
  %v53 = vmul.f32 %v48, %v52
  %vm54 = vweird.f32 %v46
  %vm55 = vweird.f32 %v48
  %vm56 = vmor %vm54, %vm55
  %v57 = vsel %vm56, %v48, %v53
  %v58 = vrsqrt.pop %v47
  %v59 = vmul.f32 %v58, %v47
  %v60 = vmul.f32 %v59, %v58
  %v61 = vmul.f32 0.5, %v60
  %v62 = vsub.f32 1.5, %v61
  %v63 = vmul.f32 %v58, %v62
  %vm64 = vweird.f32 %v47
  %vm65 = vweird.f32 %v58
  %vm66 = vmor %vm64, %vm65
  %v67 = vsel %vm66, %v58, %v63
  %v68 = vmul.f32 %v34, %v57
  %v69 = vmul.f32 %v35, %v67
  %v70 = vld [vmem:[%s1] sm:$0x1]
  %v72 = vperm.slane %v70, 0
  %v74 = vmul.f32 %v68, %v72
  %v75 = vmul.f32 %v69, %v72
  %v76 = vld [vmem:[%s2] sm:$0x1]
  %v78 = vperm.slane %v76, 0
  %v80 = vadd.f32 %v74, %v78
  %v81 = vadd.f32 %v75, %v78
  %v82 = vpack.c.bf16 %v80, %v80
  %v83 = vpack.c.bf16 %v81, %v81
  %vm84 = vcmask 257024
  %85 = vst.msk [vmem:[%s3] sm:$0xf] %vm84, %v82
  %86 = vst.msk [vmem:[%s3 + $0x4] sm:$0xf] %vm84, %v83
  // Predicated region
  $region14: #{_lambda_.55} parent=0 // pred_check
    _
  $region15: #{_lambda_.55} parent=0 // pred_check_branch
    %88 = sbr.rel (0) target = $region17
  $region16: #{_lambda_.55} parent=0 // pred_region
    _
  $region17: #{_lambda_.55} parent=0 // pred_fallthru
    _
  // Predicated region
  $region18: #{_lambda_.55} parent=0 // pred_check
    _
  $region19: #{_lambda_.55} parent=0 // pred_check_branch
    %90 = sbr.rel (0) target = $region21
  $region20: #{_lambda_.55} parent=0 // pred_region
    _
  $region21: #{_lambda_.55} parent=0 // pred_fallthru
    _

// kernel: _lambda_.59
$region0: #{_lambda_.59}
  #allocation0 [shape = 'u32[]', space=smem, size = 0x4, offset = 0x4, fixed_abs, tag = 'smem constant byte address 0x4 - core index']
  #allocation1 [shape = 'u32[72,128]{1,0:T(1,128)}', space=vmem, size = 0x9000, scoped, tag = 'internal scratch']
  %s0 = inlined_call_operand.vmem [shape: bf16[16,32], index: 0, kind: input, shape index: {}]
  %s1 = inlined_call_operand.vmem [shape: bf16[16,32], index: 1, kind: input, shape index: {}]
  %s2 = inlined_call_operand.hbm [shape: f32[1,32], index: 2, kind: input, shape index: {}]
  %s3 = inlined_call_operand.hbm [shape: f32[1,32], index: 3, kind: input, shape index: {}]
  %s4 = inlined_call_operand.vmem [shape: bf16[16,32], index: 4, kind: output, shape index: {}]
  %s5 = sld [smem:[#allocation0]]
  $region34: #{_lambda_.59} parent=0
    _
  %s7 = ssub.s32 1, %s5
  %s8 = scalar_select 0, %s7, %s5
  $region1: #{_lambda_.59} parent=0
    #allocation2 [shape = 'u8[512]{0}', space=vmem, size = 0x400, scoped, tag = 'input window, operand 2, single buffered']
    #allocation3 [shape = 's32[1]{0}', space=sflag, size = 0x4, scoped, tag = 'scoped memory for _lambda_.59']
    #allocation4 [shape = 'u8[512]{0}', space=vmem, size = 0x400, scoped, tag = 'input window, operand 3, single buffered']
    #allocation5 [shape = 's32[1]{0}', space=sflag, size = 0x4, scoped, tag = 'scoped memory for _lambda_.59']
    %9 = vsyncpa [#allocation3], 0
    %10 = vsyncpa [#allocation5], 0
    // Predicated region
    $region2: #{_lambda_.59} parent=1 // pred_check
      _
    $region3: #{_lambda_.59} parent=1 // pred_check_branch
      %12 = sbr.rel (0) target = $region5
    $region4: #{_lambda_.59} parent=1 // pred_region
      _
    $region5: #{_lambda_.59} parent=1 // pred_fallthru
      _
    // Predicated region
    $region6: #{_lambda_.59} parent=1 // pred_check
      _
    $region7: #{_lambda_.59} parent=1 // pred_check_branch
      %14 = sbr.rel (0) target = $region9
    $region8: #{_lambda_.59} parent=1 // pred_region
      _
    $region9: #{_lambda_.59} parent=1 // pred_fallthru
      _
    // Predicated region
    $region10: #{_lambda_.59} parent=1 // pred_check
      _
    $region11: #{_lambda_.59} parent=1 // pred_check_branch
      %16 = sbr.rel (0) target = $region13
    $region12: #{_lambda_.59} parent=1 // pred_region
      %18 = vsyncadd [#allocation3], 0
      %s20 = sshll.u32 %s2, 4
      %s21 = int_to_ptr.hbm [resolvable:$true] %s20
      %s22 = sshll.u32 [#allocation2], 4
      %s23 = int_to_ptr.vmem [resolvable:$true] %s22
      %25 = dma.hbm_to_vmem [thread:$0]  %s21, 16, %s23, [#allocation3]
    $region13: #{_lambda_.59} parent=1 // pred_fallthru
      _
    // Predicated region
    $region14: #{_lambda_.59} parent=1 // pred_check
      _
    $region15: #{_lambda_.59} parent=1 // pred_check_branch
      %27 = sbr.rel (0) target = $region17
    $region16: #{_lambda_.59} parent=1 // pred_region
      %29 = vsyncadd [#allocation5], 0
      %s31 = sshll.u32 %s3, 4
      %s32 = int_to_ptr.hbm [resolvable:$true] %s31
      %s33 = sshll.u32 [#allocation4], 4
      %s34 = int_to_ptr.vmem [resolvable:$true] %s33
      %36 = dma.hbm_to_vmem [thread:$0]  %s32, 16, %s34, [#allocation5]
    $region17: #{_lambda_.59} parent=1 // pred_fallthru
      _
    // Predicated region
    $region18: #{_lambda_.59} parent=1 // pred_check
      _
    $region19: #{_lambda_.59} parent=1 // pred_check_branch
      %38 = sbr.rel (0) target = $region21
    $region20: #{_lambda_.59} parent=1 // pred_region
      %40 = dma.done [#allocation3], 16
    $region21: #{_lambda_.59} parent=1 // pred_fallthru
      _
    // Predicated region
    $region22: #{_lambda_.59} parent=1 // pred_check
      _
    $region23: #{_lambda_.59} parent=1 // pred_check_branch
      %42 = sbr.rel (0) target = $region25
    $region24: #{_lambda_.59} parent=1 // pred_region
      %44 = dma.done [#allocation5], 16
    $region25: #{_lambda_.59} parent=1 // pred_fallthru
      _
    %v45 = vld [vmem:[%s0] sm:$0xf]
    %v46 = vld [vmem:[%s0 + $0x4] sm:$0xf]
    %v47 = vunpack.c.l.bf16 %v45
    %v48 = vunpack.c.l.bf16 %v46
    %v49 = vld [vmem:[%s1] sm:$0xf]
    %v50 = vld [vmem:[%s1 + $0x4] sm:$0xf]
    %v51 = vunpack.c.l.bf16 %v49
    %v52 = vunpack.c.l.bf16 %v50
    %v53 = vadd.f32 %v47, %v51
    %v54 = vadd.f32 %v48, %v52
    %vm55 = vcmask 261120
    %v56 = vsel %vm55, %v53, 0.0
    %57 = vadd.xlane.f32.xlu0 %v56
    %v58 = vpop.xlane.xlu0 %57
    %v59 = vsel %vm55, %v54, 0.0
    %60 = vadd.xlane.f32.xlu0 %v59
    %v61 = vpop.xlane.xlu0 %60
    %v62 = vrcp.pop 32.0
    %v63 = vmul.f32 32.0, %v62
    %v64 = vsub.f32 1.0, %v63
    %v65 = vmul.f32 %v62, %v64
    %v66 = vadd.f32 %v62, %v65
    %vm67 = vweird.f32 %v62
    %v68 = vsel %vm67, %v62, %v66
    %v69 = vmul.f32 %v58, %v68
    %v70 = vmul.f32 %v61, %v68
    %v71 = vsub.f32 %v53, %v69
    %v72 = vsub.f32 %v54, %v70
    %v73 = vmul.f32 %v71, %v71
    %v74 = vmul.f32 %v72, %v72
    %v75 = vsel %vm55, %v73, 0.0
    %76 = vadd.xlane.f32.xlu0 %v75
    %v77 = vpop.xlane.xlu0 %76
    %v78 = vsel %vm55, %v74, 0.0
    %79 = vadd.xlane.f32.xlu0 %v78
    %v80 = vpop.xlane.xlu0 %79
    %v81 = vmul.f32 %v77, %v68
    %v82 = vmul.f32 %v80, %v68
    %v83 = vadd.f32 %v81, 1e-05
    %v84 = vadd.f32 %v82, 1e-05
    %v85 = vrsqrt.pop %v83
    %v86 = vmul.f32 %v85, %v83
    %v87 = vmul.f32 %v86, %v85
    %v88 = vmul.f32 0.5, %v87
    %v89 = vsub.f32 1.5, %v88
    %v90 = vmul.f32 %v85, %v89
    %vm91 = vweird.f32 %v83
    %vm92 = vweird.f32 %v85
    %vm93 = vmor %vm91, %vm92
    %v94 = vsel %vm93, %v85, %v90
    %v95 = vrsqrt.pop %v84
    %v96 = vmul.f32 %v95, %v84
    %v97 = vmul.f32 %v96, %v95
    %v98 = vmul.f32 0.5, %v97
    %v99 = vsub.f32 1.5, %v98
    %v100 = vmul.f32 %v95, %v99
    %vm101 = vweird.f32 %v84
    %vm102 = vweird.f32 %v95
    %vm103 = vmor %vm101, %vm102
    %v104 = vsel %vm103, %v95, %v100
    %v105 = vmul.f32 %v71, %v94
    %v106 = vmul.f32 %v72, %v104
    %v107 = vld [vmem:[#allocation2] sm:$0x1]
    %v109 = vperm.slane %v107, 0
    %v111 = vmul.f32 %v105, %v109
    %v112 = vmul.f32 %v106, %v109
    %v113 = vld [vmem:[#allocation4] sm:$0x1]
    %v115 = vperm.slane %v113, 0
    %v117 = vadd.f32 %v111, %v115
    %v118 = vadd.f32 %v112, %v115
    %v119 = vpack.c.bf16 %v117, %v117
    %v120 = vpack.c.bf16 %v118, %v118
    %vm121 = vcmask 257024
    %122 = vst.msk [vmem:[%s4] sm:$0xf] %vm121, %v119
    %123 = vst.msk [vmem:[%s4 + $0x4] sm:$0xf] %vm121, %v120
    // Predicated region
    $region26: #{_lambda_.59} parent=1 // pred_check
      _
    $region27: #{_lambda_.59} parent=1 // pred_check_branch
      %125 = sbr.rel (0) target = $region29
    $region28: #{_lambda_.59} parent=1 // pred_region
      _
    $region29: #{_lambda_.59} parent=1 // pred_fallthru
      _
    // Predicated region
    $region30: #{_lambda_.59} parent=1 // pred_check
      _
    $region31: #{_lambda_.59} parent=1 // pred_check_branch
      %127 = sbr.rel (0) target = $region33
    $region32: #{_lambda_.59} parent=1 // pred_region
      _
    $region33: #{_lambda_.59} parent=1 // pred_fallthru
      _
    %128 = vsyncpa [#allocation3], 1
    %129 = vsyncpa [#allocation5], 1

// kernel: _lambda_.58
$region0: #{_lambda_.58}
  #allocation0 [shape = 'u32[]', space=smem, size = 0x4, offset = 0x4, fixed_abs, tag = 'smem constant byte address 0x4 - core index']
  #allocation1 [shape = 'u32[72,128]{1,0:T(1,128)}', space=vmem, size = 0x9000, scoped, tag = 'internal scratch']
  #allocation2 [shape = 'f32[16,32]{1,0:T(8,128)}', space=vmem, size = 0x2000, scoped, tag = 'scratch operand']
  %s0 = inlined_call_operand.vmem [shape: bf16[16,32], index: 0, kind: input, shape index: {}]
  %s1 = inlined_call_operand.vmem [shape: bf16[32,32], index: 1, kind: input, shape index: {}]
  %s2 = inlined_call_operand.hbm [shape: f32[1,32], index: 2, kind: input, shape index: {}]
  %s3 = inlined_call_operand.vmem [shape: bf16[16,32], index: 3, kind: output, shape index: {}]
  %s4 = sld [smem:[#allocation0]]
  $region34: #{_lambda_.58} parent=0
    _
  %s6 = ssub.s32 1, %s4
  %s7 = scalar_select 0, %s6, %s4
  $region1: #{_lambda_.58} parent=0
    #allocation3 [shape = 'u8[512]{0}', space=vmem, size = 0x400, scoped, tag = 'input window, operand 2, single buffered']
    #allocation4 [shape = 's32[1]{0}', space=sflag, size = 0x4, scoped, tag = 'scoped memory for _lambda_.58']
    %8 = vsyncpa [#allocation4], 0
    // Predicated region
    $region2: #{_lambda_.58} parent=1 // pred_check
      _
    $region3: #{_lambda_.58} parent=1 // pred_check_branch
      %10 = sbr.rel (0) target = $region5
    $region4: #{_lambda_.58} parent=1 // pred_region
      _
    $region5: #{_lambda_.58} parent=1 // pred_fallthru
      _
    // Predicated region
    $region6: #{_lambda_.58} parent=1 // pred_check
      _
    $region7: #{_lambda_.58} parent=1 // pred_check_branch
      %12 = sbr.rel (0) target = $region9
    $region8: #{_lambda_.58} parent=1 // pred_region
      _
    $region9: #{_lambda_.58} parent=1 // pred_fallthru
      _
    // Predicated region
    $region10: #{_lambda_.58} parent=1 // pred_check
      _
    $region11: #{_lambda_.58} parent=1 // pred_check_branch
      %14 = sbr.rel (0) target = $region13
    $region12: #{_lambda_.58} parent=1 // pred_region
      %16 = vsyncadd [#allocation4], 0
      %s18 = sshll.u32 %s2, 4
      %s19 = int_to_ptr.hbm [resolvable:$true] %s18
      %s20 = sshll.u32 [#allocation3], 4
      %s21 = int_to_ptr.vmem [resolvable:$true] %s20
      %23 = dma.hbm_to_vmem [thread:$0]  %s19, 16, %s21, [#allocation4]
    $region13: #{_lambda_.58} parent=1 // pred_fallthru
      _
    // Predicated region
    $region14: #{_lambda_.58} parent=1 // pred_check
      _
    $region15: #{_lambda_.58} parent=1 // pred_check_branch
      %25 = sbr.rel (0) target = $region17
    $region16: #{_lambda_.58} parent=1 // pred_region
      %27 = dma.done [#allocation4], 16
    $region17: #{_lambda_.58} parent=1 // pred_fallthru
      _
    %p29 = scmp.eq.s32.totalorder 0, 0
    // Predicated region
    $region18: #{_lambda_.58} parent=1 // pred_check
      %p30 = pneg %p29
    $region19: #{_lambda_.58} parent=1 // pred_check_branch
      %32 = sbr.rel (%p30) target = $region21
    $region20: #{_lambda_.58} parent=1 // pred_region
      %vm33 = vcmask 261120
      %34 = vst.msk [vmem:[#allocation2] sm:$0xff] %vm33, 0.0
      %35 = vst.msk [vmem:[#allocation2 + $0x8] sm:$0xff] %vm33, 0.0
    $region21: #{_lambda_.58} parent=1 // pred_fallthru
      _
    %v36 = vld [vmem:[#allocation2] sm:$0xff]
    %v37 = vld [vmem:[#allocation2 + $0x8] sm:$0xff]
    %v38 = vld [vmem:[%s0] sm:$0xf]
    %v39 = vld [vmem:[%s0 + $0x4] sm:$0xf]
    %v40 = vld [vmem:[%s1] sm:$0xf]
    %v41 = vld [vmem:[%s1 + $0x4] sm:$0xf]
    %v42 = vld [vmem:[%s1 + $0x8] sm:$0xf]
    %v43 = vld [vmem:[%s1 + $0xc] sm:$0xf]
    %v46 = vunpack.c.l.b16 %v38
    %v47 = vunpack.c.l.b16 %v39
    %v48 = vpack.c.b16 %v47, %v46
    %v53 = vunpack.c.l.b16 %v40
    %v54 = vunpack.c.l.b16 %v41
    %v55 = vunpack.c.l.b16 %v42
    %v56 = vunpack.c.l.b16 %v43
    %v57 = vpack.c.b16 %v54, %v53
    %v58 = vpack.c.b16 %v56, %v55
    %vm61 = vcmask 261120
    %v63 = vsel %vm61, %v48, 0
    %65 = vmatpush.bf16.msra.mxu0 0
    %66 = vmatpush.bf16.msra.mxu0 0
    %67 = vmatpush.bf16.msra.mxu0 0
    %68 = vmatpush.bf16.msra.mxu0 0
    %69 = vmatpush.bf16.msra.mxu0 0
    %70 = vmatpush.bf16.msra.mxu0 0
    %71 = vmatpush.bf16.msra.mxu0 %v58
    %72 = vmatpush.bf16.msra.mxu0 %v57
    %73 = vmatmul.bf16.gmra.mxu0 %v63
    %v74 = vpop.f32.mrf.mxu0
    %v75 = vadd.f32 0.0, %v74
    %v76 = vpop.f32.mrf.mxu0
    %v77 = vadd.f32 0.0, %v76
    %78 = vdwg.mxu0
    %v79 = vadd.f32 %v36, %v75
    %v80 = vadd.f32 %v37, %v77
    %81 = vst.msk [vmem:[#allocation2] sm:$0xff] %vm61, %v79
    %82 = vst.msk [vmem:[#allocation2 + $0x8] sm:$0xff] %vm61, %v80
    // Predicated region
    $region22: #{_lambda_.58} parent=1 // pred_check
      %p83 = pneg %p29
    $region23: #{_lambda_.58} parent=1 // pred_check_branch
      %85 = sbr.rel (%p83) target = $region25
    $region24: #{_lambda_.58} parent=1 // pred_region
      %v86 = vld [vmem:[#allocation2] sm:$0xff]
      %v87 = vld [vmem:[#allocation2 + $0x8] sm:$0xff]
      %v88 = vld [vmem:[#allocation3] sm:$0x1]
      %v90 = vperm.slane %v88, 0
      %v92 = vadd.f32 %v86, %v90
      %v93 = vadd.f32 %v87, %v90
      %v94 = vpack.c.bf16 %v92, %v92
      %v95 = vpack.c.bf16 %v93, %v93
      %vm96 = vcmask 257024
      %97 = vst.msk [vmem:[%s3] sm:$0xf] %vm96, %v94
      %98 = vst.msk [vmem:[%s3 + $0x4] sm:$0xf] %vm96, %v95
    $region25: #{_lambda_.58} parent=1 // pred_fallthru
      _
    // Predicated region
    $region26: #{_lambda_.58} parent=1 // pred_check
      _
    $region27: #{_lambda_.58} parent=1 // pred_check_branch
      %100 = sbr.rel (0) target = $region29
    $region28: #{_lambda_.58} parent=1 // pred_region
      _
    $region29: #{_lambda_.58} parent=1 // pred_fallthru
      _
    // Predicated region
    $region30: #{_lambda_.58} parent=1 // pred_check
      _
    $region31: #{_lambda_.58} parent=1 // pred_check_branch
      %102 = sbr.rel (0) target = $region33
    $region32: #{_lambda_.58} parent=1 // pred_region
      _
    $region33: #{_lambda_.58} parent=1 // pred_fallthru
      _
    %103 = vsyncpa [#allocation4], 1

// kernel: _lambda_.62
$region0: #{_lambda_.62}
  #allocation0 [shape = 'u32[]', space=smem, size = 0x4, offset = 0x4, fixed_abs, tag = 'smem constant byte address 0x4 - core index']
  #allocation1 [shape = 'u32[72,128]{1,0:T(1,128)}', space=vmem, size = 0x9000, scoped, tag = 'internal scratch']
  %s0 = inlined_call_operand.vmem [shape: bf16[2,8,32], index: 0, kind: input, shape index: {}]
  %s1 = inlined_call_operand.vmem [shape: bf16[2,8,64], index: 1, kind: input, shape index: {}]
  %s2 = inlined_call_operand.vmem [shape: bf16[2,8,32], index: 2, kind: output, shape index: {}]
  %s3 = sld [smem:[#allocation0]]
  $region41: #{_lambda_.62} parent=0
    _
  %s5 = ssub.s32 1, %s3
  %s6 = scalar_select 0, %s5, %s3
  loop: start=0, step=1, limit=4
  $region2: #{_lambda_.62} parent=0 // loop_pre_header
    _
  $region3: #{_lambda_.62} parent=0 // loop_header
    %s8 = sphi 0, %s12
    %p9 = scmp.ge.s32.totalorder %s8, 4
    %s18 = sphi 0, %s20
    %s21 = sphi 0, %s18
    %s22 = sphi 0, %s21
    %s38 = sphi 0, %s22
    %s44 = sphi 0, %s46
    %s47 = sphi 0, %s44
    %s48 = sphi 0, %s47
    %s64 = sphi 0, %s48
    %s70 = sphi 0, %s72
    %s73 = sphi 0, %s70
    %s74 = sphi 0, %s73
    %s90 = sphi 0, %s74
  $region4: #{_lambda_.62} parent=0 // loop_header_branch
    %11 = sbr.rel (%p9) target = $region8
  $region5: #{_lambda_.62} parent=0 // loop_body
    %s13 = ssub.s32 %s8, 1
    %s14 = ssub.s32 %s8, 2
    %s15 = sadd.s32 %s8, 1
    %s16 = ssub.s32 %s8, %s15
    %p17 = scmp.eq.s32.totalorder %s16, 0
    %s19 = sadd.s32 %s18, 1
    %s20 = scalar_select %p17, %s18, %s19
    %p23 = pneg %p17
    %p24 = scmp.eq.s32.totalorder %s8, 1
    %p25 = por %p23, %p24
    %p26 = scmp.ne.s32.totalorder %s18, %s21
    %p27 = scmp.eq.s32.totalorder %s8, 0
    %p28 = por %p26, %p27
    %p29 = scmp.ne.s32.totalorder %s18, %s21
    %p30 = scmp.eq.s32.totalorder %s13, 1
    %p31 = por %p29, %p30
    %p32 = scmp.ne.s32.totalorder %s21, %s22
    %p33 = scmp.eq.s32.totalorder %s13, 0
    %p34 = por %p32, %p33
    %p35 = scmp.ne.s32.totalorder %s21, %s22
    %p36 = scmp.eq.s32.totalorder %s14, 1
    %p37 = por %p35, %p36
    %p39 = scmp.ne.s32.totalorder %s22, %s38
    %p40 = scmp.eq.s32.totalorder %s14, 0
    %p41 = por %p39, %p40
    %s42 = ssub.s32 %s8, %s15
    %p43 = scmp.eq.s32.totalorder %s42, 0
    %s45 = sadd.s32 %s44, 1
    %s46 = scalar_select %p43, %s44, %s45
    %p49 = pneg %p43
    %p50 = scmp.eq.s32.totalorder %s8, 1
    %p51 = por %p49, %p50
    %p52 = scmp.ne.s32.totalorder %s44, %s47
    %p53 = scmp.eq.s32.totalorder %s8, 0
    %p54 = por %p52, %p53
    %p55 = scmp.ne.s32.totalorder %s44, %s47
    %p56 = scmp.eq.s32.totalorder %s13, 1
    %p57 = por %p55, %p56
    %p58 = scmp.ne.s32.totalorder %s47, %s48
    %p59 = scmp.eq.s32.totalorder %s13, 0
    %p60 = por %p58, %p59
    %p61 = scmp.ne.s32.totalorder %s47, %s48
    %p62 = scmp.eq.s32.totalorder %s14, 1
    %p63 = por %p61, %p62
    %p65 = scmp.ne.s32.totalorder %s48, %s64
    %p66 = scmp.eq.s32.totalorder %s14, 0
    %p67 = por %p65, %p66
    %s68 = ssub.s32 %s8, %s15
    %p69 = scmp.eq.s32.totalorder %s68, 0
    %s71 = sadd.s32 %s70, 1
    %s72 = scalar_select %p69, %s70, %s71
    %p75 = pneg %p69
    %p76 = scmp.eq.s32.totalorder %s8, 1
    %p77 = por %p75, %p76
    %p78 = scmp.ne.s32.totalorder %s70, %s73
    %p79 = scmp.eq.s32.totalorder %s8, 0
    %p80 = por %p78, %p79
    %p81 = scmp.ne.s32.totalorder %s70, %s73
    %p82 = scmp.eq.s32.totalorder %s13, 1
    %p83 = por %p81, %p82
    %p84 = scmp.ne.s32.totalorder %s73, %s74
    %p85 = scmp.eq.s32.totalorder %s13, 0
    %p86 = por %p84, %p85
    %p87 = scmp.ne.s32.totalorder %s73, %s74
    %p88 = scmp.eq.s32.totalorder %s14, 1
    %p89 = por %p87, %p88
    %p91 = scmp.ne.s32.totalorder %s74, %s90
    %p92 = scmp.eq.s32.totalorder %s14, 0
    %p93 = por %p91, %p92
    %p94 = scmp.le.s32.totalorder 1, %s8
    %p95 = scmp.lt.s32.totalorder %s8, 3
    %p96 = pnand %p94, %p95
    %p97 = pneg %p96
    // Predicated region
    $region9: #{_lambda_.62} parent=5 // pred_check
      _
    $region10: #{_lambda_.62} parent=5 // pred_check_branch
      %99 = sbr.rel (%p96) target = $region12
    $region11: #{_lambda_.62} parent=5 // pred_region
      %s100 = ssub.s32 %s8, 1
    $region12: #{_lambda_.62} parent=5 // pred_fallthru
      _
    %p101 = scmp.lt.s32.totalorder %s8, 2
    // Predicated region
    $region13: #{_lambda_.62} parent=5 // pred_check
      %p102 = pneg %p101
    $region14: #{_lambda_.62} parent=5 // pred_check_branch
      %104 = sbr.rel (%p102) target = $region16
    $region15: #{_lambda_.62} parent=5 // pred_region
      // Predicated region
      $region17: #{_lambda_.62} parent=15 // pred_check
        %p105 = pneg %p28
      $region18: #{_lambda_.62} parent=15 // pred_check_branch
        %107 = sbr.rel (%p105) target = $region20
      $region19: #{_lambda_.62} parent=15 // pred_region
        %p108 = scmp.lt.s32.totalorder %s8, 1
        %s109 = scalar_select %p108, %s8, 1
        %s110 = smul.addr %s109, 4
        %s111 = scalar_lea.vmem %s0, %s110
      $region20: #{_lambda_.62} parent=15 // pred_fallthru
        _
      // Predicated region
      $region21: #{_lambda_.62} parent=15 // pred_check
        %p112 = pneg %p54
      $region22: #{_lambda_.62} parent=15 // pred_check_branch
        %114 = sbr.rel (%p112) target = $region24
      $region23: #{_lambda_.62} parent=15 // pred_region
        %p115 = scmp.lt.s32.totalorder %s8, 1
        %s116 = scalar_select %p115, %s8, 1
        %s117 = smul.addr %s116, 4
        %s118 = scalar_lea.vmem %s1, %s117
      $region24: #{_lambda_.62} parent=15 // pred_fallthru
        _
    $region16: #{_lambda_.62} parent=5 // pred_fallthru
      _
    %p119 = scmp.le.s32.totalorder 1, %s8
    %p120 = scmp.lt.s32.totalorder %s8, 3
    %p121 = pnand %p119, %p120
    %p122 = pneg %p121
    // Predicated region
    $region25: #{_lambda_.62} parent=5 // pred_check
      _
    $region26: #{_lambda_.62} parent=5 // pred_check_branch
      %124 = sbr.rel (%p121) target = $region28
    $region27: #{_lambda_.62} parent=5 // pred_region
      %s125 = ssub.s32 %s8, 1
      %p126 = scmp.lt.s32.totalorder %s13, 1
      %s127 = scalar_select %p126, %s13, 1
      %s128 = smul.addr %s127, 4
      %s129 = scalar_lea.vmem %s0, %s128
      %p130 = pneg %p34
      %p131 = pneg %p31
      %p132 = scmp.lt.s32.totalorder %s13, 1
      %s133 = scalar_select %p132, %s13, 1
      %s134 = smul.addr %s133, 4
      %s135 = scalar_lea.vmem %s1, %s134
      %p136 = pneg %p60
      %p137 = pneg %p57
      %p138 = pneg %p86
      %p139 = pneg %p83
      %p140 = scmp.lt.s32.totalorder %s13, 1
      %s141 = scalar_select %p140, %s13, 1
      %s142 = smul.addr %s141, 4
      %s143 = scalar_lea.vmem %s2, %s142
      %p144 = scmp.lt.s32.totalorder %s13, 1
      %s145 = scalar_select %p144, %s13, 1
      %s146 = smul.addr %s145, 4
      %s147 = scalar_lea.vmem %s0, %s146
      %p148 = scmp.lt.s32.totalorder %s13, 1
      %s149 = scalar_select %p148, %s13, 1
      %s150 = smul.addr %s149, 4
      %s151 = scalar_lea.vmem %s1, %s150
      %p152 = scmp.lt.s32.totalorder %s13, 1
      %s153 = scalar_select %p152, %s13, 1
      %s154 = smul.addr %s153, 4
      %s155 = scalar_lea.vmem %s2, %s154
      %v157 = vld [vmem:[%s147] sm:$0xf]
      %v158 = vld [vmem:[%s151] sm:$0xf]
      %v159 = vunpack.c.l.bf16 %v157
      %v160 = vmul.f32 %v159, 0.35351563
      %v161 = vpack.c.bf16 %v160, %v160
      %vm162 = vcmask 64512
      %v164 = vsel %vm162, %v161, 0
      %v167 = vsel %vm162, %v158, 0
      %169 = vmatpush.bf16.xpose.msra.mxu0 0
      %170 = vmatpush.bf16.xpose.msra.mxu0 0
      %171 = vmatpush.bf16.xpose.msra.mxu0 0
      %172 = vmatpush.bf16.xpose.msra.mxu0 0
      %173 = vmatpush.bf16.xpose.msra.mxu0 0
      %174 = vmatpush.bf16.xpose.msra.mxu0 0
      %175 = vmatpush.bf16.xpose.msra.mxu0 0
      %176 = vmatpush.bf16.xpose.msra.mxu0 %v167
      %177 = vmatmul.bf16.gmra.mxu0 %v164
      %v178 = vpop.f32.mrf.mxu0
      %v179 = vadd.f32 0.0, %v178
      %v180 = vpop.f32.mrf.mxu0
      %181 = vdwg.mxu0
      %v182 = vsel %vm162, %v179, -inf
      %183 = vmax.xlane.f32.xlu0 %v182
      %v184 = vpop.xlane.xlu0 %183
      %v185 = vsub.f32 %v179, %v184
      %v186 = vmul.f32 %v185, 1.442695
      %v187 = vpow.pop %v186
      %v188 = vsel %vm162, %v187, 0.0
      %189 = vadd.xlane.f32.xlu0 %v188
      %v190 = vpop.xlane.xlu0 %189
      %v191 = vrcp.pop %v190
      %v192 = vmul.f32 %v190, %v191
      %v193 = vsub.f32 1.0, %v192
      %v194 = vmul.f32 %v191, %v193
      %v195 = vadd.f32 %v191, %v194
      %vm196 = vweird.f32 %v190
      %vm197 = vweird.f32 %v191
      %vm198 = vmor %vm196, %vm197
      %v199 = vsel %vm198, %v191, %v195
      %v200 = vand.u32 2147483647, %v190
      %vm201 = vcmp.eq.f32.partialorder %v200, 8.507059e+37
      %v202 = vand.u32 %v190, 2147483648
      %v203 = vor.u32 1.1754944e-38, %v202
      %v204 = vsel %vm201, %v203, %v199
      %v205 = vmul.f32 %v187, %v204
      %v206 = vpack.c.bf16 %v205, %v205
      %v208 = vunpack.c.l.b16 %v158
      %v209 = vpack.c.b16 %v208, %v208
      %210 = vrot.lane.b32.xlu0 %v209, 96
      %v211 = vpop.permute.xlu0 %210
      %v213 = vsel %vm162, %v206, 0
      %vm215 = vcmask 1043456
      %v217 = vsel %vm215, %v211, 0
      %219 = vmatpush.bf16.msra.mxu0 0
      %220 = vmatpush.bf16.msra.mxu0 0
      %221 = vmatpush.bf16.msra.mxu0 0
      %222 = vmatpush.bf16.msra.mxu0 0
      %223 = vmatpush.bf16.msra.mxu0 0
      %224 = vmatpush.bf16.msra.mxu0 0
      %225 = vmatpush.bf16.msra.mxu0 0
      %226 = vmatpush.bf16.msra.mxu0 %v217
      %227 = vmatmul.bf16.gmra.mxu0 %v213
      %v228 = vpop.f32.mrf.mxu0
      %v229 = vadd.f32 0.0, %v228
      %v230 = vpop.f32.mrf.mxu0
      %231 = vdwg.mxu0
      %v233 = vunpack.c.l.b16 %v161
      %v234 = vpack.c.b16 %v233, %v233
      %235 = vrot.lane.b32.xlu0 %v234, 120
      %v236 = vpop.permute.xlu0 %235
      %237 = vrot.lane.b32.xlu0 %v209, 120
      %v238 = vpop.permute.xlu0 %237
      %v240 = vsel %vm162, %v236, 0
      %v243 = vsel %vm162, %v238, 0
      %245 = vmatpush.bf16.xpose.msra.mxu0 0
      %246 = vmatpush.bf16.xpose.msra.mxu0 0
      %247 = vmatpush.bf16.xpose.msra.mxu0 0
      %248 = vmatpush.bf16.xpose.msra.mxu0 0
      %249 = vmatpush.bf16.xpose.msra.mxu0 0
      %250 = vmatpush.bf16.xpose.msra.mxu0 0
      %251 = vmatpush.bf16.xpose.msra.mxu0 0
      %252 = vmatpush.bf16.xpose.msra.mxu0 %v243
      %253 = vmatmul.bf16.gmra.mxu0 %v240
      %v254 = vpop.f32.mrf.mxu0
      %v255 = vadd.f32 0.0, %v254
      %v256 = vpop.f32.mrf.mxu0
      %257 = vdwg.mxu0
      %v258 = vsel %vm162, %v255, -inf
      %259 = vmax.xlane.f32.xlu0 %v258
      %v260 = vpop.xlane.xlu0 %259
      %v261 = vsub.f32 %v255, %v260
      %v262 = vmul.f32 %v261, 1.442695
      %v263 = vpow.pop %v262
      %v264 = vsel %vm162, %v263, 0.0
      %265 = vadd.xlane.f32.xlu0 %v264
      %v266 = vpop.xlane.xlu0 %265
      %v267 = vrcp.pop %v266
      %v268 = vmul.f32 %v266, %v267
      %v269 = vsub.f32 1.0, %v268
      %v270 = vmul.f32 %v267, %v269
      %v271 = vadd.f32 %v267, %v270
      %vm272 = vweird.f32 %v266
      %vm273 = vweird.f32 %v267
      %vm274 = vmor %vm272, %vm273
      %v275 = vsel %vm274, %v267, %v271
      %v276 = vand.u32 2147483647, %v266
      %vm277 = vcmp.eq.f32.partialorder %v276, 8.507059e+37
      %v278 = vand.u32 %v266, 2147483648
      %v279 = vor.u32 1.1754944e-38, %v278
      %v280 = vsel %vm277, %v279, %v275
      %v281 = vmul.f32 %v263, %v280
      %v282 = vpack.c.bf16 %v281, %v281
      %283 = vrot.lane.b32.xlu0 %v209, 88
      %v284 = vpop.permute.xlu0 %283
      %v286 = vsel %vm162, %v282, 0
      %v289 = vsel %vm215, %v284, 0
      %291 = vmatpush.bf16.msra.mxu0 0
      %292 = vmatpush.bf16.msra.mxu0 0
      %293 = vmatpush.bf16.msra.mxu0 0
      %294 = vmatpush.bf16.msra.mxu0 0
      %295 = vmatpush.bf16.msra.mxu0 0
      %296 = vmatpush.bf16.msra.mxu0 0
      %297 = vmatpush.bf16.msra.mxu0 0
      %298 = vmatpush.bf16.msra.mxu0 %v289
      %299 = vmatmul.bf16.gmra.mxu0 %v286
      %v300 = vpop.f32.mrf.mxu0
      %v301 = vadd.f32 0.0, %v300
      %v302 = vpop.f32.mrf.mxu0
      %303 = vdwg.mxu0
      %304 = vrot.lane.b32.xlu0 %v234, 112
      %v305 = vpop.permute.xlu0 %304
      %306 = vrot.lane.b32.xlu0 %v209, 112
      %v307 = vpop.permute.xlu0 %306
      %v309 = vsel %vm162, %v305, 0
      %v312 = vsel %vm162, %v307, 0
      %314 = vmatpush.bf16.xpose.msra.mxu0 0
      %315 = vmatpush.bf16.xpose.msra.mxu0 0
      %316 = vmatpush.bf16.xpose.msra.mxu0 0
      %317 = vmatpush.bf16.xpose.msra.mxu0 0
      %318 = vmatpush.bf16.xpose.msra.mxu0 0
      %319 = vmatpush.bf16.xpose.msra.mxu0 0
      %320 = vmatpush.bf16.xpose.msra.mxu0 0
      %321 = vmatpush.bf16.xpose.msra.mxu0 %v312
      %322 = vmatmul.bf16.gmra.mxu0 %v309
      %v323 = vpop.f32.mrf.mxu0
      %v324 = vadd.f32 0.0, %v323
      %v325 = vpop.f32.mrf.mxu0
      %326 = vdwg.mxu0
      %v327 = vsel %vm162, %v324, -inf
      %328 = vmax.xlane.f32.xlu0 %v327
      %v329 = vpop.xlane.xlu0 %328
      %v330 = vsub.f32 %v324, %v329
      %v331 = vmul.f32 %v330, 1.442695
      %v332 = vpow.pop %v331
      %v333 = vsel %vm162, %v332, 0.0
      %334 = vadd.xlane.f32.xlu0 %v333
      %v335 = vpop.xlane.xlu0 %334
      %v336 = vrcp.pop %v335
      %v337 = vmul.f32 %v335, %v336
      %v338 = vsub.f32 1.0, %v337
      %v339 = vmul.f32 %v336, %v338
      %v340 = vadd.f32 %v336, %v339
      %vm341 = vweird.f32 %v335
      %vm342 = vweird.f32 %v336
      %vm343 = vmor %vm341, %vm342
      %v344 = vsel %vm343, %v336, %v340
      %v345 = vand.u32 2147483647, %v335
      %vm346 = vcmp.eq.f32.partialorder %v345, 8.507059e+37
      %v347 = vand.u32 %v335, 2147483648
      %v348 = vor.u32 1.1754944e-38, %v347
      %v349 = vsel %vm346, %v348, %v344
      %v350 = vmul.f32 %v332, %v349
      %v351 = vpack.c.bf16 %v350, %v350
      %352 = vrot.lane.b32.xlu0 %v209, 80
      %v353 = vpop.permute.xlu0 %352
      %v355 = vsel %vm162, %v351, 0
      %v358 = vsel %vm215, %v353, 0
      %360 = vmatpush.bf16.msra.mxu0 0
      %361 = vmatpush.bf16.msra.mxu0 0
      %362 = vmatpush.bf16.msra.mxu0 0
      %363 = vmatpush.bf16.msra.mxu0 0
      %364 = vmatpush.bf16.msra.mxu0 0
      %365 = vmatpush.bf16.msra.mxu0 0
      %366 = vmatpush.bf16.msra.mxu0 0
      %367 = vmatpush.bf16.msra.mxu0 %v358
      %368 = vmatmul.bf16.gmra.mxu0 %v355
      %v369 = vpop.f32.mrf.mxu0
      %v370 = vadd.f32 0.0, %v369
      %v371 = vpop.f32.mrf.mxu0
      %372 = vdwg.mxu0
      %373 = vrot.lane.b32.xlu0 %v234, 104
      %v374 = vpop.permute.xlu0 %373
      %375 = vrot.lane.b32.xlu0 %v209, 104
      %v376 = vpop.permute.xlu0 %375
      %v378 = vsel %vm162, %v374, 0
      %v381 = vsel %vm162, %v376, 0
      %383 = vmatpush.bf16.xpose.msra.mxu0 0
      %384 = vmatpush.bf16.xpose.msra.mxu0 0
      %385 = vmatpush.bf16.xpose.msra.mxu0 0
      %386 = vmatpush.bf16.xpose.msra.mxu0 0
      %387 = vmatpush.bf16.xpose.msra.mxu0 0
      %388 = vmatpush.bf16.xpose.msra.mxu0 0
      %389 = vmatpush.bf16.xpose.msra.mxu0 0
      %390 = vmatpush.bf16.xpose.msra.mxu0 %v381
      %391 = vmatmul.bf16.gmra.mxu0 %v378
      %v392 = vpop.f32.mrf.mxu0
      %v393 = vadd.f32 0.0, %v392
      %v394 = vpop.f32.mrf.mxu0
      %395 = vdwg.mxu0
      %v396 = vsel %vm162, %v393, -inf
      %397 = vmax.xlane.f32.xlu0 %v396
      %v398 = vpop.xlane.xlu0 %397
      %v399 = vsub.f32 %v393, %v398
      %v400 = vmul.f32 %v399, 1.442695
      %v401 = vpow.pop %v400
      %v402 = vsel %vm162, %v401, 0.0
      %403 = vadd.xlane.f32.xlu0 %v402
      %v404 = vpop.xlane.xlu0 %403
      %v405 = vrcp.pop %v404
      %v406 = vmul.f32 %v404, %v405
      %v407 = vsub.f32 1.0, %v406
      %v408 = vmul.f32 %v405, %v407
      %v409 = vadd.f32 %v405, %v408
      %vm410 = vweird.f32 %v404
      %vm411 = vweird.f32 %v405
      %vm412 = vmor %vm410, %vm411
      %v413 = vsel %vm412, %v405, %v409
      %v414 = vand.u32 2147483647, %v404
      %vm415 = vcmp.eq.f32.partialorder %v414, 8.507059e+37
      %v416 = vand.u32 %v404, 2147483648
      %v417 = vor.u32 1.1754944e-38, %v416
      %v418 = vsel %vm415, %v417, %v413
      %v419 = vmul.f32 %v401, %v418
      %v420 = vpack.c.bf16 %v419, %v419
      %421 = vrot.lane.b32.xlu0 %v209, 72
      %v422 = vpop.permute.xlu0 %421
      %v424 = vsel %vm162, %v420, 0
      %v427 = vsel %vm215, %v422, 0
      %429 = vmatpush.bf16.msra.mxu0 0
      %430 = vmatpush.bf16.msra.mxu0 0
      %431 = vmatpush.bf16.msra.mxu0 0
      %432 = vmatpush.bf16.msra.mxu0 0
      %433 = vmatpush.bf16.msra.mxu0 0
      %434 = vmatpush.bf16.msra.mxu0 0
      %435 = vmatpush.bf16.msra.mxu0 0
      %436 = vmatpush.bf16.msra.mxu0 %v427
      %437 = vmatmul.bf16.gmra.mxu0 %v424
      %v438 = vpop.f32.mrf.mxu0
      %v439 = vadd.f32 0.0, %v438
      %v440 = vpop.f32.mrf.mxu0
      %441 = vdwg.mxu0
      %443 = vrot.lane.b32.xlu0 %v301, 8
      %v444 = vpop.permute.xlu0 %443
      %447 = vrot.lane.b32.xlu0 %v370, 16
      %v448 = vpop.permute.xlu0 %447
      %451 = vrot.lane.b32.xlu0 %v439, 24
      %v452 = vpop.permute.xlu0 %451
      %v454 = vsel %vm162, %v229, %v444
      %vm455 = vcmask 130048
      %v456 = vsel %vm455, %v454, %v448
      %vm457 = vcmask 195584
      %v458 = vsel %vm457, %v456, %v452
      %v459 = vpack.c.bf16 %v458, %v458
      %vm460 = vcmask 257024
      %461 = vst.msk [vmem:[%s155] sm:$0xf] %vm460, %v459
      %p462 = scmp.lt.s32.totalorder %s13, 1
      %s463 = scalar_select %p462, %s13, 1
      %s464 = smul.addr %s463, 4
      %s465 = scalar_lea.vmem %s2, %s464
      // Predicated region
      $region29: #{_lambda_.62} parent=27 // pred_check
        %p466 = pneg %p83
      $region30: #{_lambda_.62} parent=27 // pred_check_branch
        %468 = sbr.rel (%p466) target = $region32
      $region31: #{_lambda_.62} parent=27 // pred_region
        _
      $region32: #{_lambda_.62} parent=27 // pred_fallthru
        _
    $region28: #{_lambda_.62} parent=5 // pred_fallthru
      _
    %p469 = scmp.le.s32.totalorder 2, %s8
    // Predicated region
    $region33: #{_lambda_.62} parent=5 // pred_check
      %p470 = pneg %p469
    $region34: #{_lambda_.62} parent=5 // pred_check_branch
      %472 = sbr.rel (%p470) target = $region36
    $region35: #{_lambda_.62} parent=5 // pred_region
      %s473 = ssub.s32 %s8, 2
      // Predicated region
      $region37: #{_lambda_.62} parent=35 // pred_check
        %p474 = pneg %p89
      $region38: #{_lambda_.62} parent=35 // pred_check_branch
        %476 = sbr.rel (%p474) target = $region40
      $region39: #{_lambda_.62} parent=35 // pred_region
        %p477 = scmp.lt.s32.totalorder %s14, 1
        %s478 = scalar_select %p477, %s14, 1
        %s479 = smul.addr %s478, 4
        %s480 = scalar_lea.vmem %s2, %s479
      $region40: #{_lambda_.62} parent=35 // pred_fallthru
        _
    $region36: #{_lambda_.62} parent=5 // pred_fallthru
      _
  $region6: #{_lambda_.62} parent=0 // loop_footer
    %s12 = sadd.s32 1, %s8
  $region7: #{_lambda_.62} parent=0 // loop_footer_branch
    %7 = sbr.rel target = $region3
  $region8: #{_lambda_.62} parent=0 // loop_exit
    _

// kernel: _lambda_.65
$region0: #{_lambda_.65}
  #allocation0 [shape = 'u32[]', space=smem, size = 0x4, offset = 0x4, fixed_abs, tag = 'smem constant byte address 0x4 - core index']
  #allocation1 [shape = 'u32[72,128]{1,0:T(1,128)}', space=vmem, size = 0x9000, scoped, tag = 'internal scratch']
  #allocation2 [shape = 'f32[16,64]{1,0:T(8,128)}', space=vmem, size = 0x2000, scoped, tag = 'scratch operand']
  %s0 = inlined_call_operand.vmem [shape: bf16[16,32], index: 0, kind: input, shape index: {}]
  %s1 = inlined_call_operand.vmem [shape: bf16[32,64], index: 1, kind: input, shape index: {}]
  %s2 = inlined_call_operand.hbm [shape: f32[1,64], index: 2, kind: input, shape index: {}]
  %s3 = inlined_call_operand.vmem [shape: bf16[16,64], index: 3, kind: output, shape index: {}]
  %s4 = sld [smem:[#allocation0]]
  $region34: #{_lambda_.65} parent=0
    _
  %s6 = ssub.s32 1, %s4
  %s7 = scalar_select 0, %s6, %s4
  $region1: #{_lambda_.65} parent=0
    #allocation3 [shape = 'u8[512]{0}', space=vmem, size = 0x400, scoped, tag = 'input window, operand 2, single buffered']
    #allocation4 [shape = 's32[1]{0}', space=sflag, size = 0x4, scoped, tag = 'scoped memory for _lambda_.65']
    %8 = vsyncpa [#allocation4], 0
    // Predicated region
    $region2: #{_lambda_.65} parent=1 // pred_check
      _
    $region3: #{_lambda_.65} parent=1 // pred_check_branch
      %10 = sbr.rel (0) target = $region5
    $region4: #{_lambda_.65} parent=1 // pred_region
      _
    $region5: #{_lambda_.65} parent=1 // pred_fallthru
      _
    // Predicated region
    $region6: #{_lambda_.65} parent=1 // pred_check
      _
    $region7: #{_lambda_.65} parent=1 // pred_check_branch
      %12 = sbr.rel (0) target = $region9
    $region8: #{_lambda_.65} parent=1 // pred_region
      _
    $region9: #{_lambda_.65} parent=1 // pred_fallthru
      _
    // Predicated region
    $region10: #{_lambda_.65} parent=1 // pred_check
      _
    $region11: #{_lambda_.65} parent=1 // pred_check_branch
      %14 = sbr.rel (0) target = $region13
    $region12: #{_lambda_.65} parent=1 // pred_region
      %16 = vsyncadd [#allocation4], 0
      %s18 = sshll.u32 %s2, 4
      %s19 = int_to_ptr.hbm [resolvable:$true] %s18
      %s20 = sshll.u32 [#allocation3], 4
      %s21 = int_to_ptr.vmem [resolvable:$true] %s20
      %23 = dma.hbm_to_vmem [thread:$0]  %s19, 16, %s21, [#allocation4]
    $region13: #{_lambda_.65} parent=1 // pred_fallthru
      _
    // Predicated region
    $region14: #{_lambda_.65} parent=1 // pred_check
      _
    $region15: #{_lambda_.65} parent=1 // pred_check_branch
      %25 = sbr.rel (0) target = $region17
    $region16: #{_lambda_.65} parent=1 // pred_region
      %27 = dma.done [#allocation4], 16
    $region17: #{_lambda_.65} parent=1 // pred_fallthru
      _
    %p29 = scmp.eq.s32.totalorder 0, 0
    // Predicated region
    $region18: #{_lambda_.65} parent=1 // pred_check
      %p30 = pneg %p29
    $region19: #{_lambda_.65} parent=1 // pred_check_branch
      %32 = sbr.rel (%p30) target = $region21
    $region20: #{_lambda_.65} parent=1 // pred_region
      %vm33 = vcmask 523264
      %34 = vst.msk [vmem:[#allocation2] sm:$0xff] %vm33, 0.0
      %35 = vst.msk [vmem:[#allocation2 + $0x8] sm:$0xff] %vm33, 0.0
    $region21: #{_lambda_.65} parent=1 // pred_fallthru
      _
    %v36 = vld [vmem:[#allocation2] sm:$0xff]
    %v37 = vld [vmem:[#allocation2 + $0x8] sm:$0xff]
    %v38 = vld [vmem:[%s0] sm:$0xf]
    %v39 = vld [vmem:[%s0 + $0x4] sm:$0xf]
    %v40 = vld [vmem:[%s1] sm:$0xf]
    %v41 = vld [vmem:[%s1 + $0x4] sm:$0xf]
    %v42 = vld [vmem:[%s1 + $0x8] sm:$0xf]
    %v43 = vld [vmem:[%s1 + $0xc] sm:$0xf]
    %v46 = vunpack.c.l.b16 %v38
    %v47 = vunpack.c.l.b16 %v39
    %v48 = vpack.c.b16 %v47, %v46
    %v53 = vunpack.c.l.b16 %v40
    %v54 = vunpack.c.l.b16 %v41
    %v55 = vunpack.c.l.b16 %v42
    %v56 = vunpack.c.l.b16 %v43
    %v57 = vpack.c.b16 %v54, %v53
    %v58 = vpack.c.b16 %v56, %v55
    %vm61 = vcmask 261120
    %v63 = vsel %vm61, %v48, 0
    %65 = vmatpush.bf16.msra.mxu0 0
    %66 = vmatpush.bf16.msra.mxu0 0
    %67 = vmatpush.bf16.msra.mxu0 0
    %68 = vmatpush.bf16.msra.mxu0 0
    %69 = vmatpush.bf16.msra.mxu0 0
    %70 = vmatpush.bf16.msra.mxu0 0
    %71 = vmatpush.bf16.msra.mxu0 %v58
    %72 = vmatpush.bf16.msra.mxu0 %v57
    %73 = vmatmul.bf16.gmra.mxu0 %v63
    %v74 = vpop.f32.mrf.mxu0
    %v75 = vadd.f32 0.0, %v74
    %v76 = vpop.f32.mrf.mxu0
    %v77 = vadd.f32 0.0, %v76
    %78 = vdwg.mxu0
    %v79 = vadd.f32 %v36, %v75
    %v80 = vadd.f32 %v37, %v77
    %vm81 = vcmask 523264
    %82 = vst.msk [vmem:[#allocation2] sm:$0xff] %vm81, %v79
    %83 = vst.msk [vmem:[#allocation2 + $0x8] sm:$0xff] %vm81, %v80
    // Predicated region
    $region22: #{_lambda_.65} parent=1 // pred_check
      %p84 = pneg %p29
    $region23: #{_lambda_.65} parent=1 // pred_check_branch
      %86 = sbr.rel (%p84) target = $region25
    $region24: #{_lambda_.65} parent=1 // pred_region
      %v87 = vld [vmem:[#allocation2] sm:$0xff]
      %v88 = vld [vmem:[#allocation2 + $0x8] sm:$0xff]
      %v89 = vld [vmem:[#allocation3] sm:$0x1]
      %v91 = vperm.slane %v89, 0
      %v93 = vadd.f32 %v87, %v91
      %v94 = vadd.f32 %v88, %v91
      %v95 = vmax.f32 %v93, 0.0
      %v96 = vmax.f32 %v94, 0.0
      %v97 = vpack.c.bf16 %v95, %v95
      %v98 = vpack.c.bf16 %v96, %v96
      %vm99 = vcmask 519168
      %100 = vst.msk [vmem:[%s3] sm:$0xf] %vm99, %v97
      %101 = vst.msk [vmem:[%s3 + $0x4] sm:$0xf] %vm99, %v98
    $region25: #{_lambda_.65} parent=1 // pred_fallthru
      _
    // Predicated region
    $region26: #{_lambda_.65} parent=1 // pred_check
      _
    $region27: #{_lambda_.65} parent=1 // pred_check_branch
      %103 = sbr.rel (0) target = $region29
    $region28: #{_lambda_.65} parent=1 // pred_region
      _
    $region29: #{_lambda_.65} parent=1 // pred_fallthru
      _
    // Predicated region
    $region30: #{_lambda_.65} parent=1 // pred_check
      _
    $region31: #{_lambda_.65} parent=1 // pred_check_branch
      %105 = sbr.rel (0) target = $region33
    $region32: #{_lambda_.65} parent=1 // pred_region
      _
    $region33: #{_lambda_.65} parent=1 // pred_fallthru
      _
    %106 = vsyncpa [#allocation4], 1

// kernel: _lambda_.66
$region0: #{_lambda_.66}
  #allocation0 [shape = 'u32[]', space=smem, size = 0x4, offset = 0x4, fixed_abs, tag = 'smem constant byte address 0x4 - core index']
  #allocation1 [shape = 'u32[72,128]{1,0:T(1,128)}', space=vmem, size = 0x9000, scoped, tag = 'internal scratch']
  #allocation2 [shape = 'f32[16,32]{1,0:T(8,128)}', space=vmem, size = 0x2000, scoped, tag = 'scratch operand']
  %s0 = inlined_call_operand.vmem [shape: bf16[16,64], index: 0, kind: input, shape index: {}]
  %s1 = inlined_call_operand.vmem [shape: bf16[64,32], index: 1, kind: input, shape index: {}]
  %s2 = inlined_call_operand.hbm [shape: f32[1,32], index: 2, kind: input, shape index: {}]
  %s3 = inlined_call_operand.vmem [shape: bf16[16,32], index: 3, kind: output, shape index: {}]
  %s4 = sld [smem:[#allocation0]]
  $region34: #{_lambda_.66} parent=0
    _
  %s6 = ssub.s32 1, %s4
  %s7 = scalar_select 0, %s6, %s4
  $region1: #{_lambda_.66} parent=0
    #allocation3 [shape = 'u8[512]{0}', space=vmem, size = 0x400, scoped, tag = 'input window, operand 2, single buffered']
    #allocation4 [shape = 's32[1]{0}', space=sflag, size = 0x4, scoped, tag = 'scoped memory for _lambda_.66']
    %8 = vsyncpa [#allocation4], 0
    // Predicated region
    $region2: #{_lambda_.66} parent=1 // pred_check
      _
    $region3: #{_lambda_.66} parent=1 // pred_check_branch
      %10 = sbr.rel (0) target = $region5
    $region4: #{_lambda_.66} parent=1 // pred_region
      _
    $region5: #{_lambda_.66} parent=1 // pred_fallthru
      _
    // Predicated region
    $region6: #{_lambda_.66} parent=1 // pred_check
      _
    $region7: #{_lambda_.66} parent=1 // pred_check_branch
      %12 = sbr.rel (0) target = $region9
    $region8: #{_lambda_.66} parent=1 // pred_region
      _
    $region9: #{_lambda_.66} parent=1 // pred_fallthru
      _
    // Predicated region
    $region10: #{_lambda_.66} parent=1 // pred_check
      _
    $region11: #{_lambda_.66} parent=1 // pred_check_branch
      %14 = sbr.rel (0) target = $region13
    $region12: #{_lambda_.66} parent=1 // pred_region
      %16 = vsyncadd [#allocation4], 0
      %s18 = sshll.u32 %s2, 4
      %s19 = int_to_ptr.hbm [resolvable:$true] %s18
      %s20 = sshll.u32 [#allocation3], 4
      %s21 = int_to_ptr.vmem [resolvable:$true] %s20
      %23 = dma.hbm_to_vmem [thread:$0]  %s19, 16, %s21, [#allocation4]
    $region13: #{_lambda_.66} parent=1 // pred_fallthru
      _
    // Predicated region
    $region14: #{_lambda_.66} parent=1 // pred_check
      _
    $region15: #{_lambda_.66} parent=1 // pred_check_branch
      %25 = sbr.rel (0) target = $region17
    $region16: #{_lambda_.66} parent=1 // pred_region
      %27 = dma.done [#allocation4], 16
    $region17: #{_lambda_.66} parent=1 // pred_fallthru
      _
    %p29 = scmp.eq.s32.totalorder 0, 0
    // Predicated region
    $region18: #{_lambda_.66} parent=1 // pred_check
      %p30 = pneg %p29
    $region19: #{_lambda_.66} parent=1 // pred_check_branch
      %32 = sbr.rel (%p30) target = $region21
    $region20: #{_lambda_.66} parent=1 // pred_region
      %vm33 = vcmask 261120
      %34 = vst.msk [vmem:[#allocation2] sm:$0xff] %vm33, 0.0
      %35 = vst.msk [vmem:[#allocation2 + $0x8] sm:$0xff] %vm33, 0.0
    $region21: #{_lambda_.66} parent=1 // pred_fallthru
      _
    %v36 = vld [vmem:[#allocation2] sm:$0xff]
    %v37 = vld [vmem:[#allocation2 + $0x8] sm:$0xff]
    %v38 = vld [vmem:[%s0] sm:$0xf]
    %v39 = vld [vmem:[%s0 + $0x4] sm:$0xf]
    %v40 = vld [vmem:[%s1] sm:$0xf]
    %v41 = vld [vmem:[%s1 + $0x4] sm:$0xf]
    %v42 = vld [vmem:[%s1 + $0x8] sm:$0xf]
    %v43 = vld [vmem:[%s1 + $0xc] sm:$0xf]
    %v44 = vld [vmem:[%s1 + $0x10] sm:$0xf]
    %v45 = vld [vmem:[%s1 + $0x14] sm:$0xf]
    %v46 = vld [vmem:[%s1 + $0x18] sm:$0xf]
    %v47 = vld [vmem:[%s1 + $0x1c] sm:$0xf]
    %v50 = vunpack.c.l.b16 %v38
    %v51 = vunpack.c.l.b16 %v39
    %v52 = vpack.c.b16 %v51, %v50
    %v61 = vunpack.c.l.b16 %v40
    %v62 = vunpack.c.l.b16 %v41
    %v63 = vunpack.c.l.b16 %v42
    %v64 = vunpack.c.l.b16 %v43
    %v65 = vunpack.c.l.b16 %v44
    %v66 = vunpack.c.l.b16 %v45
    %v67 = vunpack.c.l.b16 %v46
    %v68 = vunpack.c.l.b16 %v47
    %v69 = vpack.c.b16 %v62, %v61
    %v70 = vpack.c.b16 %v64, %v63
    %v71 = vpack.c.b16 %v66, %v65
    %v72 = vpack.c.b16 %v68, %v67
    %vm77 = vcmask 523264
    %v79 = vsel %vm77, %v52, 0
    %81 = vmatpush.bf16.msra.mxu0 0
    %82 = vmatpush.bf16.msra.mxu0 0
    %83 = vmatpush.bf16.msra.mxu0 0
    %84 = vmatpush.bf16.msra.mxu0 0
    %85 = vmatpush.bf16.msra.mxu0 %v72
    %86 = vmatpush.bf16.msra.mxu0 %v71
    %87 = vmatpush.bf16.msra.mxu0 %v70
    %88 = vmatpush.bf16.msra.mxu0 %v69
    %89 = vmatmul.bf16.gmra.mxu0 %v79
    %v90 = vpop.f32.mrf.mxu0
    %v91 = vadd.f32 0.0, %v90
    %v92 = vpop.f32.mrf.mxu0
    %v93 = vadd.f32 0.0, %v92
    %94 = vdwg.mxu0
    %v95 = vadd.f32 %v36, %v91
    %v96 = vadd.f32 %v37, %v93
    %vm97 = vcmask 261120
    %98 = vst.msk [vmem:[#allocation2] sm:$0xff] %vm97, %v95
    %99 = vst.msk [vmem:[#allocation2 + $0x8] sm:$0xff] %vm97, %v96
    // Predicated region
    $region22: #{_lambda_.66} parent=1 // pred_check
      %p100 = pneg %p29
    $region23: #{_lambda_.66} parent=1 // pred_check_branch
      %102 = sbr.rel (%p100) target = $region25
    $region24: #{_lambda_.66} parent=1 // pred_region
      %v103 = vld [vmem:[#allocation2] sm:$0xff]
      %v104 = vld [vmem:[#allocation2 + $0x8] sm:$0xff]
      %v105 = vld [vmem:[#allocation3] sm:$0x1]
      %v107 = vperm.slane %v105, 0
      %v109 = vadd.f32 %v103, %v107
      %v110 = vadd.f32 %v104, %v107
      %v111 = vpack.c.bf16 %v109, %v109
      %v112 = vpack.c.bf16 %v110, %v110
      %vm113 = vcmask 257024
      %114 = vst.msk [vmem:[%s3] sm:$0xf] %vm113, %v111
      %115 = vst.msk [vmem:[%s3 + $0x4] sm:$0xf] %vm113, %v112
    $region25: #{_lambda_.66} parent=1 // pred_fallthru
      _
    // Predicated region
    $region26: #{_lambda_.66} parent=1 // pred_check
      _
    $region27: #{_lambda_.66} parent=1 // pred_check_branch
      %117 = sbr.rel (0) target = $region29
    $region28: #{_lambda_.66} parent=1 // pred_region
      _
    $region29: #{_lambda_.66} parent=1 // pred_fallthru
      _
    // Predicated region
    $region30: #{_lambda_.66} parent=1 // pred_check
      _
    $region31: #{_lambda_.66} parent=1 // pred_check_branch
      %119 = sbr.rel (0) target = $region33
    $region32: #{_lambda_.66} parent=1 // pred_region
      _
    $region33: #{_lambda_.66} parent=1 // pred_fallthru
      _
    %120 = vsyncpa [#allocation4], 1

// kernel: _lambda_.68
$region0: #{_lambda_.68}
  #allocation0 [shape = 'u32[]', space=smem, size = 0x4, offset = 0x4, fixed_abs, tag = 'smem constant byte address 0x4 - core index']
  #allocation1 [shape = 'u32[72,128]{1,0:T(1,128)}', space=vmem, size = 0x9000, scoped, tag = 'internal scratch']
  #allocation2 [shape = 'f32[16,96]{1,0:T(8,128)}', space=vmem, size = 0x2000, scoped, tag = 'scratch operand']
  %s0 = inlined_call_operand.vmem [shape: bf16[16,32], index: 0, kind: input, shape index: {}]
  %s1 = inlined_call_operand.vmem [shape: bf16[32,96], index: 1, kind: input, shape index: {}]
  %s2 = inlined_call_operand.hbm [shape: f32[1,96], index: 2, kind: input, shape index: {}]
  %s3 = inlined_call_operand.vmem [shape: bf16[16,96], index: 3, kind: output, shape index: {}]
  %s4 = sld [smem:[#allocation0]]
  $region34: #{_lambda_.68} parent=0
    _
  %s6 = ssub.s32 1, %s4
  %s7 = scalar_select 0, %s6, %s4
  $region1: #{_lambda_.68} parent=0
    #allocation3 [shape = 'u8[512]{0}', space=vmem, size = 0x400, scoped, tag = 'input window, operand 2, single buffered']
    #allocation4 [shape = 's32[1]{0}', space=sflag, size = 0x4, scoped, tag = 'scoped memory for _lambda_.68']
    %8 = vsyncpa [#allocation4], 0
    // Predicated region
    $region2: #{_lambda_.68} parent=1 // pred_check
      _
    $region3: #{_lambda_.68} parent=1 // pred_check_branch
      %10 = sbr.rel (0) target = $region5
    $region4: #{_lambda_.68} parent=1 // pred_region
      _
    $region5: #{_lambda_.68} parent=1 // pred_fallthru
      _
    // Predicated region
    $region6: #{_lambda_.68} parent=1 // pred_check
      _
    $region7: #{_lambda_.68} parent=1 // pred_check_branch
      %12 = sbr.rel (0) target = $region9
    $region8: #{_lambda_.68} parent=1 // pred_region
      _
    $region9: #{_lambda_.68} parent=1 // pred_fallthru
      _
    // Predicated region
    $region10: #{_lambda_.68} parent=1 // pred_check
      _
    $region11: #{_lambda_.68} parent=1 // pred_check_branch
      %14 = sbr.rel (0) target = $region13
    $region12: #{_lambda_.68} parent=1 // pred_region
      %16 = vsyncadd [#allocation4], 0
      %s18 = sshll.u32 %s2, 4
      %s19 = int_to_ptr.hbm [resolvable:$true] %s18
      %s20 = sshll.u32 [#allocation3], 4
      %s21 = int_to_ptr.vmem [resolvable:$true] %s20
      %23 = dma.hbm_to_vmem [thread:$0]  %s19, 16, %s21, [#allocation4]
    $region13: #{_lambda_.68} parent=1 // pred_fallthru
      _
    // Predicated region
    $region14: #{_lambda_.68} parent=1 // pred_check
      _
    $region15: #{_lambda_.68} parent=1 // pred_check_branch
      %25 = sbr.rel (0) target = $region17
    $region16: #{_lambda_.68} parent=1 // pred_region
      %27 = dma.done [#allocation4], 16
    $region17: #{_lambda_.68} parent=1 // pred_fallthru
      _
    %p29 = scmp.eq.s32.totalorder 0, 0
    // Predicated region
    $region18: #{_lambda_.68} parent=1 // pred_check
      %p30 = pneg %p29
    $region19: #{_lambda_.68} parent=1 // pred_check_branch
      %32 = sbr.rel (%p30) target = $region21
    $region20: #{_lambda_.68} parent=1 // pred_region
      %vm33 = vcmask 785408
      %34 = vst.msk [vmem:[#allocation2] sm:$0xff] %vm33, 0.0
      %35 = vst.msk [vmem:[#allocation2 + $0x8] sm:$0xff] %vm33, 0.0
    $region21: #{_lambda_.68} parent=1 // pred_fallthru
      _
    %v36 = vld [vmem:[#allocation2] sm:$0xff]
    %v37 = vld [vmem:[#allocation2 + $0x8] sm:$0xff]
    %v38 = vld [vmem:[%s0] sm:$0xf]
    %v39 = vld [vmem:[%s0 + $0x4] sm:$0xf]
    %v40 = vld [vmem:[%s1] sm:$0xf]
    %v41 = vld [vmem:[%s1 + $0x4] sm:$0xf]
    %v42 = vld [vmem:[%s1 + $0x8] sm:$0xf]
    %v43 = vld [vmem:[%s1 + $0xc] sm:$0xf]
    %v46 = vunpack.c.l.b16 %v38
    %v47 = vunpack.c.l.b16 %v39
    %v48 = vpack.c.b16 %v47, %v46
    %v53 = vunpack.c.l.b16 %v40
    %v54 = vunpack.c.l.b16 %v41
    %v55 = vunpack.c.l.b16 %v42
    %v56 = vunpack.c.l.b16 %v43
    %v57 = vpack.c.b16 %v54, %v53
    %v58 = vpack.c.b16 %v56, %v55
    %vm61 = vcmask 261120
    %v63 = vsel %vm61, %v48, 0
    %65 = vmatpush.bf16.msra.mxu0 0
    %66 = vmatpush.bf16.msra.mxu0 0
    %67 = vmatpush.bf16.msra.mxu0 0
    %68 = vmatpush.bf16.msra.mxu0 0
    %69 = vmatpush.bf16.msra.mxu0 0
    %70 = vmatpush.bf16.msra.mxu0 0
    %71 = vmatpush.bf16.msra.mxu0 %v58
    %72 = vmatpush.bf16.msra.mxu0 %v57
    %73 = vmatmul.bf16.gmra.mxu0 %v63
    %v74 = vpop.f32.mrf.mxu0
    %v75 = vadd.f32 0.0, %v74
    %v76 = vpop.f32.mrf.mxu0
    %v77 = vadd.f32 0.0, %v76
    %78 = vdwg.mxu0
    %v79 = vadd.f32 %v36, %v75
    %v80 = vadd.f32 %v37, %v77
    %vm81 = vcmask 785408
    %82 = vst.msk [vmem:[#allocation2] sm:$0xff] %vm81, %v79
    %83 = vst.msk [vmem:[#allocation2 + $0x8] sm:$0xff] %vm81, %v80
    // Predicated region
    $region22: #{_lambda_.68} parent=1 // pred_check
      %p84 = pneg %p29
    $region23: #{_lambda_.68} parent=1 // pred_check_branch
      %86 = sbr.rel (%p84) target = $region25
    $region24: #{_lambda_.68} parent=1 // pred_region
      %v87 = vld [vmem:[#allocation2] sm:$0xff]
      %v88 = vld [vmem:[#allocation2 + $0x8] sm:$0xff]
      %v89 = vld [vmem:[#allocation3] sm:$0x1]
      %v91 = vperm.slane %v89, 0
      %v93 = vadd.f32 %v87, %v91
      %v94 = vadd.f32 %v88, %v91
      %v95 = vpack.c.bf16 %v93, %v93
      %v96 = vpack.c.bf16 %v94, %v94
      %vm97 = vcmask 781312
      %98 = vst.msk [vmem:[%s3] sm:$0xf] %vm97, %v95
      %99 = vst.msk [vmem:[%s3 + $0x4] sm:$0xf] %vm97, %v96
    $region25: #{_lambda_.68} parent=1 // pred_fallthru
      _
    // Predicated region
    $region26: #{_lambda_.68} parent=1 // pred_check
      _
    $region27: #{_lambda_.68} parent=1 // pred_check_branch
      %101 = sbr.rel (0) target = $region29
    $region28: #{_lambda_.68} parent=1 // pred_region
      _
    $region29: #{_lambda_.68} parent=1 // pred_fallthru
      _
    // Predicated region
    $region30: #{_lambda_.68} parent=1 // pred_check
      _
    $region31: #{_lambda_.68} parent=1 // pred_check_branch
      %103 = sbr.rel (0) target = $region33
    $region32: #{_lambda_.68} parent=1 // pred_region
      _
    $region33: #{_lambda_.68} parent=1 // pred_fallthru
      _
    %104 = vsyncpa [#allocation4], 1

// kernel: _lambda_.73
$region0: #{_lambda_.73}
  #allocation0 [shape = 'u32[]', space=smem, size = 0x4, offset = 0x4, fixed_abs, tag = 'smem constant byte address 0x4 - core index']
  #allocation1 [shape = 'u32[72,128]{1,0:T(1,128)}', space=vmem, size = 0x9000, scoped, tag = 'internal scratch']
  #allocation2 [shape = 'f32[16,64]{1,0:T(8,128)}', space=vmem, size = 0x2000, scoped, tag = 'scratch operand']
  %s0 = inlined_call_operand.vmem [shape: bf16[16,32], index: 0, kind: input, shape index: {}]
  %s1 = inlined_call_operand.vmem [shape: bf16[32,64], index: 1, kind: input, shape index: {}]
  %s2 = inlined_call_operand.hbm [shape: f32[1,64], index: 2, kind: input, shape index: {}]
  %s3 = inlined_call_operand.vmem [shape: bf16[16,64], index: 3, kind: output, shape index: {}]
  %s4 = sld [smem:[#allocation0]]
  $region34: #{_lambda_.73} parent=0
    _
  %s6 = ssub.s32 1, %s4
  %s7 = scalar_select 0, %s6, %s4
  $region1: #{_lambda_.73} parent=0
    #allocation3 [shape = 'u8[512]{0}', space=vmem, size = 0x400, scoped, tag = 'input window, operand 2, single buffered']
    #allocation4 [shape = 's32[1]{0}', space=sflag, size = 0x4, scoped, tag = 'scoped memory for _lambda_.73']
    %8 = vsyncpa [#allocation4], 0
    // Predicated region
    $region2: #{_lambda_.73} parent=1 // pred_check
      _
    $region3: #{_lambda_.73} parent=1 // pred_check_branch
      %10 = sbr.rel (0) target = $region5
    $region4: #{_lambda_.73} parent=1 // pred_region
      _
    $region5: #{_lambda_.73} parent=1 // pred_fallthru
      _
    // Predicated region
    $region6: #{_lambda_.73} parent=1 // pred_check
      _
    $region7: #{_lambda_.73} parent=1 // pred_check_branch
      %12 = sbr.rel (0) target = $region9
    $region8: #{_lambda_.73} parent=1 // pred_region
      _
    $region9: #{_lambda_.73} parent=1 // pred_fallthru
      _
    // Predicated region
    $region10: #{_lambda_.73} parent=1 // pred_check
      _
    $region11: #{_lambda_.73} parent=1 // pred_check_branch
      %14 = sbr.rel (0) target = $region13
    $region12: #{_lambda_.73} parent=1 // pred_region
      %16 = vsyncadd [#allocation4], 0
      %s18 = sshll.u32 %s2, 4
      %s19 = int_to_ptr.hbm [resolvable:$true] %s18
      %s20 = sshll.u32 [#allocation3], 4
      %s21 = int_to_ptr.vmem [resolvable:$true] %s20
      %23 = dma.hbm_to_vmem [thread:$0]  %s19, 16, %s21, [#allocation4]
    $region13: #{_lambda_.73} parent=1 // pred_fallthru
      _
    // Predicated region
    $region14: #{_lambda_.73} parent=1 // pred_check
      _
    $region15: #{_lambda_.73} parent=1 // pred_check_branch
      %25 = sbr.rel (0) target = $region17
    $region16: #{_lambda_.73} parent=1 // pred_region
      %27 = dma.done [#allocation4], 16
    $region17: #{_lambda_.73} parent=1 // pred_fallthru
      _
    %p29 = scmp.eq.s32.totalorder 0, 0
    // Predicated region
    $region18: #{_lambda_.73} parent=1 // pred_check
      %p30 = pneg %p29
    $region19: #{_lambda_.73} parent=1 // pred_check_branch
      %32 = sbr.rel (%p30) target = $region21
    $region20: #{_lambda_.73} parent=1 // pred_region
      %vm33 = vcmask 523264
      %34 = vst.msk [vmem:[#allocation2] sm:$0xff] %vm33, 0.0
      %35 = vst.msk [vmem:[#allocation2 + $0x8] sm:$0xff] %vm33, 0.0
    $region21: #{_lambda_.73} parent=1 // pred_fallthru
      _
    %v36 = vld [vmem:[#allocation2] sm:$0xff]
    %v37 = vld [vmem:[#allocation2 + $0x8] sm:$0xff]
    %v38 = vld [vmem:[%s0] sm:$0xf]
    %v39 = vld [vmem:[%s0 + $0x4] sm:$0xf]
    %v40 = vld [vmem:[%s1] sm:$0xf]
    %v41 = vld [vmem:[%s1 + $0x4] sm:$0xf]
    %v42 = vld [vmem:[%s1 + $0x8] sm:$0xf]
    %v43 = vld [vmem:[%s1 + $0xc] sm:$0xf]
    %v46 = vunpack.c.l.b16 %v38
    %v47 = vunpack.c.l.b16 %v39
    %v48 = vpack.c.b16 %v47, %v46
    %v53 = vunpack.c.l.b16 %v40
    %v54 = vunpack.c.l.b16 %v41
    %v55 = vunpack.c.l.b16 %v42
    %v56 = vunpack.c.l.b16 %v43
    %v57 = vpack.c.b16 %v54, %v53
    %v58 = vpack.c.b16 %v56, %v55
    %vm61 = vcmask 261120
    %v63 = vsel %vm61, %v48, 0
    %65 = vmatpush.bf16.msra.mxu0 0
    %66 = vmatpush.bf16.msra.mxu0 0
    %67 = vmatpush.bf16.msra.mxu0 0
    %68 = vmatpush.bf16.msra.mxu0 0
    %69 = vmatpush.bf16.msra.mxu0 0
    %70 = vmatpush.bf16.msra.mxu0 0
    %71 = vmatpush.bf16.msra.mxu0 %v58
    %72 = vmatpush.bf16.msra.mxu0 %v57
    %73 = vmatmul.bf16.gmra.mxu0 %v63
    %v74 = vpop.f32.mrf.mxu0
    %v75 = vadd.f32 0.0, %v74
    %v76 = vpop.f32.mrf.mxu0
    %v77 = vadd.f32 0.0, %v76
    %78 = vdwg.mxu0
    %v79 = vadd.f32 %v36, %v75
    %v80 = vadd.f32 %v37, %v77
    %vm81 = vcmask 523264
    %82 = vst.msk [vmem:[#allocation2] sm:$0xff] %vm81, %v79
    %83 = vst.msk [vmem:[#allocation2 + $0x8] sm:$0xff] %vm81, %v80
    // Predicated region
    $region22: #{_lambda_.73} parent=1 // pred_check
      %p84 = pneg %p29
    $region23: #{_lambda_.73} parent=1 // pred_check_branch
      %86 = sbr.rel (%p84) target = $region25
    $region24: #{_lambda_.73} parent=1 // pred_region
      %v87 = vld [vmem:[#allocation2] sm:$0xff]
      %v88 = vld [vmem:[#allocation2 + $0x8] sm:$0xff]
      %v89 = vld [vmem:[#allocation3] sm:$0x1]
      %v91 = vperm.slane %v89, 0
      %v93 = vadd.f32 %v87, %v91
      %v94 = vadd.f32 %v88, %v91
      %v95 = vpack.c.bf16 %v93, %v93
      %v96 = vpack.c.bf16 %v94, %v94
      %vm97 = vcmask 519168
      %98 = vst.msk [vmem:[%s3] sm:$0xf] %vm97, %v95
      %99 = vst.msk [vmem:[%s3 + $0x4] sm:$0xf] %vm97, %v96
    $region25: #{_lambda_.73} parent=1 // pred_fallthru
      _
    // Predicated region
    $region26: #{_lambda_.73} parent=1 // pred_check
      _
    $region27: #{_lambda_.73} parent=1 // pred_check_branch
      %101 = sbr.rel (0) target = $region29
    $region28: #{_lambda_.73} parent=1 // pred_region
      _
    $region29: #{_lambda_.73} parent=1 // pred_fallthru
      _
    // Predicated region
    $region30: #{_lambda_.73} parent=1 // pred_check
      _
    $region31: #{_lambda_.73} parent=1 // pred_check_branch
      %103 = sbr.rel (0) target = $region33
    $region32: #{_lambda_.73} parent=1 // pred_region
      _
    $region33: #{_lambda_.73} parent=1 // pred_fallthru
      _
    %104 = vsyncpa [#allocation4], 1

// kernel: _lambda_.81
$region0: #{_lambda_.81}
  #allocation0 [shape = 'u32[]', space=smem, size = 0x4, offset = 0x4, fixed_abs, tag = 'smem constant byte address 0x4 - core index']
  #allocation1 [shape = 'u32[72,128]{1,0:T(1,128)}', space=vmem, size = 0x9000, scoped, tag = 'internal scratch']
  #allocation2 [shape = 'f32[16,128]{1,0:T(8,128)}', space=vmem, size = 0x2000, scoped, tag = 'scratch operand']
  %s0 = inlined_call_operand.vmem [shape: bf16[16,32], index: 0, kind: input, shape index: {}]
  %s1 = inlined_call_operand.vmem [shape: bf16[32,128], index: 1, kind: input, shape index: {}]
  %s2 = inlined_call_operand.vmem [shape: f32[1,128], index: 2, kind: input, shape index: {}]
  %s3 = inlined_call_operand.hbm [shape: f32[16,128], index: 3, kind: output, shape index: {}]
  %s4 = sld [smem:[#allocation0]]
  $region30: #{_lambda_.81} parent=0
    _
  %s6 = ssub.s32 1, %s4
  %s7 = scalar_select 0, %s6, %s4
  $region1: #{_lambda_.81} parent=0
    #allocation3 [shape = 'u8[8192]{0}', space=vmem, size = 0x2000, scoped, tag = 'output window, operand 0, single buffered']
    #allocation4 [shape = 's32[1]{0}', space=sflag, size = 0x4, scoped, tag = 'scoped memory for _lambda_.81']
    %8 = vsyncpa [#allocation4], 0
    // Predicated region
    $region2: #{_lambda_.81} parent=1 // pred_check
      _
    $region3: #{_lambda_.81} parent=1 // pred_check_branch
      %10 = sbr.rel (0) target = $region5
    $region4: #{_lambda_.81} parent=1 // pred_region
      _
    $region5: #{_lambda_.81} parent=1 // pred_fallthru
      _
    // Predicated region
    $region6: #{_lambda_.81} parent=1 // pred_check
      _
    $region7: #{_lambda_.81} parent=1 // pred_check_branch
      %12 = sbr.rel (0) target = $region9
    $region8: #{_lambda_.81} parent=1 // pred_region
      _
    $region9: #{_lambda_.81} parent=1 // pred_fallthru
      _
    // Predicated region
    $region10: #{_lambda_.81} parent=1 // pred_check
      _
    $region11: #{_lambda_.81} parent=1 // pred_check_branch
      %14 = sbr.rel (0) target = $region13
    $region12: #{_lambda_.81} parent=1 // pred_region
      _
    $region13: #{_lambda_.81} parent=1 // pred_fallthru
      _
    %p16 = scmp.eq.s32.totalorder 0, 0
    // Predicated region
    $region14: #{_lambda_.81} parent=1 // pred_check
      %p17 = pneg %p16
    $region15: #{_lambda_.81} parent=1 // pred_check_branch
      %19 = sbr.rel (%p17) target = $region17
    $region16: #{_lambda_.81} parent=1 // pred_region
      %20 = vst [vmem:[#allocation2] sm:$0xff] 0.0
      %21 = vst [vmem:[#allocation2 + $0x8] sm:$0xff] 0.0
    $region17: #{_lambda_.81} parent=1 // pred_fallthru
      _
    %v22 = vld [vmem:[#allocation2] sm:$0xff]
    %v23 = vld [vmem:[#allocation2 + $0x8] sm:$0xff]
    %v24 = vld [vmem:[%s0] sm:$0xf]
    %v25 = vld [vmem:[%s0 + $0x4] sm:$0xf]
    %v26 = vld [vmem:[%s1] sm:$0xf]
    %v27 = vld [vmem:[%s1 + $0x4] sm:$0xf]
    %v28 = vld [vmem:[%s1 + $0x8] sm:$0xf]
    %v29 = vld [vmem:[%s1 + $0xc] sm:$0xf]
    %v32 = vunpack.c.l.b16 %v24
    %v33 = vunpack.c.l.b16 %v25
    %v34 = vpack.c.b16 %v33, %v32
    %v39 = vunpack.c.l.b16 %v26
    %v40 = vunpack.c.l.b16 %v27
    %v41 = vunpack.c.l.b16 %v28
    %v42 = vunpack.c.l.b16 %v29
    %v43 = vpack.c.b16 %v40, %v39
    %v44 = vpack.c.b16 %v42, %v41
    %vm47 = vcmask 261120
    %v49 = vsel %vm47, %v34, 0
    %51 = vmatpush.bf16.msra.mxu0 0
    %52 = vmatpush.bf16.msra.mxu0 0
    %53 = vmatpush.bf16.msra.mxu0 0
    %54 = vmatpush.bf16.msra.mxu0 0
    %55 = vmatpush.bf16.msra.mxu0 0
    %56 = vmatpush.bf16.msra.mxu0 0
    %57 = vmatpush.bf16.msra.mxu0 %v44
    %58 = vmatpush.bf16.msra.mxu0 %v43
    %59 = vmatmul.bf16.gmra.mxu0 %v49
    %v60 = vpop.f32.mrf.mxu0
    %v61 = vadd.f32 0.0, %v60
    %v62 = vpop.f32.mrf.mxu0
    %v63 = vadd.f32 0.0, %v62
    %64 = vdwg.mxu0
    %v65 = vadd.f32 %v22, %v61
    %v66 = vadd.f32 %v23, %v63
    %67 = vst [vmem:[#allocation2] sm:$0xff] %v65
    %68 = vst [vmem:[#allocation2 + $0x8] sm:$0xff] %v66
    // Predicated region
    $region18: #{_lambda_.81} parent=1 // pred_check
      %p69 = pneg %p16
    $region19: #{_lambda_.81} parent=1 // pred_check_branch
      %71 = sbr.rel (%p69) target = $region21
    $region20: #{_lambda_.81} parent=1 // pred_region
      %v72 = vld [vmem:[#allocation2] sm:$0xff]
      %v73 = vld [vmem:[#allocation2 + $0x8] sm:$0xff]
      %v74 = vld [vmem:[%s2] sm:$0x1]
      %v76 = vperm.slane %v74, 0
      %v78 = vadd.f32 %v72, %v76
      %v79 = vadd.f32 %v73, %v76
      %80 = vst [vmem:[#allocation3] sm:$0xff] %v78
      %81 = vst [vmem:[#allocation3 + $0x8] sm:$0xff] %v79
    $region21: #{_lambda_.81} parent=1 // pred_fallthru
      _
    // Predicated region
    $region22: #{_lambda_.81} parent=1 // pred_check
      _
    $region23: #{_lambda_.81} parent=1 // pred_check_branch
      %83 = sbr.rel (0) target = $region25
    $region24: #{_lambda_.81} parent=1 // pred_region
      %85 = vsyncadd [#allocation4], 0
      %s86 = sshll.u32 [#allocation3], 4
      %s87 = int_to_ptr.vmem [resolvable:$true] %s86
      %s88 = sshll.u32 %s3, 4
      %s89 = int_to_ptr.hbm [resolvable:$true] %s88
      %94 = dma.vmem_to_hbm [thread:$0]  %s87, 256, %s89, [#allocation4], 128, 128, 8
    $region25: #{_lambda_.81} parent=1 // pred_fallthru
      _
    // Predicated region
    $region26: #{_lambda_.81} parent=1 // pred_check
      _
    $region27: #{_lambda_.81} parent=1 // pred_check_branch
      %96 = sbr.rel (0) target = $region29
    $region28: #{_lambda_.81} parent=1 // pred_region
      %98 = dma.done [#allocation4], 256
    $region29: #{_lambda_.81} parent=1 // pred_fallthru
      _
    %99 = vsyncpa [#allocation4], 1

</llo_original>
